<compile_context>
chip_gen: v7x
topology: tpu7x:2x2x1
jax: 0.10.0
libtpu: 0.0.40
codegen_flags: <defaults>
</compile_context>

<pallas_src>
import functools

import jax
import jax.numpy as jnp
from jax.experimental import pallas as pl
from jax.experimental.pallas import tpu as pltpu


def _sa_kernel(W, q_ref, v_ref, mask_ref, wq_ref, wv_ref, ws_ref,
               out_ref, col_ref):
    """One group of nb images per grid step.

    q_ref   : (1, C, L) f32   residual / conv input q   (L = nb * H * W)
    v_ref   : (1, C, L) f32   conv input v
    mask_ref: (9, L)    f32   per-tap boundary masks (0/1), constant index
    wq_ref  : (C, 18C)  bf16  conv_q weights, cols = [9 q-taps ; 9 v-taps]
    wv_ref  : (C, 9C)   bf16  conv_v weights, cols = 9 v-taps
    ws_ref  : (18,)     f32   s_map 3x3 weights, flat [tap*2 + {mean,max}] (SMEM)
    out_ref : (1, C, L) f32
    col_ref : (18C, L)  bf16  VMEM im2col scratch
    """
    C = out_ref.shape[1]
    L = out_ref.shape[2]
    C9 = 9 * C

    q_f = q_ref[0]                        # (C, L) f32
    v_f = v_ref[0]                        # (C, L) f32

    # ---- in-kernel im2col: rolls along the lane dim + boundary masks -------
    # Rows [t*C : (t+1)*C]      = tap t of q
    # Rows [9C + t*C : ... + C] = tap t of v
    for t in range(9):
        dy, dx = t // 3 - 1, t % 3 - 1
        sh = dy * W + dx
        if sh == 0:
            rq, rv = q_f, v_f
        else:
            amt = (-sh) % L
            rq = pltpu.roll(q_f, shift=amt, axis=1)
            rv = pltpu.roll(v_f, shift=amt, axis=1)
        m = mask_ref[pl.ds(t, 1), :]                         # (1, L) f32
        col_ref[pl.ds(t * C, C), :] = (rq * m).astype(jnp.bfloat16)
        col_ref[pl.ds(C9 + t * C, C), :] = (rv * m).astype(jnp.bfloat16)

    # ---- conv_q: single K = 18C bf16 matmul, f32 accumulation ---------------
    q1 = jnp.dot(wq_ref[...], col_ref[...],
                 preferred_element_type=jnp.float32)          # (C, L)

    # Channel mean / max -> two (1, L) spatial maps (sublane reductions).
    q_mean = jnp.mean(q1, axis=0, keepdims=True)
    q_max = jnp.max(q1, axis=0, keepdims=True)

    # ---- s_map 3x3 conv (2 -> 1, pad=1): lane rolls + the same masks --------
    s = jnp.zeros((1, L), jnp.float32)
    for t in range(9):
        dy, dx = t // 3 - 1, t % 3 - 1
        sh = dy * W + dx
        if sh == 0:
            rm, rx = q_mean, q_max
        else:
            amt = (-sh) % L
            rm = pltpu.roll(q_mean, shift=amt, axis=1)
            rx = pltpu.roll(q_max, shift=amt, axis=1)
        m = mask_ref[pl.ds(t, 1), :]                          # (1, L) f32
        s = s + m * (ws_ref[2 * t] * rm + ws_ref[2 * t + 1] * rx)

    s = jax.nn.sigmoid(s)                                     # (1, L)

    # ---- conv_v (only the contiguous v-tap rows), gate, residual ------------
    vv = jnp.dot(wv_ref[...], col_ref[pl.ds(C9, C9), :],
                 preferred_element_type=jnp.float32)          # (C, L)
    out_ref[0] = s * vv + q_f


def _choose_group(N, HW, target_lanes=512):
    """Fold nb images into the lane dim so each step is >= target_lanes wide."""
    if HW >= target_lanes or N <= 1:
        return 1
    want = min(N, -(-target_lanes // HW))
    for d in range(want, N + 1):
        if N % d == 0:
            return d
    return 1


def sa_forward(q_nchw, v_nchw, params):
    """SA.forward.  q, v: (N, C, H, W) float32.  Returns (N, C, H, W) float32."""
    N, C, H, W = q_nchw.shape
    HW = H * W

    nb = _choose_group(N, HW)
    G = N // nb
    L = nb * HW

    # ---- wrapper glue: just reshapes + tiny weight/mask prep ----------------
    q_g = q_nchw.reshape(G, nb, C, HW).transpose(0, 2, 1, 3).reshape(G, C, L)
    v_g = v_nchw.reshape(G, nb, C, HW).transpose(0, 2, 1, 3).reshape(G, C, L)

    # Per-tap boundary masks (valid => 1.0), tiled across the nb folded images.
    pos = jnp.arange(HW, dtype=jnp.int32)
    hh, ww = pos // W, pos % W
    rows = []
    for t in range(9):
        dy, dx = t // 3 - 1, t % 3 - 1
        valid = ((hh + dy >= 0) & (hh + dy < H)
                 & (ww + dx >= 0) & (ww + dx < W))
        rows.append(valid)
    mask9 = jnp.tile(jnp.stack(rows).astype(jnp.float32), (1, nb))   # (9, L)

    # conv_q weights (C, 2C, 3, 3) -> (C, 18C) with cols [9 q-taps ; 9 v-taps].
    wq = params["wq"]
    wv = params["wv"]
    wq_q = jnp.transpose(wq[:, :C], (0, 2, 3, 1)).reshape(C, 9 * C)
    wq_v = jnp.transpose(wq[:, C:], (0, 2, 3, 1)).reshape(C, 9 * C)
    wq_mat = jnp.concatenate([wq_q, wq_v], axis=1).astype(jnp.bfloat16)  # (C,18C)
    wv_mat = jnp.transpose(wv, (0, 2, 3, 1)).reshape(C, 9 * C)
    wv_mat = wv_mat.astype(jnp.bfloat16)                                 # (C, 9C)

    # s_map weights flattened to 1D SMEM: index = tap*2 + {0: mean, 1: max}.
    ws_flat = jnp.transpose(params["ws"][0], (1, 2, 0)).reshape(18)

    grid_spec = pltpu.PrefetchScalarGridSpec(
        num_scalar_prefetch=0,
        grid=(G,),
        in_specs=[
            pl.BlockSpec((1, C, L), lambda n: (n, 0, 0)),      # q  (f32)
            pl.BlockSpec((1, C, L), lambda n: (n, 0, 0)),      # v  (f32)
            pl.BlockSpec((9, L), lambda n: (0, 0)),            # masks (f32)
            pl.BlockSpec((C, 18 * C), lambda n: (0, 0)),       # wq (bf16)
            pl.BlockSpec((C, 9 * C), lambda n: (0, 0)),        # wv (bf16)
            pl.BlockSpec(memory_space=pltpu.MemorySpace.SMEM), # ws (f32)
        ],
        out_specs=pl.BlockSpec((1, C, L), lambda n: (n, 0, 0)),
        scratch_shapes=[pltpu.VMEM((18 * C, L), jnp.bfloat16)],
    )

    out = pl.pallas_call(
        functools.partial(_sa_kernel, W),
        out_shape=jax.ShapeDtypeStruct((G, C, L), jnp.float32),
        grid_spec=grid_spec,
        compiler_params=pltpu.CompilerParams(
            dimension_semantics=("parallel",)),
    )(q_g, v_g, mask9, wq_mat, wv_mat, ws_flat)

    return out.reshape(G, C, nb, HW).transpose(0, 2, 1, 3).reshape(N, C, H, W)


def init_params(key, in_channels):
    # Matches SA(in_channels) defaults: all convs bias=False.
    C = in_channels
    ks = jax.random.split(key, 3)
    scale = 0.1
    return {
        "wq": scale * jax.random.normal(ks[0], (C, 2 * C, 3, 3), jnp.float32),
        "wv": scale * jax.random.normal(ks[1], (C, C, 3, 3), jnp.float32),
        "ws": scale * jax.random.normal(ks[2], (1, 2, 3, 3), jnp.float32),
    }


def sa_reference(q, v, p):
    """Pure-JAX f32 reference of SA.forward (NCHW), for verification."""
    def conv(x, w, pad):
        return jax.lax.conv_general_dilated(
            x, w, (1, 1), [(pad, pad), (pad, pad)],
            dimension_numbers=("NCHW", "OIHW", "NCHW"))

    q1 = conv(jnp.concatenate([q, v], axis=1), p["wq"], 1)
    vv = conv(v, p["wv"], 1)
    m = jnp.concatenate([jnp.mean(q1, axis=1, keepdims=True),
                         jnp.max(q1, axis=1, keepdims=True)], axis=1)
    s = jax.nn.sigmoid(conv(m, p["ws"], 1))
    return s * vv + q


if __name__ == "__main__":
    N, C, H, W = 2, 32, 16, 16
    key = jax.random.PRNGKey(0)
    kq, kv, kp = jax.random.split(key, 3)
    q = jax.random.normal(kq, (N, C, H, W), jnp.float32)
    v = jax.random.normal(kv, (N, C, H, W), jnp.float32)
    params = init_params(kp, C)

    out = jax.block_until_ready(sa_forward(q, v, params))
    ref = jax.block_until_ready(sa_reference(q, v, params))

    assert out.shape == (N, C, H, W)
    max_err = float(jnp.max(jnp.abs(out - ref)))
    # bf16 MXU operands (f32 accumulate) -> slightly loosened tolerance.
    assert jnp.allclose(out, ref, atol=5e-2, rtol=5e-2), max_err
    print("KERNEL_OK")
</pallas_src>

<mosaic_0001>
module attributes {stable_mosaic.version = 11 : i64} {
  func.func @_sa_kernel(%arg0: i32, %arg1: memref<1x32x512xf32, #tpu.memory_space<vmem>>, %arg2: memref<1x32x512xf32, #tpu.memory_space<vmem>>, %arg3: memref<9x512xf32, #tpu.memory_space<vmem>>, %arg4: memref<32x576xbf16, #tpu.memory_space<vmem>>, %arg5: memref<32x288xbf16, #tpu.memory_space<vmem>>, %arg6: memref<18xf32, #tpu.memory_space<smem>>, %arg7: memref<1x32x512xf32, #tpu.memory_space<vmem>>, %arg8: memref<576x512xbf16, #tpu.memory_space<vmem>>) attributes {dimension_semantics = [#tpu.dimension_semantics<parallel>], iteration_bounds = array<i64: 1>, scalar_prefetch = 0 : i64, scratch_operands = 1 : i64, tpu.core_type = #tpu.core_type<tc>, window_params = [{transform_indices = @transform_0, window_bounds = array<i64: 1, 32, 512>}, {transform_indices = @transform_1, window_bounds = array<i64: 1, 32, 512>}, {pipeline_mode = #tpu.pipeline_mode<synchronous>, transform_indices = @transform_2, window_bounds = array<i64: 9, 512>}, {pipeline_mode = #tpu.pipeline_mode<synchronous>, transform_indices = @transform_3, window_bounds = array<i64: 32, 576>}, {pipeline_mode = #tpu.pipeline_mode<synchronous>, transform_indices = @transform_4, window_bounds = array<i64: 32, 288>}, {transform_indices = @transform_5, window_bounds = array<i64: 18>}, {transform_indices = @transform_6, window_bounds = array<i64: 1, 32, 512>}]} {
    %c0 = arith.constant 0 : index
    %c0_0 = arith.constant 0 : index
    %c0_1 = arith.constant 0 : index
    %0 = vector.load %arg1[%c0, %c0_0, %c0_1] : memref<1x32x512xf32, #tpu.memory_space<vmem>>, vector<1x32x512xf32>
    %1 = vector.shape_cast %0 : vector<1x32x512xf32> to vector<32x512xf32>
    %c0_2 = arith.constant 0 : index
    %c0_3 = arith.constant 0 : index
    %c0_4 = arith.constant 0 : index
    %2 = vector.load %arg2[%c0_2, %c0_3, %c0_4] : memref<1x32x512xf32, #tpu.memory_space<vmem>>, vector<1x32x512xf32>
    %3 = vector.shape_cast %2 : vector<1x32x512xf32> to vector<32x512xf32>
    %c17_i32 = arith.constant 17 : i32
    %4 = tpu.dynamic_rotate %1 by %c17_i32 dim 1 : vector<32x512xf32>, i32 -> vector<32x512xf32>
    %c17_i32_5 = arith.constant 17 : i32
    %5 = tpu.dynamic_rotate %3 by %c17_i32_5 dim 1 : vector<32x512xf32>, i32 -> vector<32x512xf32>
    %c0_6 = arith.constant 0 : index
    %c0_7 = arith.constant 0 : index
    %6 = vector.load %arg3[%c0_6, %c0_7] : memref<9x512xf32, #tpu.memory_space<vmem>>, vector<1x512xf32>
    %7 = vector.broadcast %6 : vector<1x512xf32> to vector<32x512xf32>
    %8 = arith.mulf %4, %7 : vector<32x512xf32>
    %9 = arith.truncf %8 : vector<32x512xf32> to vector<32x512xbf16>
    %c0_8 = arith.constant 0 : index
    %c0_9 = arith.constant 0 : index
    %10 = vector.load %arg8[%c0_8, %c0_9] : memref<576x512xbf16, #tpu.memory_space<vmem>>, vector<32x512xbf16>
    tpu.vector_store %arg8[%c0_8, %c0_9], %9 {strides = array<i32>} : memref<576x512xbf16, #tpu.memory_space<vmem>>, vector<32x512xbf16>,
    %11 = vector.broadcast %6 : vector<1x512xf32> to vector<32x512xf32>
    %12 = arith.mulf %5, %11 : vector<32x512xf32>
    %13 = arith.truncf %12 : vector<32x512xf32> to vector<32x512xbf16>
    %c288 = arith.constant 288 : index
    %c0_10 = arith.constant 0 : index
    %14 = vector.load %arg8[%c288, %c0_10] : memref<576x512xbf16, #tpu.memory_space<vmem>>, vector<32x512xbf16>
    tpu.vector_store %arg8[%c288, %c0_10], %13 {strides = array<i32>} : memref<576x512xbf16, #tpu.memory_space<vmem>>, vector<32x512xbf16>,
    %c16_i32 = arith.constant 16 : i32
    %15 = tpu.dynamic_rotate %1 by %c16_i32 dim 1 : vector<32x512xf32>, i32 -> vector<32x512xf32>
    %c16_i32_11 = arith.constant 16 : i32
    %16 = tpu.dynamic_rotate %3 by %c16_i32_11 dim 1 : vector<32x512xf32>, i32 -> vector<32x512xf32>
    %c1 = arith.constant 1 : index
    %c0_12 = arith.constant 0 : index
    %17 = vector.load %arg3[%c1, %c0_12] : memref<9x512xf32, #tpu.memory_space<vmem>>, vector<1x512xf32>
    %18 = vector.broadcast %17 : vector<1x512xf32> to vector<32x512xf32>
    %19 = arith.mulf %15, %18 : vector<32x512xf32>
    %20 = arith.truncf %19 : vector<32x512xf32> to vector<32x512xbf16>
    %c32 = arith.constant 32 : index
    %c0_13 = arith.constant 0 : index
    %21 = vector.load %arg8[%c32, %c0_13] : memref<576x512xbf16, #tpu.memory_space<vmem>>, vector<32x512xbf16>
    tpu.vector_store %arg8[%c32, %c0_13], %20 {strides = array<i32>} : memref<576x512xbf16, #tpu.memory_space<vmem>>, vector<32x512xbf16>,
    %22 = vector.broadcast %17 : vector<1x512xf32> to vector<32x512xf32>
    %23 = arith.mulf %16, %22 : vector<32x512xf32>
    %24 = arith.truncf %23 : vector<32x512xf32> to vector<32x512xbf16>
    %c320 = arith.constant 320 : index
    %c0_14 = arith.constant 0 : index
    %25 = vector.load %arg8[%c320, %c0_14] : memref<576x512xbf16, #tpu.memory_space<vmem>>, vector<32x512xbf16>
    tpu.vector_store %arg8[%c320, %c0_14], %24 {strides = array<i32>} : memref<576x512xbf16, #tpu.memory_space<vmem>>, vector<32x512xbf16>,
    %c15_i32 = arith.constant 15 : i32
    %26 = tpu.dynamic_rotate %1 by %c15_i32 dim 1 : vector<32x512xf32>, i32 -> vector<32x512xf32>
    %c15_i32_15 = arith.constant 15 : i32
    %27 = tpu.dynamic_rotate %3 by %c15_i32_15 dim 1 : vector<32x512xf32>, i32 -> vector<32x512xf32>
    %c2 = arith.constant 2 : index
    %c0_16 = arith.constant 0 : index
    %28 = vector.load %arg3[%c2, %c0_16] : memref<9x512xf32, #tpu.memory_space<vmem>>, vector<1x512xf32>
    %29 = vector.broadcast %28 : vector<1x512xf32> to vector<32x512xf32>
    %30 = arith.mulf %26, %29 : vector<32x512xf32>
    %31 = arith.truncf %30 : vector<32x512xf32> to vector<32x512xbf16>
    %c64 = arith.constant 64 : index
    %c0_17 = arith.constant 0 : index
    %32 = vector.load %arg8[%c64, %c0_17] : memref<576x512xbf16, #tpu.memory_space<vmem>>, vector<32x512xbf16>
    tpu.vector_store %arg8[%c64, %c0_17], %31 {strides = array<i32>} : memref<576x512xbf16, #tpu.memory_space<vmem>>, vector<32x512xbf16>,
    %33 = vector.broadcast %28 : vector<1x512xf32> to vector<32x512xf32>
    %34 = arith.mulf %27, %33 : vector<32x512xf32>
    %35 = arith.truncf %34 : vector<32x512xf32> to vector<32x512xbf16>
    %c352 = arith.constant 352 : index
    %c0_18 = arith.constant 0 : index
    %36 = vector.load %arg8[%c352, %c0_18] : memref<576x512xbf16, #tpu.memory_space<vmem>>, vector<32x512xbf16>
    tpu.vector_store %arg8[%c352, %c0_18], %35 {strides = array<i32>} : memref<576x512xbf16, #tpu.memory_space<vmem>>, vector<32x512xbf16>,
    %c1_i32 = arith.constant 1 : i32
    %37 = tpu.dynamic_rotate %1 by %c1_i32 dim 1 : vector<32x512xf32>, i32 -> vector<32x512xf32>
    %c1_i32_19 = arith.constant 1 : i32
    %38 = tpu.dynamic_rotate %3 by %c1_i32_19 dim 1 : vector<32x512xf32>, i32 -> vector<32x512xf32>
    %c3 = arith.constant 3 : index
    %c0_20 = arith.constant 0 : index
    %39 = vector.load %arg3[%c3, %c0_20] : memref<9x512xf32, #tpu.memory_space<vmem>>, vector<1x512xf32>
    %40 = vector.broadcast %39 : vector<1x512xf32> to vector<32x512xf32>
    %41 = arith.mulf %37, %40 : vector<32x512xf32>
    %42 = arith.truncf %41 : vector<32x512xf32> to vector<32x512xbf16>
    %c96 = arith.constant 96 : index
    %c0_21 = arith.constant 0 : index
    %43 = vector.load %arg8[%c96, %c0_21] : memref<576x512xbf16, #tpu.memory_space<vmem>>, vector<32x512xbf16>
    tpu.vector_store %arg8[%c96, %c0_21], %42 {strides = array<i32>} : memref<576x512xbf16, #tpu.memory_space<vmem>>, vector<32x512xbf16>,
    %44 = vector.broadcast %39 : vector<1x512xf32> to vector<32x512xf32>
    %45 = arith.mulf %38, %44 : vector<32x512xf32>
    %46 = arith.truncf %45 : vector<32x512xf32> to vector<32x512xbf16>
    %c384 = arith.constant 384 : index
    %c0_22 = arith.constant 0 : index
    %47 = vector.load %arg8[%c384, %c0_22] : memref<576x512xbf16, #tpu.memory_space<vmem>>, vector<32x512xbf16>
    tpu.vector_store %arg8[%c384, %c0_22], %46 {strides = array<i32>} : memref<576x512xbf16, #tpu.memory_space<vmem>>, vector<32x512xbf16>,
    %c4 = arith.constant 4 : index
    %c0_23 = arith.constant 0 : index
    %48 = vector.load %arg3[%c4, %c0_23] : memref<9x512xf32, #tpu.memory_space<vmem>>, vector<1x512xf32>
    %49 = vector.broadcast %48 : vector<1x512xf32> to vector<32x512xf32>
    %50 = arith.mulf %1, %49 : vector<32x512xf32>
    %51 = arith.truncf %50 : vector<32x512xf32> to vector<32x512xbf16>
    %c128 = arith.constant 128 : index
    %c0_24 = arith.constant 0 : index
    %52 = vector.load %arg8[%c128, %c0_24] : memref<576x512xbf16, #tpu.memory_space<vmem>>, vector<32x512xbf16>
    tpu.vector_store %arg8[%c128, %c0_24], %51 {strides = array<i32>} : memref<576x512xbf16, #tpu.memory_space<vmem>>, vector<32x512xbf16>,
    %53 = vector.broadcast %48 : vector<1x512xf32> to vector<32x512xf32>
    %54 = arith.mulf %3, %53 : vector<32x512xf32>
    %55 = arith.truncf %54 : vector<32x512xf32> to vector<32x512xbf16>
    %c416 = arith.constant 416 : index
    %c0_25 = arith.constant 0 : index
    %56 = vector.load %arg8[%c416, %c0_25] : memref<576x512xbf16, #tpu.memory_space<vmem>>, vector<32x512xbf16>
    tpu.vector_store %arg8[%c416, %c0_25], %55 {strides = array<i32>} : memref<576x512xbf16, #tpu.memory_space<vmem>>, vector<32x512xbf16>,
    %c511_i32 = arith.constant 511 : i32
    %57 = tpu.dynamic_rotate %1 by %c511_i32 dim 1 : vector<32x512xf32>, i32 -> vector<32x512xf32>
    %c511_i32_26 = arith.constant 511 : i32
    %58 = tpu.dynamic_rotate %3 by %c511_i32_26 dim 1 : vector<32x512xf32>, i32 -> vector<32x512xf32>
    %c5 = arith.constant 5 : index
    %c0_27 = arith.constant 0 : index
    %59 = vector.load %arg3[%c5, %c0_27] : memref<9x512xf32, #tpu.memory_space<vmem>>, vector<1x512xf32>
    %60 = vector.broadcast %59 : vector<1x512xf32> to vector<32x512xf32>
    %61 = arith.mulf %57, %60 : vector<32x512xf32>
    %62 = arith.truncf %61 : vector<32x512xf32> to vector<32x512xbf16>
    %c160 = arith.constant 160 : index
    %c0_28 = arith.constant 0 : index
    %63 = vector.load %arg8[%c160, %c0_28] : memref<576x512xbf16, #tpu.memory_space<vmem>>, vector<32x512xbf16>
    tpu.vector_store %arg8[%c160, %c0_28], %62 {strides = array<i32>} : memref<576x512xbf16, #tpu.memory_space<vmem>>, vector<32x512xbf16>,
    %64 = vector.broadcast %59 : vector<1x512xf32> to vector<32x512xf32>
    %65 = arith.mulf %58, %64 : vector<32x512xf32>
    %66 = arith.truncf %65 : vector<32x512xf32> to vector<32x512xbf16>
    %c448 = arith.constant 448 : index
    %c0_29 = arith.constant 0 : index
    %67 = vector.load %arg8[%c448, %c0_29] : memref<576x512xbf16, #tpu.memory_space<vmem>>, vector<32x512xbf16>
    tpu.vector_store %arg8[%c448, %c0_29], %66 {strides = array<i32>} : memref<576x512xbf16, #tpu.memory_space<vmem>>, vector<32x512xbf16>,
    %c497_i32 = arith.constant 497 : i32
    %68 = tpu.dynamic_rotate %1 by %c497_i32 dim 1 : vector<32x512xf32>, i32 -> vector<32x512xf32>
    %c497_i32_30 = arith.constant 497 : i32
    %69 = tpu.dynamic_rotate %3 by %c497_i32_30 dim 1 : vector<32x512xf32>, i32 -> vector<32x512xf32>
    %c6 = arith.constant 6 : index
    %c0_31 = arith.constant 0 : index
    %70 = vector.load %arg3[%c6, %c0_31] : memref<9x512xf32, #tpu.memory_space<vmem>>, vector<1x512xf32>
    %71 = vector.broadcast %70 : vector<1x512xf32> to vector<32x512xf32>
    %72 = arith.mulf %68, %71 : vector<32x512xf32>
    %73 = arith.truncf %72 : vector<32x512xf32> to vector<32x512xbf16>
    %c192 = arith.constant 192 : index
    %c0_32 = arith.constant 0 : index
    %74 = vector.load %arg8[%c192, %c0_32] : memref<576x512xbf16, #tpu.memory_space<vmem>>, vector<32x512xbf16>
    tpu.vector_store %arg8[%c192, %c0_32], %73 {strides = array<i32>} : memref<576x512xbf16, #tpu.memory_space<vmem>>, vector<32x512xbf16>,
    %75 = vector.broadcast %70 : vector<1x512xf32> to vector<32x512xf32>
    %76 = arith.mulf %69, %75 : vector<32x512xf32>
    %77 = arith.truncf %76 : vector<32x512xf32> to vector<32x512xbf16>
    %c480 = arith.constant 480 : index
    %c0_33 = arith.constant 0 : index
    %78 = vector.load %arg8[%c480, %c0_33] : memref<576x512xbf16, #tpu.memory_space<vmem>>, vector<32x512xbf16>
    tpu.vector_store %arg8[%c480, %c0_33], %77 {strides = array<i32>} : memref<576x512xbf16, #tpu.memory_space<vmem>>, vector<32x512xbf16>,
    %c496_i32 = arith.constant 496 : i32
    %79 = tpu.dynamic_rotate %1 by %c496_i32 dim 1 : vector<32x512xf32>, i32 -> vector<32x512xf32>
    %c496_i32_34 = arith.constant 496 : i32
    %80 = tpu.dynamic_rotate %3 by %c496_i32_34 dim 1 : vector<32x512xf32>, i32 -> vector<32x512xf32>
    %c7 = arith.constant 7 : index
    %c0_35 = arith.constant 0 : index
    %81 = vector.load %arg3[%c7, %c0_35] : memref<9x512xf32, #tpu.memory_space<vmem>>, vector<1x512xf32>
    %82 = vector.broadcast %81 : vector<1x512xf32> to vector<32x512xf32>
    %83 = arith.mulf %79, %82 : vector<32x512xf32>
    %84 = arith.truncf %83 : vector<32x512xf32> to vector<32x512xbf16>
    %c224 = arith.constant 224 : index
    %c0_36 = arith.constant 0 : index
    %85 = vector.load %arg8[%c224, %c0_36] : memref<576x512xbf16, #tpu.memory_space<vmem>>, vector<32x512xbf16>
    tpu.vector_store %arg8[%c224, %c0_36], %84 {strides = array<i32>} : memref<576x512xbf16, #tpu.memory_space<vmem>>, vector<32x512xbf16>,
    %86 = vector.broadcast %81 : vector<1x512xf32> to vector<32x512xf32>
    %87 = arith.mulf %80, %86 : vector<32x512xf32>
    %88 = arith.truncf %87 : vector<32x512xf32> to vector<32x512xbf16>
    %c512 = arith.constant 512 : index
    %c0_37 = arith.constant 0 : index
    %89 = vector.load %arg8[%c512, %c0_37] : memref<576x512xbf16, #tpu.memory_space<vmem>>, vector<32x512xbf16>
    tpu.vector_store %arg8[%c512, %c0_37], %88 {strides = array<i32>} : memref<576x512xbf16, #tpu.memory_space<vmem>>, vector<32x512xbf16>,
    %c495_i32 = arith.constant 495 : i32
    %90 = tpu.dynamic_rotate %1 by %c495_i32 dim 1 : vector<32x512xf32>, i32 -> vector<32x512xf32>
    %c495_i32_38 = arith.constant 495 : i32
    %91 = tpu.dynamic_rotate %3 by %c495_i32_38 dim 1 : vector<32x512xf32>, i32 -> vector<32x512xf32>
    %c8 = arith.constant 8 : index
    %c0_39 = arith.constant 0 : index
    %92 = vector.load %arg3[%c8, %c0_39] : memref<9x512xf32, #tpu.memory_space<vmem>>, vector<1x512xf32>
    %93 = vector.broadcast %92 : vector<1x512xf32> to vector<32x512xf32>
    %94 = arith.mulf %90, %93 : vector<32x512xf32>
    %95 = arith.truncf %94 : vector<32x512xf32> to vector<32x512xbf16>
    %c256 = arith.constant 256 : index
    %c0_40 = arith.constant 0 : index
    %96 = vector.load %arg8[%c256, %c0_40] : memref<576x512xbf16, #tpu.memory_space<vmem>>, vector<32x512xbf16>
    tpu.vector_store %arg8[%c256, %c0_40], %95 {strides = array<i32>} : memref<576x512xbf16, #tpu.memory_space<vmem>>, vector<32x512xbf16>,
    %97 = vector.broadcast %92 : vector<1x512xf32> to vector<32x512xf32>
    %98 = arith.mulf %91, %97 : vector<32x512xf32>
    %99 = arith.truncf %98 : vector<32x512xf32> to vector<32x512xbf16>
    %c544 = arith.constant 544 : index
    %c0_41 = arith.constant 0 : index
    %100 = vector.load %arg8[%c544, %c0_41] : memref<576x512xbf16, #tpu.memory_space<vmem>>, vector<32x512xbf16>
    tpu.vector_store %arg8[%c544, %c0_41], %99 {strides = array<i32>} : memref<576x512xbf16, #tpu.memory_space<vmem>>, vector<32x512xbf16>,
    %c0_42 = arith.constant 0 : index
    %c0_43 = arith.constant 0 : index
    %101 = vector.load %arg4[%c0_42, %c0_43] : memref<32x576xbf16, #tpu.memory_space<vmem>>, vector<32x576xbf16>
    %c0_44 = arith.constant 0 : index
    %c0_45 = arith.constant 0 : index
    %102 = vector.load %arg8[%c0_44, %c0_45] : memref<576x512xbf16, #tpu.memory_space<vmem>>, vector<576x512xbf16>
    %cst = arith.constant dense<0.000000e+00> : vector<32x512xf32>
    %103 = tpu.matmul %101, %102, %cst {dimension_numbers = #tpu.dot_dimension_numbers<[1], [0], [0], [1], [0, 0, 1, 1], [], []>} : vector<32x576xbf16>, vector<576x512xbf16>, vector<32x512xf32> -> vector<32x512xf32>
    %cst_46 = arith.constant dense<0.000000e+00> : vector<512xf32>
    %104 = vector.multi_reduction <add>, %103, %cst_46 [0] : vector<32x512xf32> to vector<512xf32>
    %105 = vector.shape_cast %104 : vector<512xf32> to vector<1x512xf32>
    %cst_47 = arith.constant 3.200000e+01 : f32
    %106 = vector.broadcast %cst_47 : f32 to vector<1x512xf32>
    %107 = arith.divf %105, %106 : vector<1x512xf32>
    %cst_48 = arith.constant dense<0xFF800000> : vector<512xf32>
    %108 = vector.multi_reduction <maximumf>, %103, %cst_48 [0] : vector<32x512xf32> to vector<512xf32>
    %109 = vector.shape_cast %108 : vector<512xf32> to vector<1x512xf32>
    %cst_49 = arith.constant 0.000000e+00 : f32
    %110 = vector.broadcast %cst_49 : f32 to vector<1x512xf32>
    %c17_i32_50 = arith.constant 17 : i32
    %111 = tpu.dynamic_rotate %107 by %c17_i32_50 dim 1 : vector<1x512xf32>, i32 -> vector<1x512xf32>
    %c17_i32_51 = arith.constant 17 : i32
    %112 = tpu.dynamic_rotate %109 by %c17_i32_51 dim 1 : vector<1x512xf32>, i32 -> vector<1x512xf32>
    %c0_52 = arith.constant 0 : index
    %c0_53 = arith.constant 0 : index
    %113 = vector.load %arg3[%c0_52, %c0_53] : memref<9x512xf32, #tpu.memory_space<vmem>>, vector<1x512xf32>
    %c0_54 = arith.constant 0 : index
    %114 = memref.load %arg6[%c0_54] : memref<18xf32, #tpu.memory_space<smem>>
    %115 = vector.broadcast %114 : f32 to vector<1x512xf32>
    %116 = arith.mulf %115, %111 : vector<1x512xf32>
    %c1_55 = arith.constant 1 : index
    %117 = memref.load %arg6[%c1_55] : memref<18xf32, #tpu.memory_space<smem>>
    %118 = vector.broadcast %117 : f32 to vector<1x512xf32>
    %119 = arith.mulf %118, %112 : vector<1x512xf32>
    %120 = arith.addf %116, %119 : vector<1x512xf32>
    %121 = arith.mulf %113, %120 : vector<1x512xf32>
    %122 = arith.addf %110, %121 : vector<1x512xf32>
    %c16_i32_56 = arith.constant 16 : i32
    %123 = tpu.dynamic_rotate %107 by %c16_i32_56 dim 1 : vector<1x512xf32>, i32 -> vector<1x512xf32>
    %c16_i32_57 = arith.constant 16 : i32
    %124 = tpu.dynamic_rotate %109 by %c16_i32_57 dim 1 : vector<1x512xf32>, i32 -> vector<1x512xf32>
    %c1_58 = arith.constant 1 : index
    %c0_59 = arith.constant 0 : index
    %125 = vector.load %arg3[%c1_58, %c0_59] : memref<9x512xf32, #tpu.memory_space<vmem>>, vector<1x512xf32>
    %c2_60 = arith.constant 2 : index
    %126 = memref.load %arg6[%c2_60] : memref<18xf32, #tpu.memory_space<smem>>
    %127 = vector.broadcast %126 : f32 to vector<1x512xf32>
    %128 = arith.mulf %127, %123 : vector<1x512xf32>
    %c3_61 = arith.constant 3 : index
    %129 = memref.load %arg6[%c3_61] : memref<18xf32, #tpu.memory_space<smem>>
    %130 = vector.broadcast %129 : f32 to vector<1x512xf32>
    %131 = arith.mulf %130, %124 : vector<1x512xf32>
    %132 = arith.addf %128, %131 : vector<1x512xf32>
    %133 = arith.mulf %125, %132 : vector<1x512xf32>
    %134 = arith.addf %122, %133 : vector<1x512xf32>
    %c15_i32_62 = arith.constant 15 : i32
    %135 = tpu.dynamic_rotate %107 by %c15_i32_62 dim 1 : vector<1x512xf32>, i32 -> vector<1x512xf32>
    %c15_i32_63 = arith.constant 15 : i32
    %136 = tpu.dynamic_rotate %109 by %c15_i32_63 dim 1 : vector<1x512xf32>, i32 -> vector<1x512xf32>
    %c2_64 = arith.constant 2 : index
    %c0_65 = arith.constant 0 : index
    %137 = vector.load %arg3[%c2_64, %c0_65] : memref<9x512xf32, #tpu.memory_space<vmem>>, vector<1x512xf32>
    %c4_66 = arith.constant 4 : index
    %138 = memref.load %arg6[%c4_66] : memref<18xf32, #tpu.memory_space<smem>>
    %139 = vector.broadcast %138 : f32 to vector<1x512xf32>
    %140 = arith.mulf %139, %135 : vector<1x512xf32>
    %c5_67 = arith.constant 5 : index
    %141 = memref.load %arg6[%c5_67] : memref<18xf32, #tpu.memory_space<smem>>
    %142 = vector.broadcast %141 : f32 to vector<1x512xf32>
    %143 = arith.mulf %142, %136 : vector<1x512xf32>
    %144 = arith.addf %140, %143 : vector<1x512xf32>
    %145 = arith.mulf %137, %144 : vector<1x512xf32>
    %146 = arith.addf %134, %145 : vector<1x512xf32>
    %c1_i32_68 = arith.constant 1 : i32
    %147 = tpu.dynamic_rotate %107 by %c1_i32_68 dim 1 : vector<1x512xf32>, i32 -> vector<1x512xf32>
    %c1_i32_69 = arith.constant 1 : i32
    %148 = tpu.dynamic_rotate %109 by %c1_i32_69 dim 1 : vector<1x512xf32>, i32 -> vector<1x512xf32>
    %c3_70 = arith.constant 3 : index
    %c0_71 = arith.constant 0 : index
    %149 = vector.load %arg3[%c3_70, %c0_71] : memref<9x512xf32, #tpu.memory_space<vmem>>, vector<1x512xf32>
    %c6_72 = arith.constant 6 : index
    %150 = memref.load %arg6[%c6_72] : memref<18xf32, #tpu.memory_space<smem>>
    %151 = vector.broadcast %150 : f32 to vector<1x512xf32>
    %152 = arith.mulf %151, %147 : vector<1x512xf32>
    %c7_73 = arith.constant 7 : index
    %153 = memref.load %arg6[%c7_73] : memref<18xf32, #tpu.memory_space<smem>>
    %154 = vector.broadcast %153 : f32 to vector<1x512xf32>
    %155 = arith.mulf %154, %148 : vector<1x512xf32>
    %156 = arith.addf %152, %155 : vector<1x512xf32>
    %157 = arith.mulf %149, %156 : vector<1x512xf32>
    %158 = arith.addf %146, %157 : vector<1x512xf32>
    %c4_74 = arith.constant 4 : index
    %c0_75 = arith.constant 0 : index
    %159 = vector.load %arg3[%c4_74, %c0_75] : memref<9x512xf32, #tpu.memory_space<vmem>>, vector<1x512xf32>
    %c8_76 = arith.constant 8 : index
    %160 = memref.load %arg6[%c8_76] : memref<18xf32, #tpu.memory_space<smem>>
    %161 = vector.broadcast %160 : f32 to vector<1x512xf32>
    %162 = arith.mulf %161, %107 : vector<1x512xf32>
    %c9 = arith.constant 9 : index
    %163 = memref.load %arg6[%c9] : memref<18xf32, #tpu.memory_space<smem>>
    %164 = vector.broadcast %163 : f32 to vector<1x512xf32>
    %165 = arith.mulf %164, %109 : vector<1x512xf32>
    %166 = arith.addf %162, %165 : vector<1x512xf32>
    %167 = arith.mulf %159, %166 : vector<1x512xf32>
    %168 = arith.addf %158, %167 : vector<1x512xf32>
    %c511_i32_77 = arith.constant 511 : i32
    %169 = tpu.dynamic_rotate %107 by %c511_i32_77 dim 1 : vector<1x512xf32>, i32 -> vector<1x512xf32>
    %c511_i32_78 = arith.constant 511 : i32
    %170 = tpu.dynamic_rotate %109 by %c511_i32_78 dim 1 : vector<1x512xf32>, i32 -> vector<1x512xf32>
    %c5_79 = arith.constant 5 : index
    %c0_80 = arith.constant 0 : index
    %171 = vector.load %arg3[%c5_79, %c0_80] : memref<9x512xf32, #tpu.memory_space<vmem>>, vector<1x512xf32>
    %c10 = arith.constant 10 : index
    %172 = memref.load %arg6[%c10] : memref<18xf32, #tpu.memory_space<smem>>
    %173 = vector.broadcast %172 : f32 to vector<1x512xf32>
    %174 = arith.mulf %173, %169 : vector<1x512xf32>
    %c11 = arith.constant 11 : index
    %175 = memref.load %arg6[%c11] : memref<18xf32, #tpu.memory_space<smem>>
    %176 = vector.broadcast %175 : f32 to vector<1x512xf32>
    %177 = arith.mulf %176, %170 : vector<1x512xf32>
    %178 = arith.addf %174, %177 : vector<1x512xf32>
    %179 = arith.mulf %171, %178 : vector<1x512xf32>
    %180 = arith.addf %168, %179 : vector<1x512xf32>
    %c497_i32_81 = arith.constant 497 : i32
    %181 = tpu.dynamic_rotate %107 by %c497_i32_81 dim 1 : vector<1x512xf32>, i32 -> vector<1x512xf32>
    %c497_i32_82 = arith.constant 497 : i32
    %182 = tpu.dynamic_rotate %109 by %c497_i32_82 dim 1 : vector<1x512xf32>, i32 -> vector<1x512xf32>
    %c6_83 = arith.constant 6 : index
    %c0_84 = arith.constant 0 : index
    %183 = vector.load %arg3[%c6_83, %c0_84] : memref<9x512xf32, #tpu.memory_space<vmem>>, vector<1x512xf32>
    %c12 = arith.constant 12 : index
    %184 = memref.load %arg6[%c12] : memref<18xf32, #tpu.memory_space<smem>>
    %185 = vector.broadcast %184 : f32 to vector<1x512xf32>
    %186 = arith.mulf %185, %181 : vector<1x512xf32>
    %c13 = arith.constant 13 : index
    %187 = memref.load %arg6[%c13] : memref<18xf32, #tpu.memory_space<smem>>
    %188 = vector.broadcast %187 : f32 to vector<1x512xf32>
    %189 = arith.mulf %188, %182 : vector<1x512xf32>
    %190 = arith.addf %186, %189 : vector<1x512xf32>
    %191 = arith.mulf %183, %190 : vector<1x512xf32>
    %192 = arith.addf %180, %191 : vector<1x512xf32>
    %c496_i32_85 = arith.constant 496 : i32
    %193 = tpu.dynamic_rotate %107 by %c496_i32_85 dim 1 : vector<1x512xf32>, i32 -> vector<1x512xf32>
    %c496_i32_86 = arith.constant 496 : i32
    %194 = tpu.dynamic_rotate %109 by %c496_i32_86 dim 1 : vector<1x512xf32>, i32 -> vector<1x512xf32>
    %c7_87 = arith.constant 7 : index
    %c0_88 = arith.constant 0 : index
    %195 = vector.load %arg3[%c7_87, %c0_88] : memref<9x512xf32, #tpu.memory_space<vmem>>, vector<1x512xf32>
    %c14 = arith.constant 14 : index
    %196 = memref.load %arg6[%c14] : memref<18xf32, #tpu.memory_space<smem>>
    %197 = vector.broadcast %196 : f32 to vector<1x512xf32>
    %198 = arith.mulf %197, %193 : vector<1x512xf32>
    %c15 = arith.constant 15 : index
    %199 = memref.load %arg6[%c15] : memref<18xf32, #tpu.memory_space<smem>>
    %200 = vector.broadcast %199 : f32 to vector<1x512xf32>
    %201 = arith.mulf %200, %194 : vector<1x512xf32>
    %202 = arith.addf %198, %201 : vector<1x512xf32>
    %203 = arith.mulf %195, %202 : vector<1x512xf32>
    %204 = arith.addf %192, %203 : vector<1x512xf32>
    %c495_i32_89 = arith.constant 495 : i32
    %205 = tpu.dynamic_rotate %107 by %c495_i32_89 dim 1 : vector<1x512xf32>, i32 -> vector<1x512xf32>
    %c495_i32_90 = arith.constant 495 : i32
    %206 = tpu.dynamic_rotate %109 by %c495_i32_90 dim 1 : vector<1x512xf32>, i32 -> vector<1x512xf32>
    %c8_91 = arith.constant 8 : index
    %c0_92 = arith.constant 0 : index
    %207 = vector.load %arg3[%c8_91, %c0_92] : memref<9x512xf32, #tpu.memory_space<vmem>>, vector<1x512xf32>
    %c16 = arith.constant 16 : index
    %208 = memref.load %arg6[%c16] : memref<18xf32, #tpu.memory_space<smem>>
    %209 = vector.broadcast %208 : f32 to vector<1x512xf32>
    %210 = arith.mulf %209, %205 : vector<1x512xf32>
    %c17 = arith.constant 17 : index
    %211 = memref.load %arg6[%c17] : memref<18xf32, #tpu.memory_space<smem>>
    %212 = vector.broadcast %211 : f32 to vector<1x512xf32>
    %213 = arith.mulf %212, %206 : vector<1x512xf32>
    %214 = arith.addf %210, %213 : vector<1x512xf32>
    %215 = arith.mulf %207, %214 : vector<1x512xf32>
    %216 = arith.addf %204, %215 : vector<1x512xf32>
    %217 = arith.negf %216 : vector<1x512xf32>
    %218 = math.exp %217 : vector<1x512xf32>
    %cst_93 = arith.constant 1.000000e+00 : f32
    %219 = vector.broadcast %cst_93 : f32 to vector<1x512xf32>
    %220 = arith.addf %219, %218 : vector<1x512xf32>
    %221 = arith.divf %219, %220 : vector<1x512xf32>
    %c0_94 = arith.constant 0 : index
    %c0_95 = arith.constant 0 : index
    %222 = vector.load %arg5[%c0_94, %c0_95] : memref<32x288xbf16, #tpu.memory_space<vmem>>, vector<32x288xbf16>
    %c288_96 = arith.constant 288 : index
    %c0_97 = arith.constant 0 : index
    %223 = vector.load %arg8[%c288_96, %c0_97] : memref<576x512xbf16, #tpu.memory_space<vmem>>, vector<288x512xbf16>
    %cst_98 = arith.constant dense<0.000000e+00> : vector<32x512xf32>
    %224 = tpu.matmul %222, %223, %cst_98 {dimension_numbers = #tpu.dot_dimension_numbers<[1], [0], [0], [1], [0, 0, 1, 1], [], []>} : vector<32x288xbf16>, vector<288x512xbf16>, vector<32x512xf32> -> vector<32x512xf32>
    %225 = vector.broadcast %221 : vector<1x512xf32> to vector<32x512xf32>
    %226 = arith.mulf %225, %224 : vector<32x512xf32>
    %227 = arith.addf %226, %1 : vector<32x512xf32>
    %c0_99 = arith.constant 0 : index
    %c0_100 = arith.constant 0 : index
    %c0_101 = arith.constant 0 : index
    %228 = vector.load %arg7[%c0_99, %c0_100, %c0_101] : memref<1x32x512xf32, #tpu.memory_space<vmem>>, vector<1x32x512xf32>
    %229 = vector.shape_cast %228 : vector<1x32x512xf32> to vector<32x512xf32>
    %230 = vector.shape_cast %227 : vector<32x512xf32> to vector<1x32x512xf32>
    tpu.vector_store %arg7[%c0_99, %c0_100, %c0_101], %230 {strides = array<i32>} : memref<1x32x512xf32, #tpu.memory_space<vmem>>, vector<1x32x512xf32>,
    return
  }
  func.func @transform_0(%arg0: i32) -> (i32, i32, i32) {
    %c0_i32 = arith.constant 0 : i32
    %c0_i32_0 = arith.constant 0 : i32
    %c0_i32_1 = arith.constant 0 : i32
    return %arg0, %c0_i32, %c0_i32_0 : i32, i32, i32
  }
  func.func @transform_1(%arg0: i32) -> (i32, i32, i32) {
    %c0_i32 = arith.constant 0 : i32
    %c0_i32_0 = arith.constant 0 : i32
    %c0_i32_1 = arith.constant 0 : i32
    return %arg0, %c0_i32, %c0_i32_0 : i32, i32, i32
  }
  func.func @transform_2(%arg0: i32) -> (i32, i32) {
    %c0_i32 = arith.constant 0 : i32
    %c0_i32_0 = arith.constant 0 : i32
    %c0_i32_1 = arith.constant 0 : i32
    return %c0_i32, %c0_i32_0 : i32, i32
  }
  func.func @transform_3(%arg0: i32) -> (i32, i32) {
    %c0_i32 = arith.constant 0 : i32
    %c0_i32_0 = arith.constant 0 : i32
    %c0_i32_1 = arith.constant 0 : i32
    return %c0_i32, %c0_i32_0 : i32, i32
  }
  func.func @transform_4(%arg0: i32) -> (i32, i32) {
    %c0_i32 = arith.constant 0 : i32
    %c0_i32_0 = arith.constant 0 : i32
    %c0_i32_1 = arith.constant 0 : i32
    return %c0_i32, %c0_i32_0 : i32, i32
  }
  func.func @transform_5(%arg0: i32) -> i32 {
    %c0_i32 = arith.constant 0 : i32
    %c0_i32_0 = arith.constant 0 : i32
    return %c0_i32 : i32
  }
  func.func @transform_6(%arg0: i32) -> (i32, i32, i32) {
    %c0_i32 = arith.constant 0 : i32
    %c0_i32_0 = arith.constant 0 : i32
    %c0_i32_1 = arith.constant 0 : i32
    return %arg0, %c0_i32, %c0_i32_0 : i32, i32, i32
  }
}

</mosaic_0001>

<llo_original>
// kernel: tpu_custom_call.1
$region0: #{tpu_custom_call.1}
  #allocation0 [shape = 'u32[]', space=smem, size = 0x4, offset = 0x4, fixed_abs, tag = 'smem constant byte address 0x4 - core index']
  #allocation1 [shape = 'u32[144,128]{1,0:T(1,128)}', space=vmem, size = 0x12000, scoped, tag = 'internal scratch']
  #allocation2 [shape = 'bf16[576,512]{1,0:T(16,128)(2,1)}', space=vmem, size = 0x90000, scoped, tag = 'scratch operand']
  %s0 = inlined_call_operand.hbm [shape: f32[1,32,512], index: 0, kind: input, shape index: {}]
  %s1 = inlined_call_operand.hbm [shape: f32[1,32,512], index: 1, kind: input, shape index: {}]
  %s2 = inlined_call_operand.hbm [shape: f32[9,512], index: 2, kind: input, shape index: {}]
  %s3 = inlined_call_operand.hbm [shape: bf16[32,576], index: 3, kind: input, shape index: {}]
  %s4 = inlined_call_operand.hbm [shape: bf16[32,288], index: 4, kind: input, shape index: {}]
  %s5 = inlined_call_operand.vmem [shape: f32[18], index: 5, kind: input, shape index: {}]
  %s6 = inlined_call_operand.hbm [shape: f32[1,32,512], index: 6, kind: output, shape index: {}]
  %s7 = sld [smem:[#allocation0]]
  $region58: #{tpu_custom_call.1} parent=0
    _
  %s9 = ssub.s32 1, %s7
  %s10 = scalar_select 0, %s9, %s7
  $region1: #{tpu_custom_call.1} parent=0
    #allocation3 [shape = 'u8[65536]{0}', space=vmem, size = 0x10000, scoped, tag = 'input window, operand 0, single buffered']
    #allocation4 [shape = 's32[1]{0}', space=sflag, size = 0x4, scoped, tag = 'scoped memory for tpu_custom_call.1']
    #allocation5 [shape = 's32[1]{0}', space=sflag, size = 0x4, scoped, tag = 'scoped memory for tpu_custom_call.1']
    #allocation6 [shape = 's32[1]{0}', space=sflag, size = 0x4, scoped, tag = 'scoped memory for tpu_custom_call.1']
    #allocation7 [shape = 'u8[65536]{0}', space=vmem, size = 0x10000, scoped, tag = 'input window, operand 1, single buffered']
    #allocation8 [shape = 's32[1]{0}', space=sflag, size = 0x4, scoped, tag = 'scoped memory for tpu_custom_call.1']
    #allocation9 [shape = 'u8[32768]{0}', space=vmem, size = 0x8000, scoped, tag = 'input window, operand 2, single buffered']
    #allocation10 [shape = 'u8[40960]{0}', space=vmem, size = 0xa000, scoped, tag = 'input window, operand 3, single buffered']
    #allocation11 [shape = 's32[1]{0}', space=sflag, size = 0x4, scoped, tag = 'scoped memory for tpu_custom_call.1']
    #allocation12 [shape = 'u8[24576]{0}', space=vmem, size = 0x6000, scoped, tag = 'input window, operand 4, single buffered']
    #allocation13 [shape = 'u8[512]{0}', space=smem, size = 0x200, scoped, tag = 'input window, operand 5, single buffered']
    #allocation14 [shape = 'u8[65536]{0}', space=vmem, size = 0x10000, scoped, tag = 'output window, operand 0, single buffered']
    %11 = vsyncpa [#allocation4], 0
    %12 = vsyncpa [#allocation8], 0
    %13 = vsyncpa [#allocation11], 0
    %14 = vsyncpa [#allocation6], 0
    %15 = vsyncpa [#allocation5], 0
    // Predicated region
    $region2: #{tpu_custom_call.1} parent=1 // pred_check
      _
    $region3: #{tpu_custom_call.1} parent=1 // pred_check_branch
      %17 = sbr.rel (0) target = $region5
    $region4: #{tpu_custom_call.1} parent=1 // pred_region
      %s19 = ssub.s32 2048, 2048
      %20 = vsyncadd [#allocation4], %s19
      %s21 = sshll.u32 [#allocation3], 4
      %s22 = int_to_ptr.vmem [resolvable:$true] %s21
      %27 = dma.hbm_to_vmem [thread:$0]  %s0, 2048, %s22, [#allocation4], 512, 512, 32
    $region5: #{tpu_custom_call.1} parent=1 // pred_fallthru
      _
    // Predicated region
    $region6: #{tpu_custom_call.1} parent=1 // pred_check
      _
    $region7: #{tpu_custom_call.1} parent=1 // pred_check_branch
      %29 = sbr.rel (0) target = $region9
    $region8: #{tpu_custom_call.1} parent=1 // pred_region
      %s31 = ssub.s32 2048, 2048
      %32 = vsyncadd [#allocation8], %s31
      %s33 = sshll.u32 [#allocation7], 4
      %s34 = int_to_ptr.vmem [resolvable:$true] %s33
      %39 = dma.hbm_to_vmem [thread:$0]  %s1, 2048, %s34, [#allocation8], 512, 512, 32
    $region9: #{tpu_custom_call.1} parent=1 // pred_fallthru
      _
    // Predicated region
    $region10: #{tpu_custom_call.1} parent=1 // pred_check
      _
    $region11: #{tpu_custom_call.1} parent=1 // pred_check_branch
      %41 = sbr.rel (0) target = $region13
    $region12: #{tpu_custom_call.1} parent=1 // pred_region
      %s43 = ssub.s32 1024, 1024
      %44 = vsyncadd [#allocation8], %s43
      %s45 = sshll.u32 [#allocation9], 4
      %s46 = int_to_ptr.vmem [resolvable:$true] %s45
      %51 = dma.hbm_to_vmem [thread:$0]  %s2, 1024, %s46, [#allocation8], 512, 512, 32
    $region13: #{tpu_custom_call.1} parent=1 // pred_fallthru
      _
    // Predicated region
    $region14: #{tpu_custom_call.1} parent=1 // pred_check
      _
    $region15: #{tpu_custom_call.1} parent=1 // pred_check_branch
      %53 = sbr.rel (0) target = $region17
    $region16: #{tpu_custom_call.1} parent=1 // pred_region
      %s55 = ssub.s32 1280, 1280
      %56 = vsyncadd [#allocation11], %s55
      %s57 = sshll.u32 [#allocation10], 4
      %s58 = int_to_ptr.vmem [resolvable:$true] %s57
      %63 = dma.hbm_to_vmem [thread:$0]  %s3, 1280, %s58, [#allocation11], 320, 320, 20
    $region17: #{tpu_custom_call.1} parent=1 // pred_fallthru
      _
    // Predicated region
    $region18: #{tpu_custom_call.1} parent=1 // pred_check
      _
    $region19: #{tpu_custom_call.1} parent=1 // pred_check_branch
      %65 = sbr.rel (0) target = $region21
    $region20: #{tpu_custom_call.1} parent=1 // pred_region
      %s67 = ssub.s32 768, 768
      %68 = vsyncadd [#allocation11], %s67
      %s69 = sshll.u32 [#allocation12], 4
      %s70 = int_to_ptr.vmem [resolvable:$true] %s69
      %75 = dma.hbm_to_vmem [thread:$0]  %s4, 768, %s70, [#allocation11], 192, 192, 12
    $region21: #{tpu_custom_call.1} parent=1 // pred_fallthru
      _
    // Predicated region
    $region22: #{tpu_custom_call.1} parent=1 // pred_check
      _
    $region23: #{tpu_custom_call.1} parent=1 // pred_check_branch
      %77 = sbr.rel (0) target = $region25
    $region24: #{tpu_custom_call.1} parent=1 // pred_region
      %s79 = ssub.s32 16, 16
      %80 = vsyncadd [#allocation6], %s79
      %s82 = sshll.u32 %s5, 4
      %s83 = int_to_ptr.vmem [resolvable:$true] %s82
      %85 = dma.vmem_to_smem %s83, 16, [#allocation13], [#allocation6]
    $region25: #{tpu_custom_call.1} parent=1 // pred_fallthru
      _
    // Predicated region
    $region26: #{tpu_custom_call.1} parent=1 // pred_check
      _
    $region27: #{tpu_custom_call.1} parent=1 // pred_check_branch
      %87 = sbr.rel (0) target = $region29
    $region28: #{tpu_custom_call.1} parent=1 // pred_region
      %88 = dma.done [#allocation4], 2048
    $region29: #{tpu_custom_call.1} parent=1 // pred_fallthru
      _
    // Predicated region
    $region30: #{tpu_custom_call.1} parent=1 // pred_check
      _
    $region31: #{tpu_custom_call.1} parent=1 // pred_check_branch
      %90 = sbr.rel (0) target = $region33
    $region32: #{tpu_custom_call.1} parent=1 // pred_region
      %91 = dma.done [#allocation8], 2048
    $region33: #{tpu_custom_call.1} parent=1 // pred_fallthru
      _
    // Predicated region
    $region34: #{tpu_custom_call.1} parent=1 // pred_check
      _
    $region35: #{tpu_custom_call.1} parent=1 // pred_check_branch
      %93 = sbr.rel (0) target = $region37
    $region36: #{tpu_custom_call.1} parent=1 // pred_region
      %94 = dma.done [#allocation8], 1024
    $region37: #{tpu_custom_call.1} parent=1 // pred_fallthru
      _
    // Predicated region
    $region38: #{tpu_custom_call.1} parent=1 // pred_check
      _
    $region39: #{tpu_custom_call.1} parent=1 // pred_check_branch
      %96 = sbr.rel (0) target = $region41
    $region40: #{tpu_custom_call.1} parent=1 // pred_region
      %97 = dma.done [#allocation11], 1280
    $region41: #{tpu_custom_call.1} parent=1 // pred_fallthru
      _
    // Predicated region
    $region42: #{tpu_custom_call.1} parent=1 // pred_check
      _
    $region43: #{tpu_custom_call.1} parent=1 // pred_check_branch
      %99 = sbr.rel (0) target = $region45
    $region44: #{tpu_custom_call.1} parent=1 // pred_region
      %100 = dma.done [#allocation11], 768
    $region45: #{tpu_custom_call.1} parent=1 // pred_fallthru
      _
    // Predicated region
    $region46: #{tpu_custom_call.1} parent=1 // pred_check
      _
    $region47: #{tpu_custom_call.1} parent=1 // pred_check_branch
      %102 = sbr.rel (0) target = $region49
    $region48: #{tpu_custom_call.1} parent=1 // pred_region
      %103 = dma.done [#allocation6], 16
    $region49: #{tpu_custom_call.1} parent=1 // pred_fallthru
      _
    %104 = sfence
    %v106 = vld [vmem:[#allocation3] sm:$0xff]
    %v107 = vld [vmem:[#allocation3 + $0x8] sm:$0xff]
    %v108 = vld [vmem:[#allocation3 + $0x10] sm:$0xff]
    %v109 = vld [vmem:[#allocation3 + $0x18] sm:$0xff]
    %v110 = vld [vmem:[#allocation3 + $0x20] sm:$0xff]
    %v111 = vld [vmem:[#allocation3 + $0x28] sm:$0xff]
    %v112 = vld [vmem:[#allocation3 + $0x30] sm:$0xff]
    %v113 = vld [vmem:[#allocation3 + $0x38] sm:$0xff]
    %v114 = vld [vmem:[#allocation3 + $0x40] sm:$0xff]
    %v115 = vld [vmem:[#allocation3 + $0x48] sm:$0xff]
    %v116 = vld [vmem:[#allocation3 + $0x50] sm:$0xff]
    %v117 = vld [vmem:[#allocation3 + $0x58] sm:$0xff]
    %v118 = vld [vmem:[#allocation3 + $0x60] sm:$0xff]
    %v119 = vld [vmem:[#allocation3 + $0x68] sm:$0xff]
    %v120 = vld [vmem:[#allocation3 + $0x70] sm:$0xff]
    %v121 = vld [vmem:[#allocation3 + $0x78] sm:$0xff]
    %v122 = vld [vmem:[#allocation7] sm:$0xff]
    %v123 = vld [vmem:[#allocation7 + $0x8] sm:$0xff]
    %v124 = vld [vmem:[#allocation7 + $0x10] sm:$0xff]
    %v125 = vld [vmem:[#allocation7 + $0x18] sm:$0xff]
    %v126 = vld [vmem:[#allocation7 + $0x20] sm:$0xff]
    %v127 = vld [vmem:[#allocation7 + $0x28] sm:$0xff]
    %v128 = vld [vmem:[#allocation7 + $0x30] sm:$0xff]
    %v129 = vld [vmem:[#allocation7 + $0x38] sm:$0xff]
    %v130 = vld [vmem:[#allocation7 + $0x40] sm:$0xff]
    %v131 = vld [vmem:[#allocation7 + $0x48] sm:$0xff]
    %v132 = vld [vmem:[#allocation7 + $0x50] sm:$0xff]
    %v133 = vld [vmem:[#allocation7 + $0x58] sm:$0xff]
    %v134 = vld [vmem:[#allocation7 + $0x60] sm:$0xff]
    %v135 = vld [vmem:[#allocation7 + $0x68] sm:$0xff]
    %v136 = vld [vmem:[#allocation7 + $0x70] sm:$0xff]
    %v137 = vld [vmem:[#allocation7 + $0x78] sm:$0xff]
    %138 = vrot.lane.b32.xlu0 %v106, 17
    %v139 = vpop.permute.xlu0 %138
    %140 = vrot.lane.b32.xlu0 %v110, 17
    %v141 = vpop.permute.xlu0 %140
    %142 = vrot.lane.b32.xlu0 %v114, 17
    %v143 = vpop.permute.xlu0 %142
    %144 = vrot.lane.b32.xlu0 %v118, 17
    %v145 = vpop.permute.xlu0 %144
    %146 = vrot.lane.b32.xlu0 %v107, 17
    %v147 = vpop.permute.xlu0 %146
    %148 = vrot.lane.b32.xlu0 %v111, 17
    %v149 = vpop.permute.xlu0 %148
    %150 = vrot.lane.b32.xlu0 %v115, 17
    %v151 = vpop.permute.xlu0 %150
    %152 = vrot.lane.b32.xlu0 %v119, 17
    %v153 = vpop.permute.xlu0 %152
    %154 = vrot.lane.b32.xlu0 %v108, 17
    %v155 = vpop.permute.xlu0 %154
    %156 = vrot.lane.b32.xlu0 %v112, 17
    %v157 = vpop.permute.xlu0 %156
    %158 = vrot.lane.b32.xlu0 %v116, 17
    %v159 = vpop.permute.xlu0 %158
    %160 = vrot.lane.b32.xlu0 %v120, 17
    %v161 = vpop.permute.xlu0 %160
    %162 = vrot.lane.b32.xlu0 %v109, 17
    %v163 = vpop.permute.xlu0 %162
    %164 = vrot.lane.b32.xlu0 %v113, 17
    %v165 = vpop.permute.xlu0 %164
    %166 = vrot.lane.b32.xlu0 %v117, 17
    %v167 = vpop.permute.xlu0 %166
    %168 = vrot.lane.b32.xlu0 %v121, 17
    %v169 = vpop.permute.xlu0 %168
    %v170 = vlaneseq
    %v171 = vand.u32 %v170, 127
    %vm172 = vcmp.lt.s32.totalorder %v171, 17
    %v173 = vsel %vm172, %v155, %v163
    %v174 = vsel %vm172, %v157, %v165
    %v175 = vsel %vm172, %v159, %v167
    %v176 = vsel %vm172, %v161, %v169
    %v177 = vsel %vm172, %v147, %v155
    %v178 = vsel %vm172, %v149, %v157
    %v179 = vsel %vm172, %v151, %v159
    %v180 = vsel %vm172, %v153, %v161
    %v181 = vsel %vm172, %v139, %v147
    %v182 = vsel %vm172, %v141, %v149
    %v183 = vsel %vm172, %v143, %v151
    %v184 = vsel %vm172, %v145, %v153
    %v185 = vsel %vm172, %v163, %v139
    %v186 = vsel %vm172, %v165, %v141
    %v187 = vsel %vm172, %v167, %v143
    %v188 = vsel %vm172, %v169, %v145
    %189 = vrot.lane.b32.xlu0 %v122, 17
    %v190 = vpop.permute.xlu0 %189
    %191 = vrot.lane.b32.xlu0 %v126, 17
    %v192 = vpop.permute.xlu0 %191
    %193 = vrot.lane.b32.xlu0 %v130, 17
    %v194 = vpop.permute.xlu0 %193
    %195 = vrot.lane.b32.xlu0 %v134, 17
    %v196 = vpop.permute.xlu0 %195
    %197 = vrot.lane.b32.xlu0 %v123, 17
    %v198 = vpop.permute.xlu0 %197
    %199 = vrot.lane.b32.xlu0 %v127, 17
    %v200 = vpop.permute.xlu0 %199
    %201 = vrot.lane.b32.xlu0 %v131, 17
    %v202 = vpop.permute.xlu0 %201
    %203 = vrot.lane.b32.xlu0 %v135, 17
    %v204 = vpop.permute.xlu0 %203
    %205 = vrot.lane.b32.xlu0 %v124, 17
    %v206 = vpop.permute.xlu0 %205
    %207 = vrot.lane.b32.xlu0 %v128, 17
    %v208 = vpop.permute.xlu0 %207
    %209 = vrot.lane.b32.xlu0 %v132, 17
    %v210 = vpop.permute.xlu0 %209
    %211 = vrot.lane.b32.xlu0 %v136, 17
    %v212 = vpop.permute.xlu0 %211
    %213 = vrot.lane.b32.xlu0 %v125, 17
    %v214 = vpop.permute.xlu0 %213
    %215 = vrot.lane.b32.xlu0 %v129, 17
    %v216 = vpop.permute.xlu0 %215
    %217 = vrot.lane.b32.xlu0 %v133, 17
    %v218 = vpop.permute.xlu0 %217
    %219 = vrot.lane.b32.xlu0 %v137, 17
    %v220 = vpop.permute.xlu0 %219
    %v221 = vsel %vm172, %v206, %v214
    %v222 = vsel %vm172, %v208, %v216
    %v223 = vsel %vm172, %v210, %v218
    %v224 = vsel %vm172, %v212, %v220
    %v225 = vsel %vm172, %v198, %v206
    %v226 = vsel %vm172, %v200, %v208
    %v227 = vsel %vm172, %v202, %v210
    %v228 = vsel %vm172, %v204, %v212
    %v229 = vsel %vm172, %v190, %v198
    %v230 = vsel %vm172, %v192, %v200
    %v231 = vsel %vm172, %v194, %v202
    %v232 = vsel %vm172, %v196, %v204
    %v233 = vsel %vm172, %v214, %v190
    %v234 = vsel %vm172, %v216, %v192
    %v235 = vsel %vm172, %v218, %v194
    %v236 = vsel %vm172, %v220, %v196
    %v237 = vld [vmem:[#allocation9] ss:$8 sm:$0xf]
    %v239 = vlaneseq
    %v240 = vshrl.u32 %v239, 7
    %v241 = vsub.s32 0, %v240
    %v242 = vrot.slane %v237, %v241
    %v243 = vlaneseq
    %v244 = vshrl.u32 %v243, 7
    %v245 = vsub.s32 1, %v244
    %v246 = vrot.slane %v237, %v245
    %v247 = vlaneseq
    %v248 = vshrl.u32 %v247, 7
    %v249 = vsub.s32 2, %v248
    %v250 = vrot.slane %v237, %v249
    %v251 = vlaneseq
    %v252 = vshrl.u32 %v251, 7
    %v253 = vsub.s32 3, %v252
    %v254 = vrot.slane %v237, %v253
    %v259 = vmul.f32 %v185, %v242
    %v260 = vmul.f32 %v181, %v246
    %v261 = vmul.f32 %v177, %v250
    %v262 = vmul.f32 %v173, %v254
    %v263 = vmul.f32 %v186, %v242
    %v264 = vmul.f32 %v182, %v246
    %v265 = vmul.f32 %v178, %v250
    %v266 = vmul.f32 %v174, %v254
    %v267 = vmul.f32 %v187, %v242
    %v268 = vmul.f32 %v183, %v246
    %v269 = vmul.f32 %v179, %v250
    %v270 = vmul.f32 %v175, %v254
    %v271 = vmul.f32 %v188, %v242
    %v272 = vmul.f32 %v184, %v246
    %v273 = vmul.f32 %v180, %v250
    %v274 = vmul.f32 %v176, %v254
    %v275 = vpack.c.bf16 %v263, %v259
    %v276 = vpack.c.bf16 %v264, %v260
    %v277 = vpack.c.bf16 %v265, %v261
    %v278 = vpack.c.bf16 %v266, %v262
    %v279 = vpack.c.bf16 %v271, %v267
    %v280 = vpack.c.bf16 %v272, %v268
    %v281 = vpack.c.bf16 %v273, %v269
    %v282 = vpack.c.bf16 %v274, %v270
    %283 = vst [vmem:[#allocation2] sm:$0xff] %v275
    %284 = vst [vmem:[#allocation2 + $0x8] sm:$0xff] %v276
    %285 = vst [vmem:[#allocation2 + $0x10] sm:$0xff] %v277
    %286 = vst [vmem:[#allocation2 + $0x18] sm:$0xff] %v278
    %287 = vst [vmem:[#allocation2 + $0x20] sm:$0xff] %v279
    %288 = vst [vmem:[#allocation2 + $0x28] sm:$0xff] %v280
    %289 = vst [vmem:[#allocation2 + $0x30] sm:$0xff] %v281
    %290 = vst [vmem:[#allocation2 + $0x38] sm:$0xff] %v282
    %v291 = vmul.f32 %v233, %v242
    %v292 = vmul.f32 %v229, %v246
    %v293 = vmul.f32 %v225, %v250
    %v294 = vmul.f32 %v221, %v254
    %v295 = vmul.f32 %v234, %v242
    %v296 = vmul.f32 %v230, %v246
    %v297 = vmul.f32 %v226, %v250
    %v298 = vmul.f32 %v222, %v254
    %v299 = vmul.f32 %v235, %v242
    %v300 = vmul.f32 %v231, %v246
    %v301 = vmul.f32 %v227, %v250
    %v302 = vmul.f32 %v223, %v254
    %v303 = vmul.f32 %v236, %v242
    %v304 = vmul.f32 %v232, %v246
    %v305 = vmul.f32 %v228, %v250
    %v306 = vmul.f32 %v224, %v254
    %v307 = vpack.c.bf16 %v295, %v291
    %v308 = vpack.c.bf16 %v296, %v292
    %v309 = vpack.c.bf16 %v297, %v293
    %v310 = vpack.c.bf16 %v298, %v294
    %v311 = vpack.c.bf16 %v303, %v299
    %v312 = vpack.c.bf16 %v304, %v300
    %v313 = vpack.c.bf16 %v305, %v301
    %v314 = vpack.c.bf16 %v306, %v302
    %315 = vst [vmem:[#allocation2 + $0x240] sm:$0xff] %v307
    %316 = vst [vmem:[#allocation2 + $0x248] sm:$0xff] %v308
    %317 = vst [vmem:[#allocation2 + $0x250] sm:$0xff] %v309
    %318 = vst [vmem:[#allocation2 + $0x258] sm:$0xff] %v310
    %319 = vst [vmem:[#allocation2 + $0x260] sm:$0xff] %v311
    %320 = vst [vmem:[#allocation2 + $0x268] sm:$0xff] %v312
    %321 = vst [vmem:[#allocation2 + $0x270] sm:$0xff] %v313
    %322 = vst [vmem:[#allocation2 + $0x278] sm:$0xff] %v314
    %323 = vrot.lane.b32.xlu0 %v106, 16
    %v324 = vpop.permute.xlu0 %323
    %325 = vrot.lane.b32.xlu0 %v110, 16
    %v326 = vpop.permute.xlu0 %325
    %327 = vrot.lane.b32.xlu0 %v114, 16
    %v328 = vpop.permute.xlu0 %327
    %329 = vrot.lane.b32.xlu0 %v118, 16
    %v330 = vpop.permute.xlu0 %329
    %331 = vrot.lane.b32.xlu0 %v107, 16
    %v332 = vpop.permute.xlu0 %331
    %333 = vrot.lane.b32.xlu0 %v111, 16
    %v334 = vpop.permute.xlu0 %333
    %335 = vrot.lane.b32.xlu0 %v115, 16
    %v336 = vpop.permute.xlu0 %335
    %337 = vrot.lane.b32.xlu0 %v119, 16
    %v338 = vpop.permute.xlu0 %337
    %339 = vrot.lane.b32.xlu0 %v108, 16
    %v340 = vpop.permute.xlu0 %339
    %341 = vrot.lane.b32.xlu0 %v112, 16
    %v342 = vpop.permute.xlu0 %341
    %343 = vrot.lane.b32.xlu0 %v116, 16
    %v344 = vpop.permute.xlu0 %343
    %345 = vrot.lane.b32.xlu0 %v120, 16
    %v346 = vpop.permute.xlu0 %345
    %347 = vrot.lane.b32.xlu0 %v109, 16
    %v348 = vpop.permute.xlu0 %347
    %349 = vrot.lane.b32.xlu0 %v113, 16
    %v350 = vpop.permute.xlu0 %349
    %351 = vrot.lane.b32.xlu0 %v117, 16
    %v352 = vpop.permute.xlu0 %351
    %353 = vrot.lane.b32.xlu0 %v121, 16
    %v354 = vpop.permute.xlu0 %353
    %vm355 = vcmp.lt.s32.totalorder %v171, 16
    %v356 = vsel %vm355, %v340, %v348
    %v357 = vsel %vm355, %v342, %v350
    %v358 = vsel %vm355, %v344, %v352
    %v359 = vsel %vm355, %v346, %v354
    %v360 = vsel %vm355, %v332, %v340
    %v361 = vsel %vm355, %v334, %v342
    %v362 = vsel %vm355, %v336, %v344
    %v363 = vsel %vm355, %v338, %v346
    %v364 = vsel %vm355, %v324, %v332
    %v365 = vsel %vm355, %v326, %v334
    %v366 = vsel %vm355, %v328, %v336
    %v367 = vsel %vm355, %v330, %v338
    %v368 = vsel %vm355, %v348, %v324
    %v369 = vsel %vm355, %v350, %v326
    %v370 = vsel %vm355, %v352, %v328
    %v371 = vsel %vm355, %v354, %v330
    %372 = vrot.lane.b32.xlu0 %v122, 16
    %v373 = vpop.permute.xlu0 %372
    %374 = vrot.lane.b32.xlu0 %v126, 16
    %v375 = vpop.permute.xlu0 %374
    %376 = vrot.lane.b32.xlu0 %v130, 16
    %v377 = vpop.permute.xlu0 %376
    %378 = vrot.lane.b32.xlu0 %v134, 16
    %v379 = vpop.permute.xlu0 %378
    %380 = vrot.lane.b32.xlu0 %v123, 16
    %v381 = vpop.permute.xlu0 %380
    %382 = vrot.lane.b32.xlu0 %v127, 16
    %v383 = vpop.permute.xlu0 %382
    %384 = vrot.lane.b32.xlu0 %v131, 16
    %v385 = vpop.permute.xlu0 %384
    %386 = vrot.lane.b32.xlu0 %v135, 16
    %v387 = vpop.permute.xlu0 %386
    %388 = vrot.lane.b32.xlu0 %v124, 16
    %v389 = vpop.permute.xlu0 %388
    %390 = vrot.lane.b32.xlu0 %v128, 16
    %v391 = vpop.permute.xlu0 %390
    %392 = vrot.lane.b32.xlu0 %v132, 16
    %v393 = vpop.permute.xlu0 %392
    %394 = vrot.lane.b32.xlu0 %v136, 16
    %v395 = vpop.permute.xlu0 %394
    %396 = vrot.lane.b32.xlu0 %v125, 16
    %v397 = vpop.permute.xlu0 %396
    %398 = vrot.lane.b32.xlu0 %v129, 16
    %v399 = vpop.permute.xlu0 %398
    %400 = vrot.lane.b32.xlu0 %v133, 16
    %v401 = vpop.permute.xlu0 %400
    %402 = vrot.lane.b32.xlu0 %v137, 16
    %v403 = vpop.permute.xlu0 %402
    %v404 = vsel %vm355, %v389, %v397
    %v405 = vsel %vm355, %v391, %v399
    %v406 = vsel %vm355, %v393, %v401
    %v407 = vsel %vm355, %v395, %v403
    %v408 = vsel %vm355, %v381, %v389
    %v409 = vsel %vm355, %v383, %v391
    %v410 = vsel %vm355, %v385, %v393
    %v411 = vsel %vm355, %v387, %v395
    %v412 = vsel %vm355, %v373, %v381
    %v413 = vsel %vm355, %v375, %v383
    %v414 = vsel %vm355, %v377, %v385
    %v415 = vsel %vm355, %v379, %v387
    %v416 = vsel %vm355, %v397, %v373
    %v417 = vsel %vm355, %v399, %v375
    %v418 = vsel %vm355, %v401, %v377
    %v419 = vsel %vm355, %v403, %v379
    %s420 = scalar_lea.vmem [#allocation9], 1
    %v421 = vld [vmem:[%s420] ss:$8 sm:$0xf]
    %v423 = vlaneseq
    %v424 = vshrl.u32 %v423, 7
    %v425 = vsub.s32 0, %v424
    %v426 = vrot.slane %v421, %v425
    %v427 = vlaneseq
    %v428 = vshrl.u32 %v427, 7
    %v429 = vsub.s32 1, %v428
    %v430 = vrot.slane %v421, %v429
    %v431 = vlaneseq
    %v432 = vshrl.u32 %v431, 7
    %v433 = vsub.s32 2, %v432
    %v434 = vrot.slane %v421, %v433
    %v435 = vlaneseq
    %v436 = vshrl.u32 %v435, 7
    %v437 = vsub.s32 3, %v436
    %v438 = vrot.slane %v421, %v437
    %v443 = vmul.f32 %v368, %v426
    %v444 = vmul.f32 %v364, %v430
    %v445 = vmul.f32 %v360, %v434
    %v446 = vmul.f32 %v356, %v438
    %v447 = vmul.f32 %v369, %v426
    %v448 = vmul.f32 %v365, %v430
    %v449 = vmul.f32 %v361, %v434
    %v450 = vmul.f32 %v357, %v438
    %v451 = vmul.f32 %v370, %v426
    %v452 = vmul.f32 %v366, %v430
    %v453 = vmul.f32 %v362, %v434
    %v454 = vmul.f32 %v358, %v438
    %v455 = vmul.f32 %v371, %v426
    %v456 = vmul.f32 %v367, %v430
    %v457 = vmul.f32 %v363, %v434
    %v458 = vmul.f32 %v359, %v438
    %v459 = vpack.c.bf16 %v447, %v443
    %v460 = vpack.c.bf16 %v448, %v444
    %v461 = vpack.c.bf16 %v449, %v445
    %v462 = vpack.c.bf16 %v450, %v446
    %v463 = vpack.c.bf16 %v455, %v451
    %v464 = vpack.c.bf16 %v456, %v452
    %v465 = vpack.c.bf16 %v457, %v453
    %v466 = vpack.c.bf16 %v458, %v454
    %467 = vst [vmem:[#allocation2 + $0x40] sm:$0xff] %v459
    %468 = vst [vmem:[#allocation2 + $0x48] sm:$0xff] %v460
    %469 = vst [vmem:[#allocation2 + $0x50] sm:$0xff] %v461
    %470 = vst [vmem:[#allocation2 + $0x58] sm:$0xff] %v462
    %471 = vst [vmem:[#allocation2 + $0x60] sm:$0xff] %v463
    %472 = vst [vmem:[#allocation2 + $0x68] sm:$0xff] %v464
    %473 = vst [vmem:[#allocation2 + $0x70] sm:$0xff] %v465
    %474 = vst [vmem:[#allocation2 + $0x78] sm:$0xff] %v466
    %v475 = vmul.f32 %v416, %v426
    %v476 = vmul.f32 %v412, %v430
    %v477 = vmul.f32 %v408, %v434
    %v478 = vmul.f32 %v404, %v438
    %v479 = vmul.f32 %v417, %v426
    %v480 = vmul.f32 %v413, %v430
    %v481 = vmul.f32 %v409, %v434
    %v482 = vmul.f32 %v405, %v438
    %v483 = vmul.f32 %v418, %v426
    %v484 = vmul.f32 %v414, %v430
    %v485 = vmul.f32 %v410, %v434
    %v486 = vmul.f32 %v406, %v438
    %v487 = vmul.f32 %v419, %v426
    %v488 = vmul.f32 %v415, %v430
    %v489 = vmul.f32 %v411, %v434
    %v490 = vmul.f32 %v407, %v438
    %v491 = vpack.c.bf16 %v479, %v475
    %v492 = vpack.c.bf16 %v480, %v476
    %v493 = vpack.c.bf16 %v481, %v477
    %v494 = vpack.c.bf16 %v482, %v478
    %v495 = vpack.c.bf16 %v487, %v483
    %v496 = vpack.c.bf16 %v488, %v484
    %v497 = vpack.c.bf16 %v489, %v485
    %v498 = vpack.c.bf16 %v490, %v486
    %499 = vst [vmem:[#allocation2 + $0x280] sm:$0xff] %v491
    %500 = vst [vmem:[#allocation2 + $0x288] sm:$0xff] %v492
    %501 = vst [vmem:[#allocation2 + $0x290] sm:$0xff] %v493
    %502 = vst [vmem:[#allocation2 + $0x298] sm:$0xff] %v494
    %503 = vst [vmem:[#allocation2 + $0x2a0] sm:$0xff] %v495
    %504 = vst [vmem:[#allocation2 + $0x2a8] sm:$0xff] %v496
    %505 = vst [vmem:[#allocation2 + $0x2b0] sm:$0xff] %v497
    %506 = vst [vmem:[#allocation2 + $0x2b8] sm:$0xff] %v498
    %507 = vrot.lane.b32.xlu0 %v106, 15
    %v508 = vpop.permute.xlu0 %507
    %509 = vrot.lane.b32.xlu0 %v110, 15
    %v510 = vpop.permute.xlu0 %509
    %511 = vrot.lane.b32.xlu0 %v114, 15
    %v512 = vpop.permute.xlu0 %511
    %513 = vrot.lane.b32.xlu0 %v118, 15
    %v514 = vpop.permute.xlu0 %513
    %515 = vrot.lane.b32.xlu0 %v107, 15
    %v516 = vpop.permute.xlu0 %515
    %517 = vrot.lane.b32.xlu0 %v111, 15
    %v518 = vpop.permute.xlu0 %517
    %519 = vrot.lane.b32.xlu0 %v115, 15
    %v520 = vpop.permute.xlu0 %519
    %521 = vrot.lane.b32.xlu0 %v119, 15
    %v522 = vpop.permute.xlu0 %521
    %523 = vrot.lane.b32.xlu0 %v108, 15
    %v524 = vpop.permute.xlu0 %523
    %525 = vrot.lane.b32.xlu0 %v112, 15
    %v526 = vpop.permute.xlu0 %525
    %527 = vrot.lane.b32.xlu0 %v116, 15
    %v528 = vpop.permute.xlu0 %527
    %529 = vrot.lane.b32.xlu0 %v120, 15
    %v530 = vpop.permute.xlu0 %529
    %531 = vrot.lane.b32.xlu0 %v109, 15
    %v532 = vpop.permute.xlu0 %531
    %533 = vrot.lane.b32.xlu0 %v113, 15
    %v534 = vpop.permute.xlu0 %533
    %535 = vrot.lane.b32.xlu0 %v117, 15
    %v536 = vpop.permute.xlu0 %535
    %537 = vrot.lane.b32.xlu0 %v121, 15
    %v538 = vpop.permute.xlu0 %537
    %vm539 = vcmp.lt.s32.totalorder %v171, 15
    %v540 = vsel %vm539, %v524, %v532
    %v541 = vsel %vm539, %v526, %v534
    %v542 = vsel %vm539, %v528, %v536
    %v543 = vsel %vm539, %v530, %v538
    %v544 = vsel %vm539, %v516, %v524
    %v545 = vsel %vm539, %v518, %v526
    %v546 = vsel %vm539, %v520, %v528
    %v547 = vsel %vm539, %v522, %v530
    %v548 = vsel %vm539, %v508, %v516
    %v549 = vsel %vm539, %v510, %v518
    %v550 = vsel %vm539, %v512, %v520
    %v551 = vsel %vm539, %v514, %v522
    %v552 = vsel %vm539, %v532, %v508
    %v553 = vsel %vm539, %v534, %v510
    %v554 = vsel %vm539, %v536, %v512
    %v555 = vsel %vm539, %v538, %v514
    %556 = vrot.lane.b32.xlu0 %v122, 15
    %v557 = vpop.permute.xlu0 %556
    %558 = vrot.lane.b32.xlu0 %v126, 15
    %v559 = vpop.permute.xlu0 %558
    %560 = vrot.lane.b32.xlu0 %v130, 15
    %v561 = vpop.permute.xlu0 %560
    %562 = vrot.lane.b32.xlu0 %v134, 15
    %v563 = vpop.permute.xlu0 %562
    %564 = vrot.lane.b32.xlu0 %v123, 15
    %v565 = vpop.permute.xlu0 %564
    %566 = vrot.lane.b32.xlu0 %v127, 15
    %v567 = vpop.permute.xlu0 %566
    %568 = vrot.lane.b32.xlu0 %v131, 15
    %v569 = vpop.permute.xlu0 %568
    %570 = vrot.lane.b32.xlu0 %v135, 15
    %v571 = vpop.permute.xlu0 %570
    %572 = vrot.lane.b32.xlu0 %v124, 15
    %v573 = vpop.permute.xlu0 %572
    %574 = vrot.lane.b32.xlu0 %v128, 15
    %v575 = vpop.permute.xlu0 %574
    %576 = vrot.lane.b32.xlu0 %v132, 15
    %v577 = vpop.permute.xlu0 %576
    %578 = vrot.lane.b32.xlu0 %v136, 15
    %v579 = vpop.permute.xlu0 %578
    %580 = vrot.lane.b32.xlu0 %v125, 15
    %v581 = vpop.permute.xlu0 %580
    %582 = vrot.lane.b32.xlu0 %v129, 15
    %v583 = vpop.permute.xlu0 %582
    %584 = vrot.lane.b32.xlu0 %v133, 15
    %v585 = vpop.permute.xlu0 %584
    %586 = vrot.lane.b32.xlu0 %v137, 15
    %v587 = vpop.permute.xlu0 %586
    %v588 = vsel %vm539, %v573, %v581
    %v589 = vsel %vm539, %v575, %v583
    %v590 = vsel %vm539, %v577, %v585
    %v591 = vsel %vm539, %v579, %v587
    %v592 = vsel %vm539, %v565, %v573
    %v593 = vsel %vm539, %v567, %v575
    %v594 = vsel %vm539, %v569, %v577
    %v595 = vsel %vm539, %v571, %v579
    %v596 = vsel %vm539, %v557, %v565
    %v597 = vsel %vm539, %v559, %v567
    %v598 = vsel %vm539, %v561, %v569
    %v599 = vsel %vm539, %v563, %v571
    %v600 = vsel %vm539, %v581, %v557
    %v601 = vsel %vm539, %v583, %v559
    %v602 = vsel %vm539, %v585, %v561
    %v603 = vsel %vm539, %v587, %v563
    %s604 = scalar_lea.vmem [#allocation9], 2
    %v605 = vld [vmem:[%s604] ss:$8 sm:$0xf]
    %v607 = vlaneseq
    %v608 = vshrl.u32 %v607, 7
    %v609 = vsub.s32 0, %v608
    %v610 = vrot.slane %v605, %v609
    %v611 = vlaneseq
    %v612 = vshrl.u32 %v611, 7
    %v613 = vsub.s32 1, %v612
    %v614 = vrot.slane %v605, %v613
    %v615 = vlaneseq
    %v616 = vshrl.u32 %v615, 7
    %v617 = vsub.s32 2, %v616
    %v618 = vrot.slane %v605, %v617
    %v619 = vlaneseq
    %v620 = vshrl.u32 %v619, 7
    %v621 = vsub.s32 3, %v620
    %v622 = vrot.slane %v605, %v621
    %v627 = vmul.f32 %v552, %v610
    %v628 = vmul.f32 %v548, %v614
    %v629 = vmul.f32 %v544, %v618
    %v630 = vmul.f32 %v540, %v622
    %v631 = vmul.f32 %v553, %v610
    %v632 = vmul.f32 %v549, %v614
    %v633 = vmul.f32 %v545, %v618
    %v634 = vmul.f32 %v541, %v622
    %v635 = vmul.f32 %v554, %v610
    %v636 = vmul.f32 %v550, %v614
    %v637 = vmul.f32 %v546, %v618
    %v638 = vmul.f32 %v542, %v622
    %v639 = vmul.f32 %v555, %v610
    %v640 = vmul.f32 %v551, %v614
    %v641 = vmul.f32 %v547, %v618
    %v642 = vmul.f32 %v543, %v622
    %v643 = vpack.c.bf16 %v631, %v627
    %v644 = vpack.c.bf16 %v632, %v628
    %v645 = vpack.c.bf16 %v633, %v629
    %v646 = vpack.c.bf16 %v634, %v630
    %v647 = vpack.c.bf16 %v639, %v635
    %v648 = vpack.c.bf16 %v640, %v636
    %v649 = vpack.c.bf16 %v641, %v637
    %v650 = vpack.c.bf16 %v642, %v638
    %651 = vst [vmem:[#allocation2 + $0x80] sm:$0xff] %v643
    %652 = vst [vmem:[#allocation2 + $0x88] sm:$0xff] %v644
    %653 = vst [vmem:[#allocation2 + $0x90] sm:$0xff] %v645
    %654 = vst [vmem:[#allocation2 + $0x98] sm:$0xff] %v646
    %655 = vst [vmem:[#allocation2 + $0xa0] sm:$0xff] %v647
    %656 = vst [vmem:[#allocation2 + $0xa8] sm:$0xff] %v648
    %657 = vst [vmem:[#allocation2 + $0xb0] sm:$0xff] %v649
    %658 = vst [vmem:[#allocation2 + $0xb8] sm:$0xff] %v650
    %v659 = vmul.f32 %v600, %v610
    %v660 = vmul.f32 %v596, %v614
    %v661 = vmul.f32 %v592, %v618
    %v662 = vmul.f32 %v588, %v622
    %v663 = vmul.f32 %v601, %v610
    %v664 = vmul.f32 %v597, %v614
    %v665 = vmul.f32 %v593, %v618
    %v666 = vmul.f32 %v589, %v622
    %v667 = vmul.f32 %v602, %v610
    %v668 = vmul.f32 %v598, %v614
    %v669 = vmul.f32 %v594, %v618
    %v670 = vmul.f32 %v590, %v622
    %v671 = vmul.f32 %v603, %v610
    %v672 = vmul.f32 %v599, %v614
    %v673 = vmul.f32 %v595, %v618
    %v674 = vmul.f32 %v591, %v622
    %v675 = vpack.c.bf16 %v663, %v659
    %v676 = vpack.c.bf16 %v664, %v660
    %v677 = vpack.c.bf16 %v665, %v661
    %v678 = vpack.c.bf16 %v666, %v662
    %v679 = vpack.c.bf16 %v671, %v667
    %v680 = vpack.c.bf16 %v672, %v668
    %v681 = vpack.c.bf16 %v673, %v669
    %v682 = vpack.c.bf16 %v674, %v670
    %683 = vst [vmem:[#allocation2 + $0x2c0] sm:$0xff] %v675
    %684 = vst [vmem:[#allocation2 + $0x2c8] sm:$0xff] %v676
    %685 = vst [vmem:[#allocation2 + $0x2d0] sm:$0xff] %v677
    %686 = vst [vmem:[#allocation2 + $0x2d8] sm:$0xff] %v678
    %687 = vst [vmem:[#allocation2 + $0x2e0] sm:$0xff] %v679
    %688 = vst [vmem:[#allocation2 + $0x2e8] sm:$0xff] %v680
    %689 = vst [vmem:[#allocation2 + $0x2f0] sm:$0xff] %v681
    %690 = vst [vmem:[#allocation2 + $0x2f8] sm:$0xff] %v682
    %691 = vrot.lane.b32.xlu0 %v106, 1
    %v692 = vpop.permute.xlu0 %691
    %693 = vrot.lane.b32.xlu0 %v110, 1
    %v694 = vpop.permute.xlu0 %693
    %695 = vrot.lane.b32.xlu0 %v114, 1
    %v696 = vpop.permute.xlu0 %695
    %697 = vrot.lane.b32.xlu0 %v118, 1
    %v698 = vpop.permute.xlu0 %697
    %699 = vrot.lane.b32.xlu0 %v107, 1
    %v700 = vpop.permute.xlu0 %699
    %701 = vrot.lane.b32.xlu0 %v111, 1
    %v702 = vpop.permute.xlu0 %701
    %703 = vrot.lane.b32.xlu0 %v115, 1
    %v704 = vpop.permute.xlu0 %703
    %705 = vrot.lane.b32.xlu0 %v119, 1
    %v706 = vpop.permute.xlu0 %705
    %707 = vrot.lane.b32.xlu0 %v108, 1
    %v708 = vpop.permute.xlu0 %707
    %709 = vrot.lane.b32.xlu0 %v112, 1
    %v710 = vpop.permute.xlu0 %709
    %711 = vrot.lane.b32.xlu0 %v116, 1
    %v712 = vpop.permute.xlu0 %711
    %713 = vrot.lane.b32.xlu0 %v120, 1
    %v714 = vpop.permute.xlu0 %713
    %715 = vrot.lane.b32.xlu0 %v109, 1
    %v716 = vpop.permute.xlu0 %715
    %717 = vrot.lane.b32.xlu0 %v113, 1
    %v718 = vpop.permute.xlu0 %717
    %719 = vrot.lane.b32.xlu0 %v117, 1
    %v720 = vpop.permute.xlu0 %719
    %721 = vrot.lane.b32.xlu0 %v121, 1
    %v722 = vpop.permute.xlu0 %721
    %vm723 = vcmp.lt.s32.totalorder %v171, 1
    %v724 = vsel %vm723, %v708, %v716
    %v725 = vsel %vm723, %v710, %v718
    %v726 = vsel %vm723, %v712, %v720
    %v727 = vsel %vm723, %v714, %v722
    %v728 = vsel %vm723, %v700, %v708
    %v729 = vsel %vm723, %v702, %v710
    %v730 = vsel %vm723, %v704, %v712
    %v731 = vsel %vm723, %v706, %v714
    %v732 = vsel %vm723, %v692, %v700
    %v733 = vsel %vm723, %v694, %v702
    %v734 = vsel %vm723, %v696, %v704
    %v735 = vsel %vm723, %v698, %v706
    %v736 = vsel %vm723, %v716, %v692
    %v737 = vsel %vm723, %v718, %v694
    %v738 = vsel %vm723, %v720, %v696
    %v739 = vsel %vm723, %v722, %v698
    %740 = vrot.lane.b32.xlu0 %v122, 1
    %v741 = vpop.permute.xlu0 %740
    %742 = vrot.lane.b32.xlu0 %v126, 1
    %v743 = vpop.permute.xlu0 %742
    %744 = vrot.lane.b32.xlu0 %v130, 1
    %v745 = vpop.permute.xlu0 %744
    %746 = vrot.lane.b32.xlu0 %v134, 1
    %v747 = vpop.permute.xlu0 %746
    %748 = vrot.lane.b32.xlu0 %v123, 1
    %v749 = vpop.permute.xlu0 %748
    %750 = vrot.lane.b32.xlu0 %v127, 1
    %v751 = vpop.permute.xlu0 %750
    %752 = vrot.lane.b32.xlu0 %v131, 1
    %v753 = vpop.permute.xlu0 %752
    %754 = vrot.lane.b32.xlu0 %v135, 1
    %v755 = vpop.permute.xlu0 %754
    %756 = vrot.lane.b32.xlu0 %v124, 1
    %v757 = vpop.permute.xlu0 %756
    %758 = vrot.lane.b32.xlu0 %v128, 1
    %v759 = vpop.permute.xlu0 %758
    %760 = vrot.lane.b32.xlu0 %v132, 1
    %v761 = vpop.permute.xlu0 %760
    %762 = vrot.lane.b32.xlu0 %v136, 1
    %v763 = vpop.permute.xlu0 %762
    %764 = vrot.lane.b32.xlu0 %v125, 1
    %v765 = vpop.permute.xlu0 %764
    %766 = vrot.lane.b32.xlu0 %v129, 1
    %v767 = vpop.permute.xlu0 %766
    %768 = vrot.lane.b32.xlu0 %v133, 1
    %v769 = vpop.permute.xlu0 %768
    %770 = vrot.lane.b32.xlu0 %v137, 1
    %v771 = vpop.permute.xlu0 %770
    %v772 = vsel %vm723, %v757, %v765
    %v773 = vsel %vm723, %v759, %v767
    %v774 = vsel %vm723, %v761, %v769
    %v775 = vsel %vm723, %v763, %v771
    %v776 = vsel %vm723, %v749, %v757
    %v777 = vsel %vm723, %v751, %v759
    %v778 = vsel %vm723, %v753, %v761
    %v779 = vsel %vm723, %v755, %v763
    %v780 = vsel %vm723, %v741, %v749
    %v781 = vsel %vm723, %v743, %v751
    %v782 = vsel %vm723, %v745, %v753
    %v783 = vsel %vm723, %v747, %v755
    %v784 = vsel %vm723, %v765, %v741
    %v785 = vsel %vm723, %v767, %v743
    %v786 = vsel %vm723, %v769, %v745
    %v787 = vsel %vm723, %v771, %v747
    %s788 = scalar_lea.vmem [#allocation9], 3
    %v789 = vld [vmem:[%s788] ss:$8 sm:$0xf]
    %v791 = vlaneseq
    %v792 = vshrl.u32 %v791, 7
    %v793 = vsub.s32 0, %v792
    %v794 = vrot.slane %v789, %v793
    %v795 = vlaneseq
    %v796 = vshrl.u32 %v795, 7
    %v797 = vsub.s32 1, %v796
    %v798 = vrot.slane %v789, %v797
    %v799 = vlaneseq
    %v800 = vshrl.u32 %v799, 7
    %v801 = vsub.s32 2, %v800
    %v802 = vrot.slane %v789, %v801
    %v803 = vlaneseq
    %v804 = vshrl.u32 %v803, 7
    %v805 = vsub.s32 3, %v804
    %v806 = vrot.slane %v789, %v805
    %v811 = vmul.f32 %v736, %v794
    %v812 = vmul.f32 %v732, %v798
    %v813 = vmul.f32 %v728, %v802
    %v814 = vmul.f32 %v724, %v806
    %v815 = vmul.f32 %v737, %v794
    %v816 = vmul.f32 %v733, %v798
    %v817 = vmul.f32 %v729, %v802
    %v818 = vmul.f32 %v725, %v806
    %v819 = vmul.f32 %v738, %v794
    %v820 = vmul.f32 %v734, %v798
    %v821 = vmul.f32 %v730, %v802
    %v822 = vmul.f32 %v726, %v806
    %v823 = vmul.f32 %v739, %v794
    %v824 = vmul.f32 %v735, %v798
    %v825 = vmul.f32 %v731, %v802
    %v826 = vmul.f32 %v727, %v806
    %v827 = vpack.c.bf16 %v815, %v811
    %v828 = vpack.c.bf16 %v816, %v812
    %v829 = vpack.c.bf16 %v817, %v813
    %v830 = vpack.c.bf16 %v818, %v814
    %v831 = vpack.c.bf16 %v823, %v819
    %v832 = vpack.c.bf16 %v824, %v820
    %v833 = vpack.c.bf16 %v825, %v821
    %v834 = vpack.c.bf16 %v826, %v822
    %835 = vst [vmem:[#allocation2 + $0xc0] sm:$0xff] %v827
    %836 = vst [vmem:[#allocation2 + $0xc8] sm:$0xff] %v828
    %837 = vst [vmem:[#allocation2 + $0xd0] sm:$0xff] %v829
    %838 = vst [vmem:[#allocation2 + $0xd8] sm:$0xff] %v830
    %839 = vst [vmem:[#allocation2 + $0xe0] sm:$0xff] %v831
    %840 = vst [vmem:[#allocation2 + $0xe8] sm:$0xff] %v832
    %841 = vst [vmem:[#allocation2 + $0xf0] sm:$0xff] %v833
    %842 = vst [vmem:[#allocation2 + $0xf8] sm:$0xff] %v834
    %v843 = vmul.f32 %v784, %v794
    %v844 = vmul.f32 %v780, %v798
    %v845 = vmul.f32 %v776, %v802
    %v846 = vmul.f32 %v772, %v806
    %v847 = vmul.f32 %v785, %v794
    %v848 = vmul.f32 %v781, %v798
    %v849 = vmul.f32 %v777, %v802
    %v850 = vmul.f32 %v773, %v806
    %v851 = vmul.f32 %v786, %v794
    %v852 = vmul.f32 %v782, %v798
    %v853 = vmul.f32 %v778, %v802
    %v854 = vmul.f32 %v774, %v806
    %v855 = vmul.f32 %v787, %v794
    %v856 = vmul.f32 %v783, %v798
    %v857 = vmul.f32 %v779, %v802
    %v858 = vmul.f32 %v775, %v806
    %v859 = vpack.c.bf16 %v847, %v843
    %v860 = vpack.c.bf16 %v848, %v844
    %v861 = vpack.c.bf16 %v849, %v845
    %v862 = vpack.c.bf16 %v850, %v846
    %v863 = vpack.c.bf16 %v855, %v851
    %v864 = vpack.c.bf16 %v856, %v852
    %v865 = vpack.c.bf16 %v857, %v853
    %v866 = vpack.c.bf16 %v858, %v854
    %867 = vst [vmem:[#allocation2 + $0x300] sm:$0xff] %v859
    %868 = vst [vmem:[#allocation2 + $0x308] sm:$0xff] %v860
    %869 = vst [vmem:[#allocation2 + $0x310] sm:$0xff] %v861
    %870 = vst [vmem:[#allocation2 + $0x318] sm:$0xff] %v862
    %871 = vst [vmem:[#allocation2 + $0x320] sm:$0xff] %v863
    %872 = vst [vmem:[#allocation2 + $0x328] sm:$0xff] %v864
    %873 = vst [vmem:[#allocation2 + $0x330] sm:$0xff] %v865
    %874 = vst [vmem:[#allocation2 + $0x338] sm:$0xff] %v866
    %s875 = scalar_lea.vmem [#allocation9], 4
    %v876 = vld [vmem:[%s875] ss:$8 sm:$0xf]
    %v878 = vlaneseq
    %v879 = vshrl.u32 %v878, 7
    %v880 = vsub.s32 0, %v879
    %v881 = vrot.slane %v876, %v880
    %v882 = vlaneseq
    %v883 = vshrl.u32 %v882, 7
    %v884 = vsub.s32 1, %v883
    %v885 = vrot.slane %v876, %v884
    %v886 = vlaneseq
    %v887 = vshrl.u32 %v886, 7
    %v888 = vsub.s32 2, %v887
    %v889 = vrot.slane %v876, %v888
    %v890 = vlaneseq
    %v891 = vshrl.u32 %v890, 7
    %v892 = vsub.s32 3, %v891
    %v893 = vrot.slane %v876, %v892
    %v898 = vmul.f32 %v106, %v881
    %v899 = vmul.f32 %v107, %v885
    %v900 = vmul.f32 %v108, %v889
    %v901 = vmul.f32 %v109, %v893
    %v902 = vmul.f32 %v110, %v881
    %v903 = vmul.f32 %v111, %v885
    %v904 = vmul.f32 %v112, %v889
    %v905 = vmul.f32 %v113, %v893
    %v906 = vmul.f32 %v114, %v881
    %v907 = vmul.f32 %v115, %v885
    %v908 = vmul.f32 %v116, %v889
    %v909 = vmul.f32 %v117, %v893
    %v910 = vmul.f32 %v118, %v881
    %v911 = vmul.f32 %v119, %v885
    %v912 = vmul.f32 %v120, %v889
    %v913 = vmul.f32 %v121, %v893
    %v914 = vpack.c.bf16 %v902, %v898
    %v915 = vpack.c.bf16 %v903, %v899
    %v916 = vpack.c.bf16 %v904, %v900
    %v917 = vpack.c.bf16 %v905, %v901
    %v918 = vpack.c.bf16 %v910, %v906
    %v919 = vpack.c.bf16 %v911, %v907
    %v920 = vpack.c.bf16 %v912, %v908
    %v921 = vpack.c.bf16 %v913, %v909
    %922 = vst [vmem:[#allocation2 + $0x100] sm:$0xff] %v914
    %923 = vst [vmem:[#allocation2 + $0x108] sm:$0xff] %v915
    %924 = vst [vmem:[#allocation2 + $0x110] sm:$0xff] %v916
    %925 = vst [vmem:[#allocation2 + $0x118] sm:$0xff] %v917
    %926 = vst [vmem:[#allocation2 + $0x120] sm:$0xff] %v918
    %927 = vst [vmem:[#allocation2 + $0x128] sm:$0xff] %v919
    %928 = vst [vmem:[#allocation2 + $0x130] sm:$0xff] %v920
    %929 = vst [vmem:[#allocation2 + $0x138] sm:$0xff] %v921
    %v930 = vmul.f32 %v122, %v881
    %v931 = vmul.f32 %v123, %v885
    %v932 = vmul.f32 %v124, %v889
    %v933 = vmul.f32 %v125, %v893
    %v934 = vmul.f32 %v126, %v881
    %v935 = vmul.f32 %v127, %v885
    %v936 = vmul.f32 %v128, %v889
    %v937 = vmul.f32 %v129, %v893
    %v938 = vmul.f32 %v130, %v881
    %v939 = vmul.f32 %v131, %v885
    %v940 = vmul.f32 %v132, %v889
    %v941 = vmul.f32 %v133, %v893
    %v942 = vmul.f32 %v134, %v881
    %v943 = vmul.f32 %v135, %v885
    %v944 = vmul.f32 %v136, %v889
    %v945 = vmul.f32 %v137, %v893
    %v946 = vpack.c.bf16 %v934, %v930
    %v947 = vpack.c.bf16 %v935, %v931
    %v948 = vpack.c.bf16 %v936, %v932
    %v949 = vpack.c.bf16 %v937, %v933
    %v950 = vpack.c.bf16 %v942, %v938
    %v951 = vpack.c.bf16 %v943, %v939
    %v952 = vpack.c.bf16 %v944, %v940
    %v953 = vpack.c.bf16 %v945, %v941
    %954 = vst [vmem:[#allocation2 + $0x340] sm:$0xff] %v946
    %955 = vst [vmem:[#allocation2 + $0x348] sm:$0xff] %v947
    %956 = vst [vmem:[#allocation2 + $0x350] sm:$0xff] %v948
    %957 = vst [vmem:[#allocation2 + $0x358] sm:$0xff] %v949
    %958 = vst [vmem:[#allocation2 + $0x360] sm:$0xff] %v950
    %959 = vst [vmem:[#allocation2 + $0x368] sm:$0xff] %v951
    %960 = vst [vmem:[#allocation2 + $0x370] sm:$0xff] %v952
    %961 = vst [vmem:[#allocation2 + $0x378] sm:$0xff] %v953
    %962 = vrot.lane.b32.xlu0 %v106, 127
    %v963 = vpop.permute.xlu0 %962
    %964 = vrot.lane.b32.xlu0 %v110, 127
    %v965 = vpop.permute.xlu0 %964
    %966 = vrot.lane.b32.xlu0 %v114, 127
    %v967 = vpop.permute.xlu0 %966
    %968 = vrot.lane.b32.xlu0 %v118, 127
    %v969 = vpop.permute.xlu0 %968
    %970 = vrot.lane.b32.xlu0 %v107, 127
    %v971 = vpop.permute.xlu0 %970
    %972 = vrot.lane.b32.xlu0 %v111, 127
    %v973 = vpop.permute.xlu0 %972
    %974 = vrot.lane.b32.xlu0 %v115, 127
    %v975 = vpop.permute.xlu0 %974
    %976 = vrot.lane.b32.xlu0 %v119, 127
    %v977 = vpop.permute.xlu0 %976
    %978 = vrot.lane.b32.xlu0 %v108, 127
    %v979 = vpop.permute.xlu0 %978
    %980 = vrot.lane.b32.xlu0 %v112, 127
    %v981 = vpop.permute.xlu0 %980
    %982 = vrot.lane.b32.xlu0 %v116, 127
    %v983 = vpop.permute.xlu0 %982
    %984 = vrot.lane.b32.xlu0 %v120, 127
    %v985 = vpop.permute.xlu0 %984
    %986 = vrot.lane.b32.xlu0 %v109, 127
    %v987 = vpop.permute.xlu0 %986
    %988 = vrot.lane.b32.xlu0 %v113, 127
    %v989 = vpop.permute.xlu0 %988
    %990 = vrot.lane.b32.xlu0 %v117, 127
    %v991 = vpop.permute.xlu0 %990
    %992 = vrot.lane.b32.xlu0 %v121, 127
    %v993 = vpop.permute.xlu0 %992
    %vm994 = vcmp.lt.s32.totalorder %v171, 127
    %v995 = vsel %vm994, %v979, %v987
    %v996 = vsel %vm994, %v981, %v989
    %v997 = vsel %vm994, %v983, %v991
    %v998 = vsel %vm994, %v985, %v993
    %v999 = vsel %vm994, %v971, %v979
    %v1000 = vsel %vm994, %v973, %v981
    %v1001 = vsel %vm994, %v975, %v983
    %v1002 = vsel %vm994, %v977, %v985
    %v1003 = vsel %vm994, %v963, %v971
    %v1004 = vsel %vm994, %v965, %v973
    %v1005 = vsel %vm994, %v967, %v975
    %v1006 = vsel %vm994, %v969, %v977
    %v1007 = vsel %vm994, %v987, %v963
    %v1008 = vsel %vm994, %v989, %v965
    %v1009 = vsel %vm994, %v991, %v967
    %v1010 = vsel %vm994, %v993, %v969
    %1011 = vrot.lane.b32.xlu0 %v122, 127
    %v1012 = vpop.permute.xlu0 %1011
    %1013 = vrot.lane.b32.xlu0 %v126, 127
    %v1014 = vpop.permute.xlu0 %1013
    %1015 = vrot.lane.b32.xlu0 %v130, 127
    %v1016 = vpop.permute.xlu0 %1015
    %1017 = vrot.lane.b32.xlu0 %v134, 127
    %v1018 = vpop.permute.xlu0 %1017
    %1019 = vrot.lane.b32.xlu0 %v123, 127
    %v1020 = vpop.permute.xlu0 %1019
    %1021 = vrot.lane.b32.xlu0 %v127, 127
    %v1022 = vpop.permute.xlu0 %1021
    %1023 = vrot.lane.b32.xlu0 %v131, 127
    %v1024 = vpop.permute.xlu0 %1023
    %1025 = vrot.lane.b32.xlu0 %v135, 127
    %v1026 = vpop.permute.xlu0 %1025
    %1027 = vrot.lane.b32.xlu0 %v124, 127
    %v1028 = vpop.permute.xlu0 %1027
    %1029 = vrot.lane.b32.xlu0 %v128, 127
    %v1030 = vpop.permute.xlu0 %1029
    %1031 = vrot.lane.b32.xlu0 %v132, 127
    %v1032 = vpop.permute.xlu0 %1031
    %1033 = vrot.lane.b32.xlu0 %v136, 127
    %v1034 = vpop.permute.xlu0 %1033
    %1035 = vrot.lane.b32.xlu0 %v125, 127
    %v1036 = vpop.permute.xlu0 %1035
    %1037 = vrot.lane.b32.xlu0 %v129, 127
    %v1038 = vpop.permute.xlu0 %1037
    %1039 = vrot.lane.b32.xlu0 %v133, 127
    %v1040 = vpop.permute.xlu0 %1039
    %1041 = vrot.lane.b32.xlu0 %v137, 127
    %v1042 = vpop.permute.xlu0 %1041
    %v1043 = vsel %vm994, %v1028, %v1036
    %v1044 = vsel %vm994, %v1030, %v1038
    %v1045 = vsel %vm994, %v1032, %v1040
    %v1046 = vsel %vm994, %v1034, %v1042
    %v1047 = vsel %vm994, %v1020, %v1028
    %v1048 = vsel %vm994, %v1022, %v1030
    %v1049 = vsel %vm994, %v1024, %v1032
    %v1050 = vsel %vm994, %v1026, %v1034
    %v1051 = vsel %vm994, %v1012, %v1020
    %v1052 = vsel %vm994, %v1014, %v1022
    %v1053 = vsel %vm994, %v1016, %v1024
    %v1054 = vsel %vm994, %v1018, %v1026
    %v1055 = vsel %vm994, %v1036, %v1012
    %v1056 = vsel %vm994, %v1038, %v1014
    %v1057 = vsel %vm994, %v1040, %v1016
    %v1058 = vsel %vm994, %v1042, %v1018
    %s1059 = scalar_lea.vmem [#allocation9], 5
    %v1060 = vld [vmem:[%s1059] ss:$8 sm:$0xf]
    %v1062 = vlaneseq
    %v1063 = vshrl.u32 %v1062, 7
    %v1064 = vsub.s32 0, %v1063
    %v1065 = vrot.slane %v1060, %v1064
    %v1066 = vlaneseq
    %v1067 = vshrl.u32 %v1066, 7
    %v1068 = vsub.s32 1, %v1067
    %v1069 = vrot.slane %v1060, %v1068
    %v1070 = vlaneseq
    %v1071 = vshrl.u32 %v1070, 7
    %v1072 = vsub.s32 2, %v1071
    %v1073 = vrot.slane %v1060, %v1072
    %v1074 = vlaneseq
    %v1075 = vshrl.u32 %v1074, 7
    %v1076 = vsub.s32 3, %v1075
    %v1077 = vrot.slane %v1060, %v1076
    %v1082 = vmul.f32 %v1003, %v1065
    %v1083 = vmul.f32 %v999, %v1069
    %v1084 = vmul.f32 %v995, %v1073
    %v1085 = vmul.f32 %v1007, %v1077
    %v1086 = vmul.f32 %v1004, %v1065
    %v1087 = vmul.f32 %v1000, %v1069
    %v1088 = vmul.f32 %v996, %v1073
    %v1089 = vmul.f32 %v1008, %v1077
    %v1090 = vmul.f32 %v1005, %v1065
    %v1091 = vmul.f32 %v1001, %v1069
    %v1092 = vmul.f32 %v997, %v1073
    %v1093 = vmul.f32 %v1009, %v1077
    %v1094 = vmul.f32 %v1006, %v1065
    %v1095 = vmul.f32 %v1002, %v1069
    %v1096 = vmul.f32 %v998, %v1073
    %v1097 = vmul.f32 %v1010, %v1077
    %v1098 = vpack.c.bf16 %v1086, %v1082
    %v1099 = vpack.c.bf16 %v1087, %v1083
    %v1100 = vpack.c.bf16 %v1088, %v1084
    %v1101 = vpack.c.bf16 %v1089, %v1085
    %v1102 = vpack.c.bf16 %v1094, %v1090
    %v1103 = vpack.c.bf16 %v1095, %v1091
    %v1104 = vpack.c.bf16 %v1096, %v1092
    %v1105 = vpack.c.bf16 %v1097, %v1093
    %1106 = vst [vmem:[#allocation2 + $0x140] sm:$0xff] %v1098
    %1107 = vst [vmem:[#allocation2 + $0x148] sm:$0xff] %v1099
    %1108 = vst [vmem:[#allocation2 + $0x150] sm:$0xff] %v1100
    %1109 = vst [vmem:[#allocation2 + $0x158] sm:$0xff] %v1101
    %1110 = vst [vmem:[#allocation2 + $0x160] sm:$0xff] %v1102
    %1111 = vst [vmem:[#allocation2 + $0x168] sm:$0xff] %v1103
    %1112 = vst [vmem:[#allocation2 + $0x170] sm:$0xff] %v1104
    %1113 = vst [vmem:[#allocation2 + $0x178] sm:$0xff] %v1105
    %v1114 = vmul.f32 %v1051, %v1065
    %v1115 = vmul.f32 %v1047, %v1069
    %v1116 = vmul.f32 %v1043, %v1073
    %v1117 = vmul.f32 %v1055, %v1077
    %v1118 = vmul.f32 %v1052, %v1065
    %v1119 = vmul.f32 %v1048, %v1069
    %v1120 = vmul.f32 %v1044, %v1073
    %v1121 = vmul.f32 %v1056, %v1077
    %v1122 = vmul.f32 %v1053, %v1065
    %v1123 = vmul.f32 %v1049, %v1069
    %v1124 = vmul.f32 %v1045, %v1073
    %v1125 = vmul.f32 %v1057, %v1077
    %v1126 = vmul.f32 %v1054, %v1065
    %v1127 = vmul.f32 %v1050, %v1069
    %v1128 = vmul.f32 %v1046, %v1073
    %v1129 = vmul.f32 %v1058, %v1077
    %v1130 = vpack.c.bf16 %v1118, %v1114
    %v1131 = vpack.c.bf16 %v1119, %v1115
    %v1132 = vpack.c.bf16 %v1120, %v1116
    %v1133 = vpack.c.bf16 %v1121, %v1117
    %v1134 = vpack.c.bf16 %v1126, %v1122
    %v1135 = vpack.c.bf16 %v1127, %v1123
    %v1136 = vpack.c.bf16 %v1128, %v1124
    %v1137 = vpack.c.bf16 %v1129, %v1125
    %1138 = vst [vmem:[#allocation2 + $0x380] sm:$0xff] %v1130
    %1139 = vst [vmem:[#allocation2 + $0x388] sm:$0xff] %v1131
    %1140 = vst [vmem:[#allocation2 + $0x390] sm:$0xff] %v1132
    %1141 = vst [vmem:[#allocation2 + $0x398] sm:$0xff] %v1133
    %1142 = vst [vmem:[#allocation2 + $0x3a0] sm:$0xff] %v1134
    %1143 = vst [vmem:[#allocation2 + $0x3a8] sm:$0xff] %v1135
    %1144 = vst [vmem:[#allocation2 + $0x3b0] sm:$0xff] %v1136
    %1145 = vst [vmem:[#allocation2 + $0x3b8] sm:$0xff] %v1137
    %1146 = vrot.lane.b32.xlu0 %v106, 113
    %v1147 = vpop.permute.xlu0 %1146
    %1148 = vrot.lane.b32.xlu0 %v110, 113
    %v1149 = vpop.permute.xlu0 %1148
    %1150 = vrot.lane.b32.xlu0 %v114, 113
    %v1151 = vpop.permute.xlu0 %1150
    %1152 = vrot.lane.b32.xlu0 %v118, 113
    %v1153 = vpop.permute.xlu0 %1152
    %1154 = vrot.lane.b32.xlu0 %v107, 113
    %v1155 = vpop.permute.xlu0 %1154
    %1156 = vrot.lane.b32.xlu0 %v111, 113
    %v1157 = vpop.permute.xlu0 %1156
    %1158 = vrot.lane.b32.xlu0 %v115, 113
    %v1159 = vpop.permute.xlu0 %1158
    %1160 = vrot.lane.b32.xlu0 %v119, 113
    %v1161 = vpop.permute.xlu0 %1160
    %1162 = vrot.lane.b32.xlu0 %v108, 113
    %v1163 = vpop.permute.xlu0 %1162
    %1164 = vrot.lane.b32.xlu0 %v112, 113
    %v1165 = vpop.permute.xlu0 %1164
    %1166 = vrot.lane.b32.xlu0 %v116, 113
    %v1167 = vpop.permute.xlu0 %1166
    %1168 = vrot.lane.b32.xlu0 %v120, 113
    %v1169 = vpop.permute.xlu0 %1168
    %1170 = vrot.lane.b32.xlu0 %v109, 113
    %v1171 = vpop.permute.xlu0 %1170
    %1172 = vrot.lane.b32.xlu0 %v113, 113
    %v1173 = vpop.permute.xlu0 %1172
    %1174 = vrot.lane.b32.xlu0 %v117, 113
    %v1175 = vpop.permute.xlu0 %1174
    %1176 = vrot.lane.b32.xlu0 %v121, 113
    %v1177 = vpop.permute.xlu0 %1176
    %vm1178 = vcmp.lt.s32.totalorder %v171, 113
    %v1179 = vsel %vm1178, %v1163, %v1171
    %v1180 = vsel %vm1178, %v1165, %v1173
    %v1181 = vsel %vm1178, %v1167, %v1175
    %v1182 = vsel %vm1178, %v1169, %v1177
    %v1183 = vsel %vm1178, %v1155, %v1163
    %v1184 = vsel %vm1178, %v1157, %v1165
    %v1185 = vsel %vm1178, %v1159, %v1167
    %v1186 = vsel %vm1178, %v1161, %v1169
    %v1187 = vsel %vm1178, %v1147, %v1155
    %v1188 = vsel %vm1178, %v1149, %v1157
    %v1189 = vsel %vm1178, %v1151, %v1159
    %v1190 = vsel %vm1178, %v1153, %v1161
    %v1191 = vsel %vm1178, %v1171, %v1147
    %v1192 = vsel %vm1178, %v1173, %v1149
    %v1193 = vsel %vm1178, %v1175, %v1151
    %v1194 = vsel %vm1178, %v1177, %v1153
    %1195 = vrot.lane.b32.xlu0 %v122, 113
    %v1196 = vpop.permute.xlu0 %1195
    %1197 = vrot.lane.b32.xlu0 %v126, 113
    %v1198 = vpop.permute.xlu0 %1197
    %1199 = vrot.lane.b32.xlu0 %v130, 113
    %v1200 = vpop.permute.xlu0 %1199
    %1201 = vrot.lane.b32.xlu0 %v134, 113
    %v1202 = vpop.permute.xlu0 %1201
    %1203 = vrot.lane.b32.xlu0 %v123, 113
    %v1204 = vpop.permute.xlu0 %1203
    %1205 = vrot.lane.b32.xlu0 %v127, 113
    %v1206 = vpop.permute.xlu0 %1205
    %1207 = vrot.lane.b32.xlu0 %v131, 113
    %v1208 = vpop.permute.xlu0 %1207
    %1209 = vrot.lane.b32.xlu0 %v135, 113
    %v1210 = vpop.permute.xlu0 %1209
    %1211 = vrot.lane.b32.xlu0 %v124, 113
    %v1212 = vpop.permute.xlu0 %1211
    %1213 = vrot.lane.b32.xlu0 %v128, 113
    %v1214 = vpop.permute.xlu0 %1213
    %1215 = vrot.lane.b32.xlu0 %v132, 113
    %v1216 = vpop.permute.xlu0 %1215
    %1217 = vrot.lane.b32.xlu0 %v136, 113
    %v1218 = vpop.permute.xlu0 %1217
    %1219 = vrot.lane.b32.xlu0 %v125, 113
    %v1220 = vpop.permute.xlu0 %1219
    %1221 = vrot.lane.b32.xlu0 %v129, 113
    %v1222 = vpop.permute.xlu0 %1221
    %1223 = vrot.lane.b32.xlu0 %v133, 113
    %v1224 = vpop.permute.xlu0 %1223
    %1225 = vrot.lane.b32.xlu0 %v137, 113
    %v1226 = vpop.permute.xlu0 %1225
    %v1227 = vsel %vm1178, %v1212, %v1220
    %v1228 = vsel %vm1178, %v1214, %v1222
    %v1229 = vsel %vm1178, %v1216, %v1224
    %v1230 = vsel %vm1178, %v1218, %v1226
    %v1231 = vsel %vm1178, %v1204, %v1212
    %v1232 = vsel %vm1178, %v1206, %v1214
    %v1233 = vsel %vm1178, %v1208, %v1216
    %v1234 = vsel %vm1178, %v1210, %v1218
    %v1235 = vsel %vm1178, %v1196, %v1204
    %v1236 = vsel %vm1178, %v1198, %v1206
    %v1237 = vsel %vm1178, %v1200, %v1208
    %v1238 = vsel %vm1178, %v1202, %v1210
    %v1239 = vsel %vm1178, %v1220, %v1196
    %v1240 = vsel %vm1178, %v1222, %v1198
    %v1241 = vsel %vm1178, %v1224, %v1200
    %v1242 = vsel %vm1178, %v1226, %v1202
    %s1243 = scalar_lea.vmem [#allocation9], 6
    %v1244 = vld [vmem:[%s1243] ss:$8 sm:$0xf]
    %v1246 = vlaneseq
    %v1247 = vshrl.u32 %v1246, 7
    %v1248 = vsub.s32 0, %v1247
    %v1249 = vrot.slane %v1244, %v1248
    %v1250 = vlaneseq
    %v1251 = vshrl.u32 %v1250, 7
    %v1252 = vsub.s32 1, %v1251
    %v1253 = vrot.slane %v1244, %v1252
    %v1254 = vlaneseq
    %v1255 = vshrl.u32 %v1254, 7
    %v1256 = vsub.s32 2, %v1255
    %v1257 = vrot.slane %v1244, %v1256
    %v1258 = vlaneseq
    %v1259 = vshrl.u32 %v1258, 7
    %v1260 = vsub.s32 3, %v1259
    %v1261 = vrot.slane %v1244, %v1260
    %v1266 = vmul.f32 %v1187, %v1249
    %v1267 = vmul.f32 %v1183, %v1253
    %v1268 = vmul.f32 %v1179, %v1257
    %v1269 = vmul.f32 %v1191, %v1261
    %v1270 = vmul.f32 %v1188, %v1249
    %v1271 = vmul.f32 %v1184, %v1253
    %v1272 = vmul.f32 %v1180, %v1257
    %v1273 = vmul.f32 %v1192, %v1261
    %v1274 = vmul.f32 %v1189, %v1249
    %v1275 = vmul.f32 %v1185, %v1253
    %v1276 = vmul.f32 %v1181, %v1257
    %v1277 = vmul.f32 %v1193, %v1261
    %v1278 = vmul.f32 %v1190, %v1249
    %v1279 = vmul.f32 %v1186, %v1253
    %v1280 = vmul.f32 %v1182, %v1257
    %v1281 = vmul.f32 %v1194, %v1261
    %v1282 = vpack.c.bf16 %v1270, %v1266
    %v1283 = vpack.c.bf16 %v1271, %v1267
    %v1284 = vpack.c.bf16 %v1272, %v1268
    %v1285 = vpack.c.bf16 %v1273, %v1269
    %v1286 = vpack.c.bf16 %v1278, %v1274
    %v1287 = vpack.c.bf16 %v1279, %v1275
    %v1288 = vpack.c.bf16 %v1280, %v1276
    %v1289 = vpack.c.bf16 %v1281, %v1277
    %1290 = vst [vmem:[#allocation2 + $0x180] sm:$0xff] %v1282
    %1291 = vst [vmem:[#allocation2 + $0x188] sm:$0xff] %v1283
    %1292 = vst [vmem:[#allocation2 + $0x190] sm:$0xff] %v1284
    %1293 = vst [vmem:[#allocation2 + $0x198] sm:$0xff] %v1285
    %1294 = vst [vmem:[#allocation2 + $0x1a0] sm:$0xff] %v1286
    %1295 = vst [vmem:[#allocation2 + $0x1a8] sm:$0xff] %v1287
    %1296 = vst [vmem:[#allocation2 + $0x1b0] sm:$0xff] %v1288
    %1297 = vst [vmem:[#allocation2 + $0x1b8] sm:$0xff] %v1289
    %v1298 = vmul.f32 %v1235, %v1249
    %v1299 = vmul.f32 %v1231, %v1253
    %v1300 = vmul.f32 %v1227, %v1257
    %v1301 = vmul.f32 %v1239, %v1261
    %v1302 = vmul.f32 %v1236, %v1249
    %v1303 = vmul.f32 %v1232, %v1253
    %v1304 = vmul.f32 %v1228, %v1257
    %v1305 = vmul.f32 %v1240, %v1261
    %v1306 = vmul.f32 %v1237, %v1249
    %v1307 = vmul.f32 %v1233, %v1253
    %v1308 = vmul.f32 %v1229, %v1257
    %v1309 = vmul.f32 %v1241, %v1261
    %v1310 = vmul.f32 %v1238, %v1249
    %v1311 = vmul.f32 %v1234, %v1253
    %v1312 = vmul.f32 %v1230, %v1257
    %v1313 = vmul.f32 %v1242, %v1261
    %v1314 = vpack.c.bf16 %v1302, %v1298
    %v1315 = vpack.c.bf16 %v1303, %v1299
    %v1316 = vpack.c.bf16 %v1304, %v1300
    %v1317 = vpack.c.bf16 %v1305, %v1301
    %v1318 = vpack.c.bf16 %v1310, %v1306
    %v1319 = vpack.c.bf16 %v1311, %v1307
    %v1320 = vpack.c.bf16 %v1312, %v1308
    %v1321 = vpack.c.bf16 %v1313, %v1309
    %1322 = vst [vmem:[#allocation2 + $0x3c0] sm:$0xff] %v1314
    %1323 = vst [vmem:[#allocation2 + $0x3c8] sm:$0xff] %v1315
    %1324 = vst [vmem:[#allocation2 + $0x3d0] sm:$0xff] %v1316
    %1325 = vst [vmem:[#allocation2 + $0x3d8] sm:$0xff] %v1317
    %1326 = vst [vmem:[#allocation2 + $0x3e0] sm:$0xff] %v1318
    %1327 = vst [vmem:[#allocation2 + $0x3e8] sm:$0xff] %v1319
    %1328 = vst [vmem:[#allocation2 + $0x3f0] sm:$0xff] %v1320
    %1329 = vst [vmem:[#allocation2 + $0x3f8] sm:$0xff] %v1321
    %1330 = vrot.lane.b32.xlu0 %v106, 112
    %v1331 = vpop.permute.xlu0 %1330
    %1332 = vrot.lane.b32.xlu0 %v110, 112
    %v1333 = vpop.permute.xlu0 %1332
    %1334 = vrot.lane.b32.xlu0 %v114, 112
    %v1335 = vpop.permute.xlu0 %1334
    %1336 = vrot.lane.b32.xlu0 %v118, 112
    %v1337 = vpop.permute.xlu0 %1336
    %1338 = vrot.lane.b32.xlu0 %v107, 112
    %v1339 = vpop.permute.xlu0 %1338
    %1340 = vrot.lane.b32.xlu0 %v111, 112
    %v1341 = vpop.permute.xlu0 %1340
    %1342 = vrot.lane.b32.xlu0 %v115, 112
    %v1343 = vpop.permute.xlu0 %1342
    %1344 = vrot.lane.b32.xlu0 %v119, 112
    %v1345 = vpop.permute.xlu0 %1344
    %1346 = vrot.lane.b32.xlu0 %v108, 112
    %v1347 = vpop.permute.xlu0 %1346
    %1348 = vrot.lane.b32.xlu0 %v112, 112
    %v1349 = vpop.permute.xlu0 %1348
    %1350 = vrot.lane.b32.xlu0 %v116, 112
    %v1351 = vpop.permute.xlu0 %1350
    %1352 = vrot.lane.b32.xlu0 %v120, 112
    %v1353 = vpop.permute.xlu0 %1352
    %1354 = vrot.lane.b32.xlu0 %v109, 112
    %v1355 = vpop.permute.xlu0 %1354
    %1356 = vrot.lane.b32.xlu0 %v113, 112
    %v1357 = vpop.permute.xlu0 %1356
    %1358 = vrot.lane.b32.xlu0 %v117, 112
    %v1359 = vpop.permute.xlu0 %1358
    %1360 = vrot.lane.b32.xlu0 %v121, 112
    %v1361 = vpop.permute.xlu0 %1360
    %vm1362 = vcmp.lt.s32.totalorder %v171, 112
    %v1363 = vsel %vm1362, %v1347, %v1355
    %v1364 = vsel %vm1362, %v1349, %v1357
    %v1365 = vsel %vm1362, %v1351, %v1359
    %v1366 = vsel %vm1362, %v1353, %v1361
    %v1367 = vsel %vm1362, %v1339, %v1347
    %v1368 = vsel %vm1362, %v1341, %v1349
    %v1369 = vsel %vm1362, %v1343, %v1351
    %v1370 = vsel %vm1362, %v1345, %v1353
    %v1371 = vsel %vm1362, %v1331, %v1339
    %v1372 = vsel %vm1362, %v1333, %v1341
    %v1373 = vsel %vm1362, %v1335, %v1343
    %v1374 = vsel %vm1362, %v1337, %v1345
    %v1375 = vsel %vm1362, %v1355, %v1331
    %v1376 = vsel %vm1362, %v1357, %v1333
    %v1377 = vsel %vm1362, %v1359, %v1335
    %v1378 = vsel %vm1362, %v1361, %v1337
    %1379 = vrot.lane.b32.xlu0 %v122, 112
    %v1380 = vpop.permute.xlu0 %1379
    %1381 = vrot.lane.b32.xlu0 %v126, 112
    %v1382 = vpop.permute.xlu0 %1381
    %1383 = vrot.lane.b32.xlu0 %v130, 112
    %v1384 = vpop.permute.xlu0 %1383
    %1385 = vrot.lane.b32.xlu0 %v134, 112
    %v1386 = vpop.permute.xlu0 %1385
    %1387 = vrot.lane.b32.xlu0 %v123, 112
    %v1388 = vpop.permute.xlu0 %1387
    %1389 = vrot.lane.b32.xlu0 %v127, 112
    %v1390 = vpop.permute.xlu0 %1389
    %1391 = vrot.lane.b32.xlu0 %v131, 112
    %v1392 = vpop.permute.xlu0 %1391
    %1393 = vrot.lane.b32.xlu0 %v135, 112
    %v1394 = vpop.permute.xlu0 %1393
    %1395 = vrot.lane.b32.xlu0 %v124, 112
    %v1396 = vpop.permute.xlu0 %1395
    %1397 = vrot.lane.b32.xlu0 %v128, 112
    %v1398 = vpop.permute.xlu0 %1397
    %1399 = vrot.lane.b32.xlu0 %v132, 112
    %v1400 = vpop.permute.xlu0 %1399
    %1401 = vrot.lane.b32.xlu0 %v136, 112
    %v1402 = vpop.permute.xlu0 %1401
    %1403 = vrot.lane.b32.xlu0 %v125, 112
    %v1404 = vpop.permute.xlu0 %1403
    %1405 = vrot.lane.b32.xlu0 %v129, 112
    %v1406 = vpop.permute.xlu0 %1405
    %1407 = vrot.lane.b32.xlu0 %v133, 112
    %v1408 = vpop.permute.xlu0 %1407
    %1409 = vrot.lane.b32.xlu0 %v137, 112
    %v1410 = vpop.permute.xlu0 %1409
    %v1411 = vsel %vm1362, %v1396, %v1404
    %v1412 = vsel %vm1362, %v1398, %v1406
    %v1413 = vsel %vm1362, %v1400, %v1408
    %v1414 = vsel %vm1362, %v1402, %v1410
    %v1415 = vsel %vm1362, %v1388, %v1396
    %v1416 = vsel %vm1362, %v1390, %v1398
    %v1417 = vsel %vm1362, %v1392, %v1400
    %v1418 = vsel %vm1362, %v1394, %v1402
    %v1419 = vsel %vm1362, %v1380, %v1388
    %v1420 = vsel %vm1362, %v1382, %v1390
    %v1421 = vsel %vm1362, %v1384, %v1392
    %v1422 = vsel %vm1362, %v1386, %v1394
    %v1423 = vsel %vm1362, %v1404, %v1380
    %v1424 = vsel %vm1362, %v1406, %v1382
    %v1425 = vsel %vm1362, %v1408, %v1384
    %v1426 = vsel %vm1362, %v1410, %v1386
    %s1427 = scalar_lea.vmem [#allocation9], 7
    %v1428 = vld [vmem:[%s1427] ss:$8 sm:$0xf]
    %v1430 = vlaneseq
    %v1431 = vshrl.u32 %v1430, 7
    %v1432 = vsub.s32 0, %v1431
    %v1433 = vrot.slane %v1428, %v1432
    %v1434 = vlaneseq
    %v1435 = vshrl.u32 %v1434, 7
    %v1436 = vsub.s32 1, %v1435
    %v1437 = vrot.slane %v1428, %v1436
    %v1438 = vlaneseq
    %v1439 = vshrl.u32 %v1438, 7
    %v1440 = vsub.s32 2, %v1439
    %v1441 = vrot.slane %v1428, %v1440
    %v1442 = vlaneseq
    %v1443 = vshrl.u32 %v1442, 7
    %v1444 = vsub.s32 3, %v1443
    %v1445 = vrot.slane %v1428, %v1444
    %v1450 = vmul.f32 %v1371, %v1433
    %v1451 = vmul.f32 %v1367, %v1437
    %v1452 = vmul.f32 %v1363, %v1441
    %v1453 = vmul.f32 %v1375, %v1445
    %v1454 = vmul.f32 %v1372, %v1433
    %v1455 = vmul.f32 %v1368, %v1437
    %v1456 = vmul.f32 %v1364, %v1441
    %v1457 = vmul.f32 %v1376, %v1445
    %v1458 = vmul.f32 %v1373, %v1433
    %v1459 = vmul.f32 %v1369, %v1437
    %v1460 = vmul.f32 %v1365, %v1441
    %v1461 = vmul.f32 %v1377, %v1445
    %v1462 = vmul.f32 %v1374, %v1433
    %v1463 = vmul.f32 %v1370, %v1437
    %v1464 = vmul.f32 %v1366, %v1441
    %v1465 = vmul.f32 %v1378, %v1445
    %v1466 = vpack.c.bf16 %v1454, %v1450
    %v1467 = vpack.c.bf16 %v1455, %v1451
    %v1468 = vpack.c.bf16 %v1456, %v1452
    %v1469 = vpack.c.bf16 %v1457, %v1453
    %v1470 = vpack.c.bf16 %v1462, %v1458
    %v1471 = vpack.c.bf16 %v1463, %v1459
    %v1472 = vpack.c.bf16 %v1464, %v1460
    %v1473 = vpack.c.bf16 %v1465, %v1461
    %1474 = vst [vmem:[#allocation2 + $0x1c0] sm:$0xff] %v1466
    %1475 = vst [vmem:[#allocation2 + $0x1c8] sm:$0xff] %v1467
    %1476 = vst [vmem:[#allocation2 + $0x1d0] sm:$0xff] %v1468
    %1477 = vst [vmem:[#allocation2 + $0x1d8] sm:$0xff] %v1469
    %1478 = vst [vmem:[#allocation2 + $0x1e0] sm:$0xff] %v1470
    %1479 = vst [vmem:[#allocation2 + $0x1e8] sm:$0xff] %v1471
    %1480 = vst [vmem:[#allocation2 + $0x1f0] sm:$0xff] %v1472
    %1481 = vst [vmem:[#allocation2 + $0x1f8] sm:$0xff] %v1473
    %v1482 = vmul.f32 %v1419, %v1433
    %v1483 = vmul.f32 %v1415, %v1437
    %v1484 = vmul.f32 %v1411, %v1441
    %v1485 = vmul.f32 %v1423, %v1445
    %v1486 = vmul.f32 %v1420, %v1433
    %v1487 = vmul.f32 %v1416, %v1437
    %v1488 = vmul.f32 %v1412, %v1441
    %v1489 = vmul.f32 %v1424, %v1445
    %v1490 = vmul.f32 %v1421, %v1433
    %v1491 = vmul.f32 %v1417, %v1437
    %v1492 = vmul.f32 %v1413, %v1441
    %v1493 = vmul.f32 %v1425, %v1445
    %v1494 = vmul.f32 %v1422, %v1433
    %v1495 = vmul.f32 %v1418, %v1437
    %v1496 = vmul.f32 %v1414, %v1441
    %v1497 = vmul.f32 %v1426, %v1445
    %v1498 = vpack.c.bf16 %v1486, %v1482
    %v1499 = vpack.c.bf16 %v1487, %v1483
    %v1500 = vpack.c.bf16 %v1488, %v1484
    %v1501 = vpack.c.bf16 %v1489, %v1485
    %v1502 = vpack.c.bf16 %v1494, %v1490
    %v1503 = vpack.c.bf16 %v1495, %v1491
    %v1504 = vpack.c.bf16 %v1496, %v1492
    %v1505 = vpack.c.bf16 %v1497, %v1493
    %1506 = vst [vmem:[#allocation2 + $0x400] sm:$0xff] %v1498
    %1507 = vst [vmem:[#allocation2 + $0x408] sm:$0xff] %v1499
    %1508 = vst [vmem:[#allocation2 + $0x410] sm:$0xff] %v1500
    %1509 = vst [vmem:[#allocation2 + $0x418] sm:$0xff] %v1501
    %1510 = vst [vmem:[#allocation2 + $0x420] sm:$0xff] %v1502
    %1511 = vst [vmem:[#allocation2 + $0x428] sm:$0xff] %v1503
    %1512 = vst [vmem:[#allocation2 + $0x430] sm:$0xff] %v1504
    %1513 = vst [vmem:[#allocation2 + $0x438] sm:$0xff] %v1505
    %1514 = vrot.lane.b32.xlu0 %v106, 111
    %v1515 = vpop.permute.xlu0 %1514
    %1516 = vrot.lane.b32.xlu0 %v110, 111
    %v1517 = vpop.permute.xlu0 %1516
    %1518 = vrot.lane.b32.xlu0 %v114, 111
    %v1519 = vpop.permute.xlu0 %1518
    %1520 = vrot.lane.b32.xlu0 %v118, 111
    %v1521 = vpop.permute.xlu0 %1520
    %1522 = vrot.lane.b32.xlu0 %v107, 111
    %v1523 = vpop.permute.xlu0 %1522
    %1524 = vrot.lane.b32.xlu0 %v111, 111
    %v1525 = vpop.permute.xlu0 %1524
    %1526 = vrot.lane.b32.xlu0 %v115, 111
    %v1527 = vpop.permute.xlu0 %1526
    %1528 = vrot.lane.b32.xlu0 %v119, 111
    %v1529 = vpop.permute.xlu0 %1528
    %1530 = vrot.lane.b32.xlu0 %v108, 111
    %v1531 = vpop.permute.xlu0 %1530
    %1532 = vrot.lane.b32.xlu0 %v112, 111
    %v1533 = vpop.permute.xlu0 %1532
    %1534 = vrot.lane.b32.xlu0 %v116, 111
    %v1535 = vpop.permute.xlu0 %1534
    %1536 = vrot.lane.b32.xlu0 %v120, 111
    %v1537 = vpop.permute.xlu0 %1536
    %1538 = vrot.lane.b32.xlu0 %v109, 111
    %v1539 = vpop.permute.xlu0 %1538
    %1540 = vrot.lane.b32.xlu0 %v113, 111
    %v1541 = vpop.permute.xlu0 %1540
    %1542 = vrot.lane.b32.xlu0 %v117, 111
    %v1543 = vpop.permute.xlu0 %1542
    %1544 = vrot.lane.b32.xlu0 %v121, 111
    %v1545 = vpop.permute.xlu0 %1544
    %vm1546 = vcmp.lt.s32.totalorder %v171, 111
    %v1547 = vsel %vm1546, %v1531, %v1539
    %v1548 = vsel %vm1546, %v1533, %v1541
    %v1549 = vsel %vm1546, %v1535, %v1543
    %v1550 = vsel %vm1546, %v1537, %v1545
    %v1551 = vsel %vm1546, %v1523, %v1531
    %v1552 = vsel %vm1546, %v1525, %v1533
    %v1553 = vsel %vm1546, %v1527, %v1535
    %v1554 = vsel %vm1546, %v1529, %v1537
    %v1555 = vsel %vm1546, %v1515, %v1523
    %v1556 = vsel %vm1546, %v1517, %v1525
    %v1557 = vsel %vm1546, %v1519, %v1527
    %v1558 = vsel %vm1546, %v1521, %v1529
    %v1559 = vsel %vm1546, %v1539, %v1515
    %v1560 = vsel %vm1546, %v1541, %v1517
    %v1561 = vsel %vm1546, %v1543, %v1519
    %v1562 = vsel %vm1546, %v1545, %v1521
    %1563 = vrot.lane.b32.xlu0 %v122, 111
    %v1564 = vpop.permute.xlu0 %1563
    %1565 = vrot.lane.b32.xlu0 %v126, 111
    %v1566 = vpop.permute.xlu0 %1565
    %1567 = vrot.lane.b32.xlu0 %v130, 111
    %v1568 = vpop.permute.xlu0 %1567
    %1569 = vrot.lane.b32.xlu0 %v134, 111
    %v1570 = vpop.permute.xlu0 %1569
    %1571 = vrot.lane.b32.xlu0 %v123, 111
    %v1572 = vpop.permute.xlu0 %1571
    %1573 = vrot.lane.b32.xlu0 %v127, 111
    %v1574 = vpop.permute.xlu0 %1573
    %1575 = vrot.lane.b32.xlu0 %v131, 111
    %v1576 = vpop.permute.xlu0 %1575
    %1577 = vrot.lane.b32.xlu0 %v135, 111
    %v1578 = vpop.permute.xlu0 %1577
    %1579 = vrot.lane.b32.xlu0 %v124, 111
    %v1580 = vpop.permute.xlu0 %1579
    %1581 = vrot.lane.b32.xlu0 %v128, 111
    %v1582 = vpop.permute.xlu0 %1581
    %1583 = vrot.lane.b32.xlu0 %v132, 111
    %v1584 = vpop.permute.xlu0 %1583
    %1585 = vrot.lane.b32.xlu0 %v136, 111
    %v1586 = vpop.permute.xlu0 %1585
    %1587 = vrot.lane.b32.xlu0 %v125, 111
    %v1588 = vpop.permute.xlu0 %1587
    %1589 = vrot.lane.b32.xlu0 %v129, 111
    %v1590 = vpop.permute.xlu0 %1589
    %1591 = vrot.lane.b32.xlu0 %v133, 111
    %v1592 = vpop.permute.xlu0 %1591
    %1593 = vrot.lane.b32.xlu0 %v137, 111
    %v1594 = vpop.permute.xlu0 %1593
    %v1595 = vsel %vm1546, %v1580, %v1588
    %v1596 = vsel %vm1546, %v1582, %v1590
    %v1597 = vsel %vm1546, %v1584, %v1592
    %v1598 = vsel %vm1546, %v1586, %v1594
    %v1599 = vsel %vm1546, %v1572, %v1580
    %v1600 = vsel %vm1546, %v1574, %v1582
    %v1601 = vsel %vm1546, %v1576, %v1584
    %v1602 = vsel %vm1546, %v1578, %v1586
    %v1603 = vsel %vm1546, %v1564, %v1572
    %v1604 = vsel %vm1546, %v1566, %v1574
    %v1605 = vsel %vm1546, %v1568, %v1576
    %v1606 = vsel %vm1546, %v1570, %v1578
    %v1607 = vsel %vm1546, %v1588, %v1564
    %v1608 = vsel %vm1546, %v1590, %v1566
    %v1609 = vsel %vm1546, %v1592, %v1568
    %v1610 = vsel %vm1546, %v1594, %v1570
    %s1611 = scalar_lea.vmem [#allocation9], 32
    %v1612 = vld [vmem:[%s1611] ss:$8 sm:$0xf]
    %v1614 = vlaneseq
    %v1615 = vshrl.u32 %v1614, 7
    %v1616 = vsub.s32 0, %v1615
    %v1617 = vrot.slane %v1612, %v1616
    %v1618 = vlaneseq
    %v1619 = vshrl.u32 %v1618, 7
    %v1620 = vsub.s32 1, %v1619
    %v1621 = vrot.slane %v1612, %v1620
    %v1622 = vlaneseq
    %v1623 = vshrl.u32 %v1622, 7
    %v1624 = vsub.s32 2, %v1623
    %v1625 = vrot.slane %v1612, %v1624
    %v1626 = vlaneseq
    %v1627 = vshrl.u32 %v1626, 7
    %v1628 = vsub.s32 3, %v1627
    %v1629 = vrot.slane %v1612, %v1628
    %v1634 = vmul.f32 %v1555, %v1617
    %v1635 = vmul.f32 %v1551, %v1621
    %v1636 = vmul.f32 %v1547, %v1625
    %v1637 = vmul.f32 %v1559, %v1629
    %v1638 = vmul.f32 %v1556, %v1617
    %v1639 = vmul.f32 %v1552, %v1621
    %v1640 = vmul.f32 %v1548, %v1625
    %v1641 = vmul.f32 %v1560, %v1629
    %v1642 = vmul.f32 %v1557, %v1617
    %v1643 = vmul.f32 %v1553, %v1621
    %v1644 = vmul.f32 %v1549, %v1625
    %v1645 = vmul.f32 %v1561, %v1629
    %v1646 = vmul.f32 %v1558, %v1617
    %v1647 = vmul.f32 %v1554, %v1621
    %v1648 = vmul.f32 %v1550, %v1625
    %v1649 = vmul.f32 %v1562, %v1629
    %v1650 = vpack.c.bf16 %v1638, %v1634
    %v1651 = vpack.c.bf16 %v1639, %v1635
    %v1652 = vpack.c.bf16 %v1640, %v1636
    %v1653 = vpack.c.bf16 %v1641, %v1637
    %v1654 = vpack.c.bf16 %v1646, %v1642
    %v1655 = vpack.c.bf16 %v1647, %v1643
    %v1656 = vpack.c.bf16 %v1648, %v1644
    %v1657 = vpack.c.bf16 %v1649, %v1645
    %1658 = vst [vmem:[#allocation2 + $0x200] sm:$0xff] %v1650
    %1659 = vst [vmem:[#allocation2 + $0x208] sm:$0xff] %v1651
    %1660 = vst [vmem:[#allocation2 + $0x210] sm:$0xff] %v1652
    %1661 = vst [vmem:[#allocation2 + $0x218] sm:$0xff] %v1653
    %1662 = vst [vmem:[#allocation2 + $0x220] sm:$0xff] %v1654
    %1663 = vst [vmem:[#allocation2 + $0x228] sm:$0xff] %v1655
    %1664 = vst [vmem:[#allocation2 + $0x230] sm:$0xff] %v1656
    %1665 = vst [vmem:[#allocation2 + $0x238] sm:$0xff] %v1657
    %v1666 = vmul.f32 %v1603, %v1617
    %v1667 = vmul.f32 %v1599, %v1621
    %v1668 = vmul.f32 %v1595, %v1625
    %v1669 = vmul.f32 %v1607, %v1629
    %v1670 = vmul.f32 %v1604, %v1617
    %v1671 = vmul.f32 %v1600, %v1621
    %v1672 = vmul.f32 %v1596, %v1625
    %v1673 = vmul.f32 %v1608, %v1629
    %v1674 = vmul.f32 %v1605, %v1617
    %v1675 = vmul.f32 %v1601, %v1621
    %v1676 = vmul.f32 %v1597, %v1625
    %v1677 = vmul.f32 %v1609, %v1629
    %v1678 = vmul.f32 %v1606, %v1617
    %v1679 = vmul.f32 %v1602, %v1621
    %v1680 = vmul.f32 %v1598, %v1625
    %v1681 = vmul.f32 %v1610, %v1629
    %v1682 = vpack.c.bf16 %v1670, %v1666
    %v1683 = vpack.c.bf16 %v1671, %v1667
    %v1684 = vpack.c.bf16 %v1672, %v1668
    %v1685 = vpack.c.bf16 %v1673, %v1669
    %v1686 = vpack.c.bf16 %v1678, %v1674
    %v1687 = vpack.c.bf16 %v1679, %v1675
    %v1688 = vpack.c.bf16 %v1680, %v1676
    %v1689 = vpack.c.bf16 %v1681, %v1677
    %1690 = vst [vmem:[#allocation2 + $0x440] sm:$0xff] %v1682
    %1691 = vst [vmem:[#allocation2 + $0x448] sm:$0xff] %v1683
    %1692 = vst [vmem:[#allocation2 + $0x450] sm:$0xff] %v1684
    %1693 = vst [vmem:[#allocation2 + $0x458] sm:$0xff] %v1685
    %1694 = vst [vmem:[#allocation2 + $0x460] sm:$0xff] %v1686
    %1695 = vst [vmem:[#allocation2 + $0x468] sm:$0xff] %v1687
    %1696 = vst [vmem:[#allocation2 + $0x470] sm:$0xff] %v1688
    %1697 = vst [vmem:[#allocation2 + $0x478] sm:$0xff] %v1689
    %v1698 = vld [vmem:[#allocation10] sm:$0xff]
    %v1699 = vld [vmem:[#allocation10 + $0x8] sm:$0xff]
    %v1700 = vld [vmem:[#allocation10 + $0x10] sm:$0xf]
    %v1701 = vld [vmem:[#allocation10 + $0x14] sm:$0xff]
    %v1702 = vld [vmem:[#allocation10 + $0x1c] sm:$0xff]
    %v1703 = vld [vmem:[#allocation10 + $0x24] sm:$0xf]
    %v1704 = vld [vmem:[#allocation10 + $0x28] sm:$0xff]
    %v1705 = vld [vmem:[#allocation10 + $0x30] sm:$0xff]
    %v1706 = vld [vmem:[#allocation10 + $0x38] sm:$0xf]
    %v1707 = vld [vmem:[#allocation10 + $0x3c] sm:$0xff]
    %v1708 = vld [vmem:[#allocation10 + $0x44] sm:$0xff]
    %v1709 = vld [vmem:[#allocation10 + $0x4c] sm:$0xf]
    %v1710 = vld [vmem:[#allocation2] sm:$0xff]
    %v1711 = vld [vmem:[#allocation2 + $0x8] sm:$0xff]
    %v1712 = vld [vmem:[#allocation2 + $0x10] sm:$0xff]
    %v1713 = vld [vmem:[#allocation2 + $0x18] sm:$0xff]
    %v1714 = vld [vmem:[#allocation2 + $0x20] sm:$0xff]
    %v1715 = vld [vmem:[#allocation2 + $0x28] sm:$0xff]
    %v1716 = vld [vmem:[#allocation2 + $0x30] sm:$0xff]
    %v1717 = vld [vmem:[#allocation2 + $0x38] sm:$0xff]
    %v1718 = vld [vmem:[#allocation2 + $0x40] sm:$0xff]
    %v1719 = vld [vmem:[#allocation2 + $0x48] sm:$0xff]
    %v1720 = vld [vmem:[#allocation2 + $0x50] sm:$0xff]
    %v1721 = vld [vmem:[#allocation2 + $0x58] sm:$0xff]
    %v1722 = vld [vmem:[#allocation2 + $0x60] sm:$0xff]
    %v1723 = vld [vmem:[#allocation2 + $0x68] sm:$0xff]
    %v1724 = vld [vmem:[#allocation2 + $0x70] sm:$0xff]
    %v1725 = vld [vmem:[#allocation2 + $0x78] sm:$0xff]
    %v1726 = vld [vmem:[#allocation2 + $0x80] sm:$0xff]
    %v1727 = vld [vmem:[#allocation2 + $0x88] sm:$0xff]
    %v1728 = vld [vmem:[#allocation2 + $0x90] sm:$0xff]
    %v1729 = vld [vmem:[#allocation2 + $0x98] sm:$0xff]
    %v1730 = vld [vmem:[#allocation2 + $0xa0] sm:$0xff]
    %v1731 = vld [vmem:[#allocation2 + $0xa8] sm:$0xff]
    %v1732 = vld [vmem:[#allocation2 + $0xb0] sm:$0xff]
    %v1733 = vld [vmem:[#allocation2 + $0xb8] sm:$0xff]
    %v1734 = vld [vmem:[#allocation2 + $0xc0] sm:$0xff]
    %v1735 = vld [vmem:[#allocation2 + $0xc8] sm:$0xff]
    %v1736 = vld [vmem:[#allocation2 + $0xd0] sm:$0xff]
    %v1737 = vld [vmem:[#allocation2 + $0xd8] sm:$0xff]
    %v1738 = vld [vmem:[#allocation2 + $0xe0] sm:$0xff]
    %v1739 = vld [vmem:[#allocation2 + $0xe8] sm:$0xff]
    %v1740 = vld [vmem:[#allocation2 + $0xf0] sm:$0xff]
    %v1741 = vld [vmem:[#allocation2 + $0xf8] sm:$0xff]
    %v1742 = vld [vmem:[#allocation2 + $0x100] sm:$0xff]
    %v1743 = vld [vmem:[#allocation2 + $0x108] sm:$0xff]
    %v1744 = vld [vmem:[#allocation2 + $0x110] sm:$0xff]
    %v1745 = vld [vmem:[#allocation2 + $0x118] sm:$0xff]
    %v1746 = vld [vmem:[#allocation2 + $0x120] sm:$0xff]
    %v1747 = vld [vmem:[#allocation2 + $0x128] sm:$0xff]
    %v1748 = vld [vmem:[#allocation2 + $0x130] sm:$0xff]
    %v1749 = vld [vmem:[#allocation2 + $0x138] sm:$0xff]
    %v1750 = vld [vmem:[#allocation2 + $0x140] sm:$0xff]
    %v1751 = vld [vmem:[#allocation2 + $0x148] sm:$0xff]
    %v1752 = vld [vmem:[#allocation2 + $0x150] sm:$0xff]
    %v1753 = vld [vmem:[#allocation2 + $0x158] sm:$0xff]
    %v1754 = vld [vmem:[#allocation2 + $0x160] sm:$0xff]
    %v1755 = vld [vmem:[#allocation2 + $0x168] sm:$0xff]
    %v1756 = vld [vmem:[#allocation2 + $0x170] sm:$0xff]
    %v1757 = vld [vmem:[#allocation2 + $0x178] sm:$0xff]
    %v1758 = vld [vmem:[#allocation2 + $0x180] sm:$0xff]
    %v1759 = vld [vmem:[#allocation2 + $0x188] sm:$0xff]
    %v1760 = vld [vmem:[#allocation2 + $0x190] sm:$0xff]
    %v1761 = vld [vmem:[#allocation2 + $0x198] sm:$0xff]
    %v1762 = vld [vmem:[#allocation2 + $0x1a0] sm:$0xff]
    %v1763 = vld [vmem:[#allocation2 + $0x1a8] sm:$0xff]
    %v1764 = vld [vmem:[#allocation2 + $0x1b0] sm:$0xff]
    %v1765 = vld [vmem:[#allocation2 + $0x1b8] sm:$0xff]
    %v1766 = vld [vmem:[#allocation2 + $0x1c0] sm:$0xff]
    %v1767 = vld [vmem:[#allocation2 + $0x1c8] sm:$0xff]
    %v1768 = vld [vmem:[#allocation2 + $0x1d0] sm:$0xff]
    %v1769 = vld [vmem:[#allocation2 + $0x1d8] sm:$0xff]
    %v1770 = vld [vmem:[#allocation2 + $0x1e0] sm:$0xff]
    %v1771 = vld [vmem:[#allocation2 + $0x1e8] sm:$0xff]
    %v1772 = vld [vmem:[#allocation2 + $0x1f0] sm:$0xff]
    %v1773 = vld [vmem:[#allocation2 + $0x1f8] sm:$0xff]
    %v1774 = vld [vmem:[#allocation2 + $0x200] sm:$0xff]
    %v1775 = vld [vmem:[#allocation2 + $0x208] sm:$0xff]
    %v1776 = vld [vmem:[#allocation2 + $0x210] sm:$0xff]
    %v1777 = vld [vmem:[#allocation2 + $0x218] sm:$0xff]
    %v1778 = vld [vmem:[#allocation2 + $0x220] sm:$0xff]
    %v1779 = vld [vmem:[#allocation2 + $0x228] sm:$0xff]
    %v1780 = vld [vmem:[#allocation2 + $0x230] sm:$0xff]
    %v1781 = vld [vmem:[#allocation2 + $0x238] sm:$0xff]
    %v1782 = vld [vmem:[#allocation2 + $0x240] sm:$0xff]
    %v1783 = vld [vmem:[#allocation2 + $0x248] sm:$0xff]
    %v1784 = vld [vmem:[#allocation2 + $0x250] sm:$0xff]
    %v1785 = vld [vmem:[#allocation2 + $0x258] sm:$0xff]
    %v1786 = vld [vmem:[#allocation2 + $0x260] sm:$0xff]
    %v1787 = vld [vmem:[#allocation2 + $0x268] sm:$0xff]
    %v1788 = vld [vmem:[#allocation2 + $0x270] sm:$0xff]
    %v1789 = vld [vmem:[#allocation2 + $0x278] sm:$0xff]
    %v1790 = vld [vmem:[#allocation2 + $0x280] sm:$0xff]
    %v1791 = vld [vmem:[#allocation2 + $0x288] sm:$0xff]
    %v1792 = vld [vmem:[#allocation2 + $0x290] sm:$0xff]
    %v1793 = vld [vmem:[#allocation2 + $0x298] sm:$0xff]
    %v1794 = vld [vmem:[#allocation2 + $0x2a0] sm:$0xff]
    %v1795 = vld [vmem:[#allocation2 + $0x2a8] sm:$0xff]
    %v1796 = vld [vmem:[#allocation2 + $0x2b0] sm:$0xff]
    %v1797 = vld [vmem:[#allocation2 + $0x2b8] sm:$0xff]
    %v1798 = vld [vmem:[#allocation2 + $0x2c0] sm:$0xff]
    %v1799 = vld [vmem:[#allocation2 + $0x2c8] sm:$0xff]
    %v1800 = vld [vmem:[#allocation2 + $0x2d0] sm:$0xff]
    %v1801 = vld [vmem:[#allocation2 + $0x2d8] sm:$0xff]
    %v1802 = vld [vmem:[#allocation2 + $0x2e0] sm:$0xff]
    %v1803 = vld [vmem:[#allocation2 + $0x2e8] sm:$0xff]
    %v1804 = vld [vmem:[#allocation2 + $0x2f0] sm:$0xff]
    %v1805 = vld [vmem:[#allocation2 + $0x2f8] sm:$0xff]
    %v1806 = vld [vmem:[#allocation2 + $0x300] sm:$0xff]
    %v1807 = vld [vmem:[#allocation2 + $0x308] sm:$0xff]
    %v1808 = vld [vmem:[#allocation2 + $0x310] sm:$0xff]
    %v1809 = vld [vmem:[#allocation2 + $0x318] sm:$0xff]
    %v1810 = vld [vmem:[#allocation2 + $0x320] sm:$0xff]
    %v1811 = vld [vmem:[#allocation2 + $0x328] sm:$0xff]
    %v1812 = vld [vmem:[#allocation2 + $0x330] sm:$0xff]
    %v1813 = vld [vmem:[#allocation2 + $0x338] sm:$0xff]
    %v1814 = vld [vmem:[#allocation2 + $0x340] sm:$0xff]
    %v1815 = vld [vmem:[#allocation2 + $0x348] sm:$0xff]
    %v1816 = vld [vmem:[#allocation2 + $0x350] sm:$0xff]
    %v1817 = vld [vmem:[#allocation2 + $0x358] sm:$0xff]
    %v1818 = vld [vmem:[#allocation2 + $0x360] sm:$0xff]
    %v1819 = vld [vmem:[#allocation2 + $0x368] sm:$0xff]
    %v1820 = vld [vmem:[#allocation2 + $0x370] sm:$0xff]
    %v1821 = vld [vmem:[#allocation2 + $0x378] sm:$0xff]
    %v1822 = vld [vmem:[#allocation2 + $0x380] sm:$0xff]
    %v1823 = vld [vmem:[#allocation2 + $0x388] sm:$0xff]
    %v1824 = vld [vmem:[#allocation2 + $0x390] sm:$0xff]
    %v1825 = vld [vmem:[#allocation2 + $0x398] sm:$0xff]
    %v1826 = vld [vmem:[#allocation2 + $0x3a0] sm:$0xff]
    %v1827 = vld [vmem:[#allocation2 + $0x3a8] sm:$0xff]
    %v1828 = vld [vmem:[#allocation2 + $0x3b0] sm:$0xff]
    %v1829 = vld [vmem:[#allocation2 + $0x3b8] sm:$0xff]
    %v1830 = vld [vmem:[#allocation2 + $0x3c0] sm:$0xff]
    %v1831 = vld [vmem:[#allocation2 + $0x3c8] sm:$0xff]
    %v1832 = vld [vmem:[#allocation2 + $0x3d0] sm:$0xff]
    %v1833 = vld [vmem:[#allocation2 + $0x3d8] sm:$0xff]
    %v1834 = vld [vmem:[#allocation2 + $0x3e0] sm:$0xff]
    %v1835 = vld [vmem:[#allocation2 + $0x3e8] sm:$0xff]
    %v1836 = vld [vmem:[#allocation2 + $0x3f0] sm:$0xff]
    %v1837 = vld [vmem:[#allocation2 + $0x3f8] sm:$0xff]
    %v1838 = vld [vmem:[#allocation2 + $0x400] sm:$0xff]
    %v1839 = vld [vmem:[#allocation2 + $0x408] sm:$0xff]
    %v1840 = vld [vmem:[#allocation2 + $0x410] sm:$0xff]
    %v1841 = vld [vmem:[#allocation2 + $0x418] sm:$0xff]
    %v1842 = vld [vmem:[#allocation2 + $0x420] sm:$0xff]
    %v1843 = vld [vmem:[#allocation2 + $0x428] sm:$0xff]
    %v1844 = vld [vmem:[#allocation2 + $0x430] sm:$0xff]
    %v1845 = vld [vmem:[#allocation2 + $0x438] sm:$0xff]
    %v1846 = vld [vmem:[#allocation2 + $0x440] sm:$0xff]
    %v1847 = vld [vmem:[#allocation2 + $0x448] sm:$0xff]
    %v1848 = vld [vmem:[#allocation2 + $0x450] sm:$0xff]
    %v1849 = vld [vmem:[#allocation2 + $0x458] sm:$0xff]
    %v1850 = vld [vmem:[#allocation2 + $0x460] sm:$0xff]
    %v1851 = vld [vmem:[#allocation2 + $0x468] sm:$0xff]
    %v1852 = vld [vmem:[#allocation2 + $0x470] sm:$0xff]
    %v1853 = vld [vmem:[#allocation2 + $0x478] sm:$0xff]
    %v1866 = vunpack.c.l.b16 %v1698
    %v1867 = vunpack.c.h.b16 %v1698
    %v1868 = vunpack.c.l.b16 %v1699
    %v1869 = vunpack.c.h.b16 %v1699
    %v1870 = vunpack.c.l.b16 %v1700
    %v1871 = vunpack.c.l.b16 %v1701
    %v1872 = vunpack.c.h.b16 %v1701
    %v1873 = vunpack.c.l.b16 %v1702
    %v1874 = vunpack.c.h.b16 %v1702
    %v1875 = vunpack.c.l.b16 %v1703
    %v1876 = vunpack.c.l.b16 %v1704
    %v1877 = vunpack.c.h.b16 %v1704
    %v1878 = vunpack.c.l.b16 %v1705
    %v1879 = vunpack.c.h.b16 %v1705
    %v1880 = vunpack.c.l.b16 %v1706
    %v1881 = vunpack.c.l.b16 %v1707
    %v1882 = vunpack.c.h.b16 %v1707
    %v1883 = vunpack.c.l.b16 %v1708
    %v1884 = vunpack.c.h.b16 %v1708
    %v1885 = vunpack.c.l.b16 %v1709
    %v1886 = vpack.c.b16 %v1871, %v1866
    %v1887 = vpack.c.b16 %v1872, %v1867
    %v1888 = vpack.c.b16 %v1873, %v1868
    %v1889 = vpack.c.b16 %v1874, %v1869
    %v1890 = vpack.c.b16 %v1875, %v1870
    %v1891 = vpack.c.b16 %v1881, %v1876
    %v1892 = vpack.c.b16 %v1882, %v1877
    %v1893 = vpack.c.b16 %v1883, %v1878
    %v1894 = vpack.c.b16 %v1884, %v1879
    %v1895 = vpack.c.b16 %v1885, %v1880
    %vm1904 = vcmask 523264
    %v1906 = vsel %vm1904, %v1890, 0
    %v1909 = vsel %vm1904, %v1895, 0
    %1911 = vmatprep.subr.bf16.mxu0 %v1711
    %1912 = vmatpush1.bf16.msra.mxu0 %v1710
    %1913 = vmatprep.subr.bf16.mxu0 %v1715
    %1914 = vmatpush1.bf16.msra.mxu0 %v1714
    %1915 = vmatprep.subr.bf16.mxu0 %v1719
    %1916 = vmatpush1.bf16.msra.mxu0 %v1718
    %1917 = vmatprep.subr.bf16.mxu0 %v1723
    %1918 = vmatpush1.bf16.msra.mxu0 %v1722
    %1919 = vmatprep.subr.bf16.mxu0 %v1727
    %1920 = vmatpush1.bf16.msra.mxu0 %v1726
    %1921 = vmatprep.subr.bf16.mxu0 %v1731
    %1922 = vmatpush1.bf16.msra.mxu0 %v1730
    %1923 = vmatprep.subr.bf16.mxu0 %v1735
    %1924 = vmatpush1.bf16.msra.mxu0 %v1734
    %1925 = vmatprep.subr.bf16.mxu0 %v1739
    %1926 = vmatpush1.bf16.msra.mxu0 %v1738
    %1927 = vmatprep.subr.bf16.mxu0 %v1743
    %1928 = vmatpush1.bf16.msra.mxu0 %v1742
    %1929 = vmatprep.subr.bf16.mxu0 %v1747
    %1930 = vmatpush1.bf16.msra.mxu0 %v1746
    %1931 = vmatprep.subr.bf16.mxu0 %v1751
    %1932 = vmatpush1.bf16.msra.mxu0 %v1750
    %1933 = vmatprep.subr.bf16.mxu0 %v1755
    %1934 = vmatpush1.bf16.msra.mxu0 %v1754
    %1935 = vmatprep.subr.bf16.mxu0 %v1759
    %1936 = vmatpush1.bf16.msra.mxu0 %v1758
    %1937 = vmatprep.subr.bf16.mxu0 %v1763
    %1938 = vmatpush1.bf16.msra.mxu0 %v1762
    %1939 = vmatprep.subr.bf16.mxu0 %v1767
    %1940 = vmatpush1.bf16.msra.mxu0 %v1766
    %1941 = vmatprep.subr.bf16.mxu0 %v1771
    %1942 = vmatpush1.bf16.msra.mxu0 %v1770
    %1943 = vmatprep.mubr.bf16.mxu0 %v1887
    %1944 = vmatmul.mubr.bf16.gmra.mrb[0].mxu0 %v1886
    %v1945 = vpop.f32.mrb[0].mxu0
    %v1946 = vadd.f32 0.0, %v1945
    %v1947 = vpop.f32.mrb[0].mxu0
    %v1948 = vadd.f32 0.0, %v1947
    %v1949 = vpop.f32.mrb[0].mxu0
    %v1950 = vadd.f32 0.0, %v1949
    %v1951 = vpop.f32.mrb[0].mxu0
    %v1952 = vadd.f32 0.0, %v1951
    %1953 = vmatprep.mubr.bf16.mxu0 %v1892
    %1954 = vmatmul.mubr.bf16.gmra.mrb[0].mxu0 %v1891
    %v1955 = vpop.f32.mrb[0].mxu0
    %v1956 = vadd.f32 0.0, %v1955
    %v1957 = vpop.f32.mrb[0].mxu0
    %v1958 = vadd.f32 0.0, %v1957
    %v1959 = vpop.f32.mrb[0].mxu0
    %v1960 = vadd.f32 0.0, %v1959
    %v1961 = vpop.f32.mrb[0].mxu0
    %v1962 = vadd.f32 0.0, %v1961
    %1963 = vdwg.mxu0
    %1964 = vmatprep.subr.bf16.mxu0 %v1775
    %1965 = vmatpush1.bf16.msra.mxu0 %v1774
    %1966 = vmatprep.subr.bf16.mxu0 %v1779
    %1967 = vmatpush1.bf16.msra.mxu0 %v1778
    %1968 = vmatprep.subr.bf16.mxu0 %v1783
    %1969 = vmatpush1.bf16.msra.mxu0 %v1782
    %1970 = vmatprep.subr.bf16.mxu0 %v1787
    %1971 = vmatpush1.bf16.msra.mxu0 %v1786
    %1972 = vmatprep.subr.bf16.mxu0 %v1791
    %1973 = vmatpush1.bf16.msra.mxu0 %v1790
    %1974 = vmatprep.subr.bf16.mxu0 %v1795
    %1975 = vmatpush1.bf16.msra.mxu0 %v1794
    %1976 = vmatprep.subr.bf16.mxu0 %v1799
    %1977 = vmatpush1.bf16.msra.mxu0 %v1798
    %1978 = vmatprep.subr.bf16.mxu0 %v1803
    %1979 = vmatpush1.bf16.msra.mxu0 %v1802
    %1980 = vmatprep.subr.bf16.mxu0 %v1807
    %1981 = vmatpush1.bf16.msra.mxu0 %v1806
    %1982 = vmatprep.subr.bf16.mxu0 %v1811
    %1983 = vmatpush1.bf16.msra.mxu0 %v1810
    %1984 = vmatprep.subr.bf16.mxu0 %v1815
    %1985 = vmatpush1.bf16.msra.mxu0 %v1814
    %1986 = vmatprep.subr.bf16.mxu0 %v1819
    %1987 = vmatpush1.bf16.msra.mxu0 %v1818
    %1988 = vmatprep.subr.bf16.mxu0 %v1823
    %1989 = vmatpush1.bf16.msra.mxu0 %v1822
    %1990 = vmatprep.subr.bf16.mxu0 %v1827
    %1991 = vmatpush1.bf16.msra.mxu0 %v1826
    %1992 = vmatprep.subr.bf16.mxu0 %v1831
    %1993 = vmatpush1.bf16.msra.mxu0 %v1830
    %1994 = vmatprep.subr.bf16.mxu0 %v1835
    %1995 = vmatpush1.bf16.msra.mxu0 %v1834
    %1996 = vmatprep.mubr.bf16.mxu0 %v1889
    %1997 = vmatmul.mubr.bf16.gmra.mrb[0].mxu0 %v1888
    %v1998 = vpop.f32.mrb[0].mxu0
    %v1999 = vadd.f32 %v1946, %v1998
    %v2000 = vpop.f32.mrb[0].mxu0
    %v2001 = vadd.f32 %v1948, %v2000
    %v2002 = vpop.f32.mrb[0].mxu0
    %v2003 = vadd.f32 %v1950, %v2002
    %v2004 = vpop.f32.mrb[0].mxu0
    %v2005 = vadd.f32 %v1952, %v2004
    %2006 = vmatprep.mubr.bf16.mxu0 %v1894
    %2007 = vmatmul.mubr.bf16.gmra.mrb[0].mxu0 %v1893
    %v2008 = vpop.f32.mrb[0].mxu0
    %v2009 = vadd.f32 %v1956, %v2008
    %v2010 = vpop.f32.mrb[0].mxu0
    %v2011 = vadd.f32 %v1958, %v2010
    %v2012 = vpop.f32.mrb[0].mxu0
    %v2013 = vadd.f32 %v1960, %v2012
    %v2014 = vpop.f32.mrb[0].mxu0
    %v2015 = vadd.f32 %v1962, %v2014
    %2016 = vdwg.mxu0
    %2017 = vmatprep.subr.bf16.mxu0 %v1839
    %2018 = vmatpush1.bf16.msra.mxu0 %v1838
    %2019 = vmatprep.subr.bf16.mxu0 %v1843
    %2020 = vmatpush1.bf16.msra.mxu0 %v1842
    %2021 = vmatprep.subr.bf16.mxu0 %v1847
    %2022 = vmatpush1.bf16.msra.mxu0 %v1846
    %2023 = vmatprep.subr.bf16.mxu0 %v1851
    %2024 = vmatpush1.bf16.msra.mxu0 %v1850
    %2025 = vmatprep.subr.bf16.mxu0 0
    %2026 = vmatpush1.bf16.msra.mxu0 0
    %2027 = vmatprep.subr.bf16.mxu0 0
    %2028 = vmatpush1.bf16.msra.mxu0 0
    %2029 = vmatprep.subr.bf16.mxu0 0
    %2030 = vmatpush1.bf16.msra.mxu0 0
    %2031 = vmatprep.subr.bf16.mxu0 0
    %2032 = vmatpush1.bf16.msra.mxu0 0
    %2033 = vmatprep.subr.bf16.mxu0 0
    %2034 = vmatpush1.bf16.msra.mxu0 0
    %2035 = vmatprep.subr.bf16.mxu0 0
    %2036 = vmatpush1.bf16.msra.mxu0 0
    %2037 = vmatprep.subr.bf16.mxu0 0
    %2038 = vmatpush1.bf16.msra.mxu0 0
    %2039 = vmatprep.subr.bf16.mxu0 0
    %2040 = vmatpush1.bf16.msra.mxu0 0
    %2041 = vmatprep.subr.bf16.mxu0 0
    %2042 = vmatpush1.bf16.msra.mxu0 0
    %2043 = vmatprep.subr.bf16.mxu0 0
    %2044 = vmatpush1.bf16.msra.mxu0 0
    %2045 = vmatprep.subr.bf16.mxu0 0
    %2046 = vmatpush1.bf16.msra.mxu0 0
    %2047 = vmatprep.subr.bf16.mxu0 0
    %2048 = vmatpush1.bf16.msra.mxu0 0
    %2049 = vmatprep.mubr.bf16.mxu0 0
    %2050 = vmatmul.mubr.bf16.gmra.mrb[0].mxu0 %v1906
    %v2051 = vpop.f32.mrb[0].mxu0
    %v2052 = vadd.f32 %v1999, %v2051
    %v2053 = vpop.f32.mrb[0].mxu0
    %v2054 = vadd.f32 %v2001, %v2053
    %v2055 = vpop.f32.mrb[0].mxu0
    %v2056 = vadd.f32 %v2003, %v2055
    %v2057 = vpop.f32.mrb[0].mxu0
    %v2058 = vadd.f32 %v2005, %v2057
    %2059 = vmatprep.mubr.bf16.mxu0 0
    %2060 = vmatmul.mubr.bf16.gmra.mrb[0].mxu0 %v1909
    %v2061 = vpop.f32.mrb[0].mxu0
    %v2062 = vadd.f32 %v2009, %v2061
    %v2063 = vpop.f32.mrb[0].mxu0
    %v2064 = vadd.f32 %v2011, %v2063
    %v2065 = vpop.f32.mrb[0].mxu0
    %v2066 = vadd.f32 %v2013, %v2065
    %v2067 = vpop.f32.mrb[0].mxu0
    %v2068 = vadd.f32 %v2015, %v2067
    %2069 = vdwg.mxu0
    %2070 = vmatprep.subr.bf16.mxu0 %v1713
    %2071 = vmatpush1.bf16.msra.mxu0 %v1712
    %2072 = vmatprep.subr.bf16.mxu0 %v1717
    %2073 = vmatpush1.bf16.msra.mxu0 %v1716
    %2074 = vmatprep.subr.bf16.mxu0 %v1721
    %2075 = vmatpush1.bf16.msra.mxu0 %v1720
    %2076 = vmatprep.subr.bf16.mxu0 %v1725
    %2077 = vmatpush1.bf16.msra.mxu0 %v1724
    %2078 = vmatprep.subr.bf16.mxu0 %v1729
    %2079 = vmatpush1.bf16.msra.mxu0 %v1728
    %2080 = vmatprep.subr.bf16.mxu0 %v1733
    %2081 = vmatpush1.bf16.msra.mxu0 %v1732
    %2082 = vmatprep.subr.bf16.mxu0 %v1737
    %2083 = vmatpush1.bf16.msra.mxu0 %v1736
    %2084 = vmatprep.subr.bf16.mxu0 %v1741
    %2085 = vmatpush1.bf16.msra.mxu0 %v1740
    %2086 = vmatprep.subr.bf16.mxu0 %v1745
    %2087 = vmatpush1.bf16.msra.mxu0 %v1744
    %2088 = vmatprep.subr.bf16.mxu0 %v1749
    %2089 = vmatpush1.bf16.msra.mxu0 %v1748
    %2090 = vmatprep.subr.bf16.mxu0 %v1753
    %2091 = vmatpush1.bf16.msra.mxu0 %v1752
    %2092 = vmatprep.subr.bf16.mxu0 %v1757
    %2093 = vmatpush1.bf16.msra.mxu0 %v1756
    %2094 = vmatprep.subr.bf16.mxu0 %v1761
    %2095 = vmatpush1.bf16.msra.mxu0 %v1760
    %2096 = vmatprep.subr.bf16.mxu0 %v1765
    %2097 = vmatpush1.bf16.msra.mxu0 %v1764
    %2098 = vmatprep.subr.bf16.mxu0 %v1769
    %2099 = vmatpush1.bf16.msra.mxu0 %v1768
    %2100 = vmatprep.subr.bf16.mxu0 %v1773
    %2101 = vmatpush1.bf16.msra.mxu0 %v1772
    %2102 = vmatprep.mubr.bf16.mxu0 %v1887
    %2103 = vmatmul.mubr.bf16.gmra.mrb[0].mxu0 %v1886
    %v2104 = vpop.f32.mrb[0].mxu0
    %v2105 = vadd.f32 0.0, %v2104
    %v2106 = vpop.f32.mrb[0].mxu0
    %v2107 = vadd.f32 0.0, %v2106
    %v2108 = vpop.f32.mrb[0].mxu0
    %v2109 = vadd.f32 0.0, %v2108
    %v2110 = vpop.f32.mrb[0].mxu0
    %v2111 = vadd.f32 0.0, %v2110
    %2112 = vmatprep.mubr.bf16.mxu0 %v1892
    %2113 = vmatmul.mubr.bf16.gmra.mrb[0].mxu0 %v1891
    %v2114 = vpop.f32.mrb[0].mxu0
    %v2115 = vadd.f32 0.0, %v2114
    %v2116 = vpop.f32.mrb[0].mxu0
    %v2117 = vadd.f32 0.0, %v2116
    %v2118 = vpop.f32.mrb[0].mxu0
    %v2119 = vadd.f32 0.0, %v2118
    %v2120 = vpop.f32.mrb[0].mxu0
    %v2121 = vadd.f32 0.0, %v2120
    %2122 = vdwg.mxu0
    %2123 = vmatprep.subr.bf16.mxu0 %v1777
    %2124 = vmatpush1.bf16.msra.mxu0 %v1776
    %2125 = vmatprep.subr.bf16.mxu0 %v1781
    %2126 = vmatpush1.bf16.msra.mxu0 %v1780
    %2127 = vmatprep.subr.bf16.mxu0 %v1785
    %2128 = vmatpush1.bf16.msra.mxu0 %v1784
    %2129 = vmatprep.subr.bf16.mxu0 %v1789
    %2130 = vmatpush1.bf16.msra.mxu0 %v1788
    %2131 = vmatprep.subr.bf16.mxu0 %v1793
    %2132 = vmatpush1.bf16.msra.mxu0 %v1792
    %2133 = vmatprep.subr.bf16.mxu0 %v1797
    %2134 = vmatpush1.bf16.msra.mxu0 %v1796
    %2135 = vmatprep.subr.bf16.mxu0 %v1801
    %2136 = vmatpush1.bf16.msra.mxu0 %v1800
    %2137 = vmatprep.subr.bf16.mxu0 %v1805
    %2138 = vmatpush1.bf16.msra.mxu0 %v1804
    %2139 = vmatprep.subr.bf16.mxu0 %v1809
    %2140 = vmatpush1.bf16.msra.mxu0 %v1808
    %2141 = vmatprep.subr.bf16.mxu0 %v1813
    %2142 = vmatpush1.bf16.msra.mxu0 %v1812
    %2143 = vmatprep.subr.bf16.mxu0 %v1817
    %2144 = vmatpush1.bf16.msra.mxu0 %v1816
    %2145 = vmatprep.subr.bf16.mxu0 %v1821
    %2146 = vmatpush1.bf16.msra.mxu0 %v1820
    %2147 = vmatprep.subr.bf16.mxu0 %v1825
    %2148 = vmatpush1.bf16.msra.mxu0 %v1824
    %2149 = vmatprep.subr.bf16.mxu0 %v1829
    %2150 = vmatpush1.bf16.msra.mxu0 %v1828
    %2151 = vmatprep.subr.bf16.mxu0 %v1833
    %2152 = vmatpush1.bf16.msra.mxu0 %v1832
    %2153 = vmatprep.subr.bf16.mxu0 %v1837
    %2154 = vmatpush1.bf16.msra.mxu0 %v1836
    %2155 = vmatprep.mubr.bf16.mxu0 %v1889
    %2156 = vmatmul.mubr.bf16.gmra.mrb[0].mxu0 %v1888
    %v2157 = vpop.f32.mrb[0].mxu0
    %v2158 = vadd.f32 %v2105, %v2157
    %v2159 = vpop.f32.mrb[0].mxu0
    %v2160 = vadd.f32 %v2107, %v2159
    %v2161 = vpop.f32.mrb[0].mxu0
    %v2162 = vadd.f32 %v2109, %v2161
    %v2163 = vpop.f32.mrb[0].mxu0
    %v2164 = vadd.f32 %v2111, %v2163
    %2165 = vmatprep.mubr.bf16.mxu0 %v1894
    %2166 = vmatmul.mubr.bf16.gmra.mrb[0].mxu0 %v1893
    %v2167 = vpop.f32.mrb[0].mxu0
    %v2168 = vadd.f32 %v2115, %v2167
    %v2169 = vpop.f32.mrb[0].mxu0
    %v2170 = vadd.f32 %v2117, %v2169
    %v2171 = vpop.f32.mrb[0].mxu0
    %v2172 = vadd.f32 %v2119, %v2171
    %v2173 = vpop.f32.mrb[0].mxu0
    %v2174 = vadd.f32 %v2121, %v2173
    %2175 = vdwg.mxu0
    %2176 = vmatprep.subr.bf16.mxu0 %v1841
    %2177 = vmatpush1.bf16.msra.mxu0 %v1840
    %2178 = vmatprep.subr.bf16.mxu0 %v1845
    %2179 = vmatpush1.bf16.msra.mxu0 %v1844
    %2180 = vmatprep.subr.bf16.mxu0 %v1849
    %2181 = vmatpush1.bf16.msra.mxu0 %v1848
    %2182 = vmatprep.subr.bf16.mxu0 %v1853
    %2183 = vmatpush1.bf16.msra.mxu0 %v1852
    %2184 = vmatprep.subr.bf16.mxu0 0
    %2185 = vmatpush1.bf16.msra.mxu0 0
    %2186 = vmatprep.subr.bf16.mxu0 0
    %2187 = vmatpush1.bf16.msra.mxu0 0
    %2188 = vmatprep.subr.bf16.mxu0 0
    %2189 = vmatpush1.bf16.msra.mxu0 0
    %2190 = vmatprep.subr.bf16.mxu0 0
    %2191 = vmatpush1.bf16.msra.mxu0 0
    %2192 = vmatprep.subr.bf16.mxu0 0
    %2193 = vmatpush1.bf16.msra.mxu0 0
    %2194 = vmatprep.subr.bf16.mxu0 0
    %2195 = vmatpush1.bf16.msra.mxu0 0
    %2196 = vmatprep.subr.bf16.mxu0 0
    %2197 = vmatpush1.bf16.msra.mxu0 0
    %2198 = vmatprep.subr.bf16.mxu0 0
    %2199 = vmatpush1.bf16.msra.mxu0 0
    %2200 = vmatprep.subr.bf16.mxu0 0
    %2201 = vmatpush1.bf16.msra.mxu0 0
    %2202 = vmatprep.subr.bf16.mxu0 0
    %2203 = vmatpush1.bf16.msra.mxu0 0
    %2204 = vmatprep.subr.bf16.mxu0 0
    %2205 = vmatpush1.bf16.msra.mxu0 0
    %2206 = vmatprep.subr.bf16.mxu0 0
    %2207 = vmatpush1.bf16.msra.mxu0 0
    %2208 = vmatprep.mubr.bf16.mxu0 0
    %2209 = vmatmul.mubr.bf16.gmra.mrb[0].mxu0 %v1906
    %v2210 = vpop.f32.mrb[0].mxu0
    %v2211 = vadd.f32 %v2158, %v2210
    %v2212 = vpop.f32.mrb[0].mxu0
    %v2213 = vadd.f32 %v2160, %v2212
    %v2214 = vpop.f32.mrb[0].mxu0
    %v2215 = vadd.f32 %v2162, %v2214
    %v2216 = vpop.f32.mrb[0].mxu0
    %v2217 = vadd.f32 %v2164, %v2216
    %2218 = vmatprep.mubr.bf16.mxu0 0
    %2219 = vmatmul.mubr.bf16.gmra.mrb[0].mxu0 %v1909
    %v2220 = vpop.f32.mrb[0].mxu0
    %v2221 = vadd.f32 %v2168, %v2220
    %v2222 = vpop.f32.mrb[0].mxu0
    %v2223 = vadd.f32 %v2170, %v2222
    %v2224 = vpop.f32.mrb[0].mxu0
    %v2225 = vadd.f32 %v2172, %v2224
    %v2226 = vpop.f32.mrb[0].mxu0
    %v2227 = vadd.f32 %v2174, %v2226
    %2228 = vdwg.mxu0
    %v2229 = vadd.f32 %v2052, %v2056
    %v2230 = vadd.f32 %v2229, %v2062
    %v2231 = vadd.f32 %v2230, %v2066
    %v2232 = vrot.slane %v2231, 4
    %v2233 = vadd.f32 %v2231, %v2232
    %v2234 = vrot.slane %v2233, 2
    %v2235 = vadd.f32 %v2233, %v2234
    %v2236 = vrot.slane %v2235, 1
    %v2237 = vadd.f32 %v2235, %v2236
    %v2238 = vadd.f32 %v2054, %v2058
    %v2239 = vadd.f32 %v2238, %v2064
    %v2240 = vadd.f32 %v2239, %v2068
    %v2241 = vrot.slane %v2240, 4
    %v2242 = vadd.f32 %v2240, %v2241
    %v2243 = vrot.slane %v2242, 2
    %v2244 = vadd.f32 %v2242, %v2243
    %v2245 = vrot.slane %v2244, 1
    %v2246 = vadd.f32 %v2244, %v2245
    %v2247 = vadd.f32 %v2211, %v2215
    %v2248 = vadd.f32 %v2247, %v2221
    %v2249 = vadd.f32 %v2248, %v2225
    %v2250 = vrot.slane %v2249, 4
    %v2251 = vadd.f32 %v2249, %v2250
    %v2252 = vrot.slane %v2251, 2
    %v2253 = vadd.f32 %v2251, %v2252
    %v2254 = vrot.slane %v2253, 1
    %v2255 = vadd.f32 %v2253, %v2254
    %v2256 = vadd.f32 %v2213, %v2217
    %v2257 = vadd.f32 %v2256, %v2223
    %v2258 = vadd.f32 %v2257, %v2227
    %v2259 = vrot.slane %v2258, 4
    %v2260 = vadd.f32 %v2258, %v2259
    %v2261 = vrot.slane %v2260, 2
    %v2262 = vadd.f32 %v2260, %v2261
    %v2263 = vrot.slane %v2262, 1
    %v2264 = vadd.f32 %v2262, %v2263
    %v2265 = vrcp.pop 32.0
    %v2266 = vmul.f32 %v2237, %v2265
    %v2267 = vmul.f32 %v2246, %v2265
    %v2268 = vmul.f32 %v2255, %v2265
    %v2269 = vmul.f32 %v2264, %v2265
    %v2270 = vmax.f32 %v2052, %v2056
    %v2271 = vmax.f32 %v2270, %v2062
    %v2272 = vmax.f32 %v2271, %v2066
    %v2273 = vrot.slane %v2272, 4
    %v2274 = vmax.f32 %v2272, %v2273
    %v2275 = vrot.slane %v2274, 2
    %v2276 = vmax.f32 %v2274, %v2275
    %v2277 = vrot.slane %v2276, 1
    %v2278 = vmax.f32 %v2276, %v2277
    %v2279 = vmax.f32 %v2054, %v2058
    %v2280 = vmax.f32 %v2279, %v2064
    %v2281 = vmax.f32 %v2280, %v2068
    %v2282 = vrot.slane %v2281, 4
    %v2283 = vmax.f32 %v2281, %v2282
    %v2284 = vrot.slane %v2283, 2
    %v2285 = vmax.f32 %v2283, %v2284
    %v2286 = vrot.slane %v2285, 1
    %v2287 = vmax.f32 %v2285, %v2286
    %v2288 = vmax.f32 %v2211, %v2215
    %v2289 = vmax.f32 %v2288, %v2221
    %v2290 = vmax.f32 %v2289, %v2225
    %v2291 = vrot.slane %v2290, 4
    %v2292 = vmax.f32 %v2290, %v2291
    %v2293 = vrot.slane %v2292, 2
    %v2294 = vmax.f32 %v2292, %v2293
    %v2295 = vrot.slane %v2294, 1
    %v2296 = vmax.f32 %v2294, %v2295
    %v2297 = vmax.f32 %v2213, %v2217
    %v2298 = vmax.f32 %v2297, %v2223
    %v2299 = vmax.f32 %v2298, %v2227
    %v2300 = vrot.slane %v2299, 4
    %v2301 = vmax.f32 %v2299, %v2300
    %v2302 = vrot.slane %v2301, 2
    %v2303 = vmax.f32 %v2301, %v2302
    %v2304 = vrot.slane %v2303, 1
    %v2305 = vmax.f32 %v2303, %v2304
    %2306 = vrot.lane.b32.xlu0 %v2266, 17
    %v2307 = vpop.permute.xlu0 %2306
    %2308 = vrot.lane.b32.xlu0 %v2267, 17
    %v2309 = vpop.permute.xlu0 %2308
    %2310 = vrot.lane.b32.xlu0 %v2268, 17
    %v2311 = vpop.permute.xlu0 %2310
    %2312 = vrot.lane.b32.xlu0 %v2269, 17
    %v2313 = vpop.permute.xlu0 %2312
    %v2314 = vsel %vm172, %v2311, %v2313
    %v2315 = vsel %vm172, %v2309, %v2311
    %v2316 = vsel %vm172, %v2307, %v2309
    %v2317 = vsel %vm172, %v2313, %v2307
    %2318 = vrot.lane.b32.xlu0 %v2278, 17
    %v2319 = vpop.permute.xlu0 %2318
    %2320 = vrot.lane.b32.xlu0 %v2287, 17
    %v2321 = vpop.permute.xlu0 %2320
    %2322 = vrot.lane.b32.xlu0 %v2296, 17
    %v2323 = vpop.permute.xlu0 %2322
    %2324 = vrot.lane.b32.xlu0 %v2305, 17
    %v2325 = vpop.permute.xlu0 %2324
    %v2326 = vsel %vm172, %v2323, %v2325
    %v2327 = vsel %vm172, %v2321, %v2323
    %v2328 = vsel %vm172, %v2319, %v2321
    %v2329 = vsel %vm172, %v2325, %v2319
    %v2330 = vld [vmem:[#allocation9] ss:$8 sm:$0xf]
    %s2331 = sld [smem:[#allocation13]]
    %v2332 = vstv %s2331
    %v2333 = vmul.f32 %v2332, %v2317
    %v2334 = vmul.f32 %v2332, %v2316
    %v2335 = vmul.f32 %v2332, %v2315
    %v2336 = vmul.f32 %v2332, %v2314
    %s2337 = sld [smem:[#allocation13 + $0x1]]
    %v2338 = vstv %s2337
    %v2339 = vmul.f32 %v2338, %v2329
    %v2340 = vmul.f32 %v2338, %v2328
    %v2341 = vmul.f32 %v2338, %v2327
    %v2342 = vmul.f32 %v2338, %v2326
    %v2343 = vadd.f32 %v2333, %v2339
    %v2344 = vadd.f32 %v2334, %v2340
    %v2345 = vadd.f32 %v2335, %v2341
    %v2346 = vadd.f32 %v2336, %v2342
    %v2351 = vcombine.low %v2343, %v2344
    %v2352 = vcombine.low %v2345, %v2346
    %v2354 = vunpack.c.l.s4 1966171168
    %v2355 = vunpack.c.0.s8 %v2354
    %v2356 = vlaneseq
    %v2357 = vshrl.u32 %v2356, 7
    %v2358 = vsub.s32 %v2355, %v2357
    %v2359 = vrot.slane %v2351, %v2358
    %v2361 = vunpack.c.l.s4 1966171168
    %v2362 = vunpack.c.0.s8 %v2361
    %v2363 = vlaneseq
    %v2364 = vshrl.u32 %v2363, 7
    %v2365 = vsub.s32 %v2362, %v2364
    %v2366 = vrot.slane %v2352, %v2365
    %v2367 = vcombine.low %v2359, %v2366
    %v2369 = vunpack.c.l.s4 1966171168
    %v2370 = vunpack.c.0.s8 %v2369
    %v2371 = vlaneseq
    %v2372 = vshrl.u32 %v2371, 7
    %v2373 = vsub.s32 %v2370, %v2372
    %v2374 = vrot.slane %v2367, %v2373
    %v2376 = vmul.f32 %v2330, %v2374
    %v2377 = vadd.f32 %v2376, 0.0
    %2378 = vrot.lane.b32.xlu0 %v2266, 16
    %v2379 = vpop.permute.xlu0 %2378
    %2380 = vrot.lane.b32.xlu0 %v2267, 16
    %v2381 = vpop.permute.xlu0 %2380
    %2382 = vrot.lane.b32.xlu0 %v2268, 16
    %v2383 = vpop.permute.xlu0 %2382
    %2384 = vrot.lane.b32.xlu0 %v2269, 16
    %v2385 = vpop.permute.xlu0 %2384
    %v2386 = vsel %vm355, %v2383, %v2385
    %v2387 = vsel %vm355, %v2381, %v2383
    %v2388 = vsel %vm355, %v2379, %v2381
    %v2389 = vsel %vm355, %v2385, %v2379
    %2390 = vrot.lane.b32.xlu0 %v2278, 16
    %v2391 = vpop.permute.xlu0 %2390
    %2392 = vrot.lane.b32.xlu0 %v2287, 16
    %v2393 = vpop.permute.xlu0 %2392
    %2394 = vrot.lane.b32.xlu0 %v2296, 16
    %v2395 = vpop.permute.xlu0 %2394
    %2396 = vrot.lane.b32.xlu0 %v2305, 16
    %v2397 = vpop.permute.xlu0 %2396
    %v2398 = vsel %vm355, %v2395, %v2397
    %v2399 = vsel %vm355, %v2393, %v2395
    %v2400 = vsel %vm355, %v2391, %v2393
    %v2401 = vsel %vm355, %v2397, %v2391
    %v2402 = vld [vmem:[%s420] ss:$8 sm:$0xf]
    %s2403 = sld [smem:[#allocation13 + $0x2]]
    %v2404 = vstv %s2403
    %v2405 = vmul.f32 %v2404, %v2389
    %v2406 = vmul.f32 %v2404, %v2388
    %v2407 = vmul.f32 %v2404, %v2387
    %v2408 = vmul.f32 %v2404, %v2386
    %s2409 = sld [smem:[#allocation13 + $0x3]]
    %v2410 = vstv %s2409
    %v2411 = vmul.f32 %v2410, %v2401
    %v2412 = vmul.f32 %v2410, %v2400
    %v2413 = vmul.f32 %v2410, %v2399
    %v2414 = vmul.f32 %v2410, %v2398
    %v2415 = vadd.f32 %v2405, %v2411
    %v2416 = vadd.f32 %v2406, %v2412
    %v2417 = vadd.f32 %v2407, %v2413
    %v2418 = vadd.f32 %v2408, %v2414
    %v2423 = vcombine.low %v2415, %v2416
    %v2424 = vcombine.low %v2417, %v2418
    %v2426 = vunpack.c.l.s4 1966171168
    %v2427 = vunpack.c.0.s8 %v2426
    %v2428 = vlaneseq
    %v2429 = vshrl.u32 %v2428, 7
    %v2430 = vsub.s32 %v2427, %v2429
    %v2431 = vrot.slane %v2423, %v2430
    %v2433 = vunpack.c.l.s4 1966171168
    %v2434 = vunpack.c.0.s8 %v2433
    %v2435 = vlaneseq
    %v2436 = vshrl.u32 %v2435, 7
    %v2437 = vsub.s32 %v2434, %v2436
    %v2438 = vrot.slane %v2424, %v2437
    %v2439 = vcombine.low %v2431, %v2438
    %v2441 = vunpack.c.l.s4 1966171168
    %v2442 = vunpack.c.0.s8 %v2441
    %v2443 = vlaneseq
    %v2444 = vshrl.u32 %v2443, 7
    %v2445 = vsub.s32 %v2442, %v2444
    %v2446 = vrot.slane %v2439, %v2445
    %v2448 = vmul.f32 %v2402, %v2446
    %v2449 = vadd.f32 %v2377, %v2448
    %2450 = vrot.lane.b32.xlu0 %v2266, 15
    %v2451 = vpop.permute.xlu0 %2450
    %2452 = vrot.lane.b32.xlu0 %v2267, 15
    %v2453 = vpop.permute.xlu0 %2452
    %2454 = vrot.lane.b32.xlu0 %v2268, 15
    %v2455 = vpop.permute.xlu0 %2454
    %2456 = vrot.lane.b32.xlu0 %v2269, 15
    %v2457 = vpop.permute.xlu0 %2456
    %v2458 = vsel %vm539, %v2455, %v2457
    %v2459 = vsel %vm539, %v2453, %v2455
    %v2460 = vsel %vm539, %v2451, %v2453
    %v2461 = vsel %vm539, %v2457, %v2451
    %2462 = vrot.lane.b32.xlu0 %v2278, 15
    %v2463 = vpop.permute.xlu0 %2462
    %2464 = vrot.lane.b32.xlu0 %v2287, 15
    %v2465 = vpop.permute.xlu0 %2464
    %2466 = vrot.lane.b32.xlu0 %v2296, 15
    %v2467 = vpop.permute.xlu0 %2466
    %2468 = vrot.lane.b32.xlu0 %v2305, 15
    %v2469 = vpop.permute.xlu0 %2468
    %v2470 = vsel %vm539, %v2467, %v2469
    %v2471 = vsel %vm539, %v2465, %v2467
    %v2472 = vsel %vm539, %v2463, %v2465
    %v2473 = vsel %vm539, %v2469, %v2463
    %v2474 = vld [vmem:[%s604] ss:$8 sm:$0xf]
    %s2475 = sld [smem:[#allocation13 + $0x4]]
    %v2476 = vstv %s2475
    %v2477 = vmul.f32 %v2476, %v2461
    %v2478 = vmul.f32 %v2476, %v2460
    %v2479 = vmul.f32 %v2476, %v2459
    %v2480 = vmul.f32 %v2476, %v2458
    %s2481 = sld [smem:[#allocation13 + $0x5]]
    %v2482 = vstv %s2481
    %v2483 = vmul.f32 %v2482, %v2473
    %v2484 = vmul.f32 %v2482, %v2472
    %v2485 = vmul.f32 %v2482, %v2471
    %v2486 = vmul.f32 %v2482, %v2470
    %v2487 = vadd.f32 %v2477, %v2483
    %v2488 = vadd.f32 %v2478, %v2484
    %v2489 = vadd.f32 %v2479, %v2485
    %v2490 = vadd.f32 %v2480, %v2486
    %v2495 = vcombine.low %v2487, %v2488
    %v2496 = vcombine.low %v2489, %v2490
    %v2498 = vunpack.c.l.s4 1966171168
    %v2499 = vunpack.c.0.s8 %v2498
    %v2500 = vlaneseq
    %v2501 = vshrl.u32 %v2500, 7
    %v2502 = vsub.s32 %v2499, %v2501
    %v2503 = vrot.slane %v2495, %v2502
    %v2505 = vunpack.c.l.s4 1966171168
    %v2506 = vunpack.c.0.s8 %v2505
    %v2507 = vlaneseq
    %v2508 = vshrl.u32 %v2507, 7
    %v2509 = vsub.s32 %v2506, %v2508
    %v2510 = vrot.slane %v2496, %v2509
    %v2511 = vcombine.low %v2503, %v2510
    %v2513 = vunpack.c.l.s4 1966171168
    %v2514 = vunpack.c.0.s8 %v2513
    %v2515 = vlaneseq
    %v2516 = vshrl.u32 %v2515, 7
    %v2517 = vsub.s32 %v2514, %v2516
    %v2518 = vrot.slane %v2511, %v2517
    %v2520 = vmul.f32 %v2474, %v2518
    %v2521 = vadd.f32 %v2449, %v2520
    %2522 = vrot.lane.b32.xlu0 %v2266, 1
    %v2523 = vpop.permute.xlu0 %2522
    %2524 = vrot.lane.b32.xlu0 %v2267, 1
    %v2525 = vpop.permute.xlu0 %2524
    %2526 = vrot.lane.b32.xlu0 %v2268, 1
    %v2527 = vpop.permute.xlu0 %2526
    %2528 = vrot.lane.b32.xlu0 %v2269, 1
    %v2529 = vpop.permute.xlu0 %2528
    %v2530 = vsel %vm723, %v2527, %v2529
    %v2531 = vsel %vm723, %v2525, %v2527
    %v2532 = vsel %vm723, %v2523, %v2525
    %v2533 = vsel %vm723, %v2529, %v2523
    %2534 = vrot.lane.b32.xlu0 %v2278, 1
    %v2535 = vpop.permute.xlu0 %2534
    %2536 = vrot.lane.b32.xlu0 %v2287, 1
    %v2537 = vpop.permute.xlu0 %2536
    %2538 = vrot.lane.b32.xlu0 %v2296, 1
    %v2539 = vpop.permute.xlu0 %2538
    %2540 = vrot.lane.b32.xlu0 %v2305, 1
    %v2541 = vpop.permute.xlu0 %2540
    %v2542 = vsel %vm723, %v2539, %v2541
    %v2543 = vsel %vm723, %v2537, %v2539
    %v2544 = vsel %vm723, %v2535, %v2537
    %v2545 = vsel %vm723, %v2541, %v2535
    %v2546 = vld [vmem:[%s788] ss:$8 sm:$0xf]
    %s2547 = sld [smem:[#allocation13 + $0x6]]
    %v2548 = vstv %s2547
    %v2549 = vmul.f32 %v2548, %v2533
    %v2550 = vmul.f32 %v2548, %v2532
    %v2551 = vmul.f32 %v2548, %v2531
    %v2552 = vmul.f32 %v2548, %v2530
    %s2553 = sld [smem:[#allocation13 + $0x7]]
    %v2554 = vstv %s2553
    %v2555 = vmul.f32 %v2554, %v2545
    %v2556 = vmul.f32 %v2554, %v2544
    %v2557 = vmul.f32 %v2554, %v2543
    %v2558 = vmul.f32 %v2554, %v2542
    %v2559 = vadd.f32 %v2549, %v2555
    %v2560 = vadd.f32 %v2550, %v2556
    %v2561 = vadd.f32 %v2551, %v2557
    %v2562 = vadd.f32 %v2552, %v2558
    %v2567 = vcombine.low %v2559, %v2560
    %v2568 = vcombine.low %v2561, %v2562
    %v2570 = vunpack.c.l.s4 1966171168
    %v2571 = vunpack.c.0.s8 %v2570
    %v2572 = vlaneseq
    %v2573 = vshrl.u32 %v2572, 7
    %v2574 = vsub.s32 %v2571, %v2573
    %v2575 = vrot.slane %v2567, %v2574
    %v2577 = vunpack.c.l.s4 1966171168
    %v2578 = vunpack.c.0.s8 %v2577
    %v2579 = vlaneseq
    %v2580 = vshrl.u32 %v2579, 7
    %v2581 = vsub.s32 %v2578, %v2580
    %v2582 = vrot.slane %v2568, %v2581
    %v2583 = vcombine.low %v2575, %v2582
    %v2585 = vunpack.c.l.s4 1966171168
    %v2586 = vunpack.c.0.s8 %v2585
    %v2587 = vlaneseq
    %v2588 = vshrl.u32 %v2587, 7
    %v2589 = vsub.s32 %v2586, %v2588
    %v2590 = vrot.slane %v2583, %v2589
    %v2592 = vmul.f32 %v2546, %v2590
    %v2593 = vadd.f32 %v2521, %v2592
    %v2594 = vld [vmem:[%s875] ss:$8 sm:$0xf]
    %s2595 = sld [smem:[#allocation13 + $0x8]]
    %v2596 = vstv %s2595
    %v2597 = vmul.f32 %v2596, %v2266
    %v2598 = vmul.f32 %v2596, %v2267
    %v2599 = vmul.f32 %v2596, %v2268
    %v2600 = vmul.f32 %v2596, %v2269
    %s2601 = sld [smem:[#allocation13 + $0x9]]
    %v2602 = vstv %s2601
    %v2603 = vmul.f32 %v2602, %v2278
    %v2604 = vmul.f32 %v2602, %v2287
    %v2605 = vmul.f32 %v2602, %v2296
    %v2606 = vmul.f32 %v2602, %v2305
    %v2607 = vadd.f32 %v2597, %v2603
    %v2608 = vadd.f32 %v2598, %v2604
    %v2609 = vadd.f32 %v2599, %v2605
    %v2610 = vadd.f32 %v2600, %v2606
    %v2615 = vcombine.low %v2607, %v2608
    %v2616 = vcombine.low %v2609, %v2610
    %v2618 = vunpack.c.l.s4 1966171168
    %v2619 = vunpack.c.0.s8 %v2618
    %v2620 = vlaneseq
    %v2621 = vshrl.u32 %v2620, 7
    %v2622 = vsub.s32 %v2619, %v2621
    %v2623 = vrot.slane %v2615, %v2622
    %v2625 = vunpack.c.l.s4 1966171168
    %v2626 = vunpack.c.0.s8 %v2625
    %v2627 = vlaneseq
    %v2628 = vshrl.u32 %v2627, 7
    %v2629 = vsub.s32 %v2626, %v2628
    %v2630 = vrot.slane %v2616, %v2629
    %v2631 = vcombine.low %v2623, %v2630
    %v2633 = vunpack.c.l.s4 1966171168
    %v2634 = vunpack.c.0.s8 %v2633
    %v2635 = vlaneseq
    %v2636 = vshrl.u32 %v2635, 7
    %v2637 = vsub.s32 %v2634, %v2636
    %v2638 = vrot.slane %v2631, %v2637
    %v2640 = vmul.f32 %v2594, %v2638
    %v2641 = vadd.f32 %v2593, %v2640
    %2642 = vrot.lane.b32.xlu0 %v2266, 127
    %v2643 = vpop.permute.xlu0 %2642
    %2644 = vrot.lane.b32.xlu0 %v2267, 127
    %v2645 = vpop.permute.xlu0 %2644
    %2646 = vrot.lane.b32.xlu0 %v2268, 127
    %v2647 = vpop.permute.xlu0 %2646
    %2648 = vrot.lane.b32.xlu0 %v2269, 127
    %v2649 = vpop.permute.xlu0 %2648
    %v2650 = vsel %vm994, %v2647, %v2649
    %v2651 = vsel %vm994, %v2645, %v2647
    %v2652 = vsel %vm994, %v2643, %v2645
    %v2653 = vsel %vm994, %v2649, %v2643
    %2654 = vrot.lane.b32.xlu0 %v2278, 127
    %v2655 = vpop.permute.xlu0 %2654
    %2656 = vrot.lane.b32.xlu0 %v2287, 127
    %v2657 = vpop.permute.xlu0 %2656
    %2658 = vrot.lane.b32.xlu0 %v2296, 127
    %v2659 = vpop.permute.xlu0 %2658
    %2660 = vrot.lane.b32.xlu0 %v2305, 127
    %v2661 = vpop.permute.xlu0 %2660
    %v2662 = vsel %vm994, %v2659, %v2661
    %v2663 = vsel %vm994, %v2657, %v2659
    %v2664 = vsel %vm994, %v2655, %v2657
    %v2665 = vsel %vm994, %v2661, %v2655
    %v2666 = vld [vmem:[%s1059] ss:$8 sm:$0xf]
    %s2667 = sld [smem:[#allocation13 + $0xa]]
    %v2668 = vstv %s2667
    %v2669 = vmul.f32 %v2668, %v2652
    %v2670 = vmul.f32 %v2668, %v2651
    %v2671 = vmul.f32 %v2668, %v2650
    %v2672 = vmul.f32 %v2668, %v2653
    %s2673 = sld [smem:[#allocation13 + $0xb]]
    %v2674 = vstv %s2673
    %v2675 = vmul.f32 %v2674, %v2664
    %v2676 = vmul.f32 %v2674, %v2663
    %v2677 = vmul.f32 %v2674, %v2662
    %v2678 = vmul.f32 %v2674, %v2665
    %v2679 = vadd.f32 %v2669, %v2675
    %v2680 = vadd.f32 %v2670, %v2676
    %v2681 = vadd.f32 %v2671, %v2677
    %v2682 = vadd.f32 %v2672, %v2678
    %v2687 = vcombine.low %v2679, %v2680
    %v2688 = vcombine.low %v2681, %v2682
    %v2690 = vunpack.c.l.s4 1966171168
    %v2691 = vunpack.c.0.s8 %v2690
    %v2692 = vlaneseq
    %v2693 = vshrl.u32 %v2692, 7
    %v2694 = vsub.s32 %v2691, %v2693
    %v2695 = vrot.slane %v2687, %v2694
    %v2697 = vunpack.c.l.s4 1966171168
    %v2698 = vunpack.c.0.s8 %v2697
    %v2699 = vlaneseq
    %v2700 = vshrl.u32 %v2699, 7
    %v2701 = vsub.s32 %v2698, %v2700
    %v2702 = vrot.slane %v2688, %v2701
    %v2703 = vcombine.low %v2695, %v2702
    %v2705 = vunpack.c.l.s4 1966171168
    %v2706 = vunpack.c.0.s8 %v2705
    %v2707 = vlaneseq
    %v2708 = vshrl.u32 %v2707, 7
    %v2709 = vsub.s32 %v2706, %v2708
    %v2710 = vrot.slane %v2703, %v2709
    %v2712 = vmul.f32 %v2666, %v2710
    %v2713 = vadd.f32 %v2641, %v2712
    %2714 = vrot.lane.b32.xlu0 %v2266, 113
    %v2715 = vpop.permute.xlu0 %2714
    %2716 = vrot.lane.b32.xlu0 %v2267, 113
    %v2717 = vpop.permute.xlu0 %2716
    %2718 = vrot.lane.b32.xlu0 %v2268, 113
    %v2719 = vpop.permute.xlu0 %2718
    %2720 = vrot.lane.b32.xlu0 %v2269, 113
    %v2721 = vpop.permute.xlu0 %2720
    %v2722 = vsel %vm1178, %v2719, %v2721
    %v2723 = vsel %vm1178, %v2717, %v2719
    %v2724 = vsel %vm1178, %v2715, %v2717
    %v2725 = vsel %vm1178, %v2721, %v2715
    %2726 = vrot.lane.b32.xlu0 %v2278, 113
    %v2727 = vpop.permute.xlu0 %2726
    %2728 = vrot.lane.b32.xlu0 %v2287, 113
    %v2729 = vpop.permute.xlu0 %2728
    %2730 = vrot.lane.b32.xlu0 %v2296, 113
    %v2731 = vpop.permute.xlu0 %2730
    %2732 = vrot.lane.b32.xlu0 %v2305, 113
    %v2733 = vpop.permute.xlu0 %2732
    %v2734 = vsel %vm1178, %v2731, %v2733
    %v2735 = vsel %vm1178, %v2729, %v2731
    %v2736 = vsel %vm1178, %v2727, %v2729
    %v2737 = vsel %vm1178, %v2733, %v2727
    %v2738 = vld [vmem:[%s1243] ss:$8 sm:$0xf]
    %s2739 = sld [smem:[#allocation13 + $0xc]]
    %v2740 = vstv %s2739
    %v2741 = vmul.f32 %v2740, %v2724
    %v2742 = vmul.f32 %v2740, %v2723
    %v2743 = vmul.f32 %v2740, %v2722
    %v2744 = vmul.f32 %v2740, %v2725
    %s2745 = sld [smem:[#allocation13 + $0xd]]
    %v2746 = vstv %s2745
    %v2747 = vmul.f32 %v2746, %v2736
    %v2748 = vmul.f32 %v2746, %v2735
    %v2749 = vmul.f32 %v2746, %v2734
    %v2750 = vmul.f32 %v2746, %v2737
    %v2751 = vadd.f32 %v2741, %v2747
    %v2752 = vadd.f32 %v2742, %v2748
    %v2753 = vadd.f32 %v2743, %v2749
    %v2754 = vadd.f32 %v2744, %v2750
    %v2759 = vcombine.low %v2751, %v2752
    %v2760 = vcombine.low %v2753, %v2754
    %v2762 = vunpack.c.l.s4 1966171168
    %v2763 = vunpack.c.0.s8 %v2762
    %v2764 = vlaneseq
    %v2765 = vshrl.u32 %v2764, 7
    %v2766 = vsub.s32 %v2763, %v2765
    %v2767 = vrot.slane %v2759, %v2766
    %v2769 = vunpack.c.l.s4 1966171168
    %v2770 = vunpack.c.0.s8 %v2769
    %v2771 = vlaneseq
    %v2772 = vshrl.u32 %v2771, 7
    %v2773 = vsub.s32 %v2770, %v2772
    %v2774 = vrot.slane %v2760, %v2773
    %v2775 = vcombine.low %v2767, %v2774
    %v2777 = vunpack.c.l.s4 1966171168
    %v2778 = vunpack.c.0.s8 %v2777
    %v2779 = vlaneseq
    %v2780 = vshrl.u32 %v2779, 7
    %v2781 = vsub.s32 %v2778, %v2780
    %v2782 = vrot.slane %v2775, %v2781
    %v2784 = vmul.f32 %v2738, %v2782
    %v2785 = vadd.f32 %v2713, %v2784
    %2786 = vrot.lane.b32.xlu0 %v2266, 112
    %v2787 = vpop.permute.xlu0 %2786
    %2788 = vrot.lane.b32.xlu0 %v2267, 112
    %v2789 = vpop.permute.xlu0 %2788
    %2790 = vrot.lane.b32.xlu0 %v2268, 112
    %v2791 = vpop.permute.xlu0 %2790
    %2792 = vrot.lane.b32.xlu0 %v2269, 112
    %v2793 = vpop.permute.xlu0 %2792
    %v2794 = vsel %vm1362, %v2791, %v2793
    %v2795 = vsel %vm1362, %v2789, %v2791
    %v2796 = vsel %vm1362, %v2787, %v2789
    %v2797 = vsel %vm1362, %v2793, %v2787
    %2798 = vrot.lane.b32.xlu0 %v2278, 112
    %v2799 = vpop.permute.xlu0 %2798
    %2800 = vrot.lane.b32.xlu0 %v2287, 112
    %v2801 = vpop.permute.xlu0 %2800
    %2802 = vrot.lane.b32.xlu0 %v2296, 112
    %v2803 = vpop.permute.xlu0 %2802
    %2804 = vrot.lane.b32.xlu0 %v2305, 112
    %v2805 = vpop.permute.xlu0 %2804
    %v2806 = vsel %vm1362, %v2803, %v2805
    %v2807 = vsel %vm1362, %v2801, %v2803
    %v2808 = vsel %vm1362, %v2799, %v2801
    %v2809 = vsel %vm1362, %v2805, %v2799
    %v2810 = vld [vmem:[%s1427] ss:$8 sm:$0xf]
    %s2811 = sld [smem:[#allocation13 + $0xe]]
    %v2812 = vstv %s2811
    %v2813 = vmul.f32 %v2812, %v2796
    %v2814 = vmul.f32 %v2812, %v2795
    %v2815 = vmul.f32 %v2812, %v2794
    %v2816 = vmul.f32 %v2812, %v2797
    %s2817 = sld [smem:[#allocation13 + $0xf]]
    %v2818 = vstv %s2817
    %v2819 = vmul.f32 %v2818, %v2808
    %v2820 = vmul.f32 %v2818, %v2807
    %v2821 = vmul.f32 %v2818, %v2806
    %v2822 = vmul.f32 %v2818, %v2809
    %v2823 = vadd.f32 %v2813, %v2819
    %v2824 = vadd.f32 %v2814, %v2820
    %v2825 = vadd.f32 %v2815, %v2821
    %v2826 = vadd.f32 %v2816, %v2822
    %v2831 = vcombine.low %v2823, %v2824
    %v2832 = vcombine.low %v2825, %v2826
    %v2834 = vunpack.c.l.s4 1966171168
    %v2835 = vunpack.c.0.s8 %v2834
    %v2836 = vlaneseq
    %v2837 = vshrl.u32 %v2836, 7
    %v2838 = vsub.s32 %v2835, %v2837
    %v2839 = vrot.slane %v2831, %v2838
    %v2841 = vunpack.c.l.s4 1966171168
    %v2842 = vunpack.c.0.s8 %v2841
    %v2843 = vlaneseq
    %v2844 = vshrl.u32 %v2843, 7
    %v2845 = vsub.s32 %v2842, %v2844
    %v2846 = vrot.slane %v2832, %v2845
    %v2847 = vcombine.low %v2839, %v2846
    %v2849 = vunpack.c.l.s4 1966171168
    %v2850 = vunpack.c.0.s8 %v2849
    %v2851 = vlaneseq
    %v2852 = vshrl.u32 %v2851, 7
    %v2853 = vsub.s32 %v2850, %v2852
    %v2854 = vrot.slane %v2847, %v2853
    %v2856 = vmul.f32 %v2810, %v2854
    %v2857 = vadd.f32 %v2785, %v2856
    %2858 = vrot.lane.b32.xlu0 %v2266, 111
    %v2859 = vpop.permute.xlu0 %2858
    %2860 = vrot.lane.b32.xlu0 %v2267, 111
    %v2861 = vpop.permute.xlu0 %2860
    %2862 = vrot.lane.b32.xlu0 %v2268, 111
    %v2863 = vpop.permute.xlu0 %2862
    %2864 = vrot.lane.b32.xlu0 %v2269, 111
    %v2865 = vpop.permute.xlu0 %2864
    %v2866 = vsel %vm1546, %v2863, %v2865
    %v2867 = vsel %vm1546, %v2861, %v2863
    %v2868 = vsel %vm1546, %v2859, %v2861
    %v2869 = vsel %vm1546, %v2865, %v2859
    %2870 = vrot.lane.b32.xlu0 %v2278, 111
    %v2871 = vpop.permute.xlu0 %2870
    %2872 = vrot.lane.b32.xlu0 %v2287, 111
    %v2873 = vpop.permute.xlu0 %2872
    %2874 = vrot.lane.b32.xlu0 %v2296, 111
    %v2875 = vpop.permute.xlu0 %2874
    %2876 = vrot.lane.b32.xlu0 %v2305, 111
    %v2877 = vpop.permute.xlu0 %2876
    %v2878 = vsel %vm1546, %v2875, %v2877
    %v2879 = vsel %vm1546, %v2873, %v2875
    %v2880 = vsel %vm1546, %v2871, %v2873
    %v2881 = vsel %vm1546, %v2877, %v2871
    %v2882 = vld [vmem:[%s1611] ss:$8 sm:$0xf]
    %s2883 = sld [smem:[#allocation13 + $0x10]]
    %v2884 = vstv %s2883
    %v2885 = vmul.f32 %v2884, %v2868
    %v2886 = vmul.f32 %v2884, %v2867
    %v2887 = vmul.f32 %v2884, %v2866
    %v2888 = vmul.f32 %v2884, %v2869
    %s2889 = sld [smem:[#allocation13 + $0x11]]
    %v2890 = vstv %s2889
    %v2891 = vmul.f32 %v2890, %v2880
    %v2892 = vmul.f32 %v2890, %v2879
    %v2893 = vmul.f32 %v2890, %v2878
    %v2894 = vmul.f32 %v2890, %v2881
    %v2895 = vadd.f32 %v2885, %v2891
    %v2896 = vadd.f32 %v2886, %v2892
    %v2897 = vadd.f32 %v2887, %v2893
    %v2898 = vadd.f32 %v2888, %v2894
    %v2903 = vcombine.low %v2895, %v2896
    %v2904 = vcombine.low %v2897, %v2898
    %v2906 = vunpack.c.l.s4 1966171168
    %v2907 = vunpack.c.0.s8 %v2906
    %v2908 = vlaneseq
    %v2909 = vshrl.u32 %v2908, 7
    %v2910 = vsub.s32 %v2907, %v2909
    %v2911 = vrot.slane %v2903, %v2910
    %v2913 = vunpack.c.l.s4 1966171168
    %v2914 = vunpack.c.0.s8 %v2913
    %v2915 = vlaneseq
    %v2916 = vshrl.u32 %v2915, 7
    %v2917 = vsub.s32 %v2914, %v2916
    %v2918 = vrot.slane %v2904, %v2917
    %v2919 = vcombine.low %v2911, %v2918
    %v2921 = vunpack.c.l.s4 1966171168
    %v2922 = vunpack.c.0.s8 %v2921
    %v2923 = vlaneseq
    %v2924 = vshrl.u32 %v2923, 7
    %v2925 = vsub.s32 %v2922, %v2924
    %v2926 = vrot.slane %v2919, %v2925
    %v2928 = vmul.f32 %v2882, %v2926
    %v2929 = vadd.f32 %v2857, %v2928
    %v2930 = vxor.u32 %v2929, 2147483648
    %v2931 = vmul.f32 %v2930, 1.442695
    %v2932 = vpow.pop %v2931
    %v2933 = vadd.f32 %v2932, 1.0
    %v2934 = vrcp.pop %v2933
    %v2935 = vmul.f32 1.0, %v2934
    %v2936 = vld [vmem:[#allocation12] sm:$0xff]
    %v2937 = vld [vmem:[#allocation12 + $0x8] sm:$0xf]
    %v2938 = vld [vmem:[#allocation12 + $0xc] sm:$0xff]
    %v2939 = vld [vmem:[#allocation12 + $0x14] sm:$0xf]
    %v2940 = vld [vmem:[#allocation12 + $0x18] sm:$0xff]
    %v2941 = vld [vmem:[#allocation12 + $0x20] sm:$0xf]
    %v2942 = vld [vmem:[#allocation12 + $0x24] sm:$0xff]
    %v2943 = vld [vmem:[#allocation12 + $0x2c] sm:$0xf]
    %v2944 = vld [vmem:[#allocation2 + $0x240] sm:$0xff]
    %v2945 = vld [vmem:[#allocation2 + $0x248] sm:$0xff]
    %v2946 = vld [vmem:[#allocation2 + $0x250] sm:$0xff]
    %v2947 = vld [vmem:[#allocation2 + $0x258] sm:$0xff]
    %v2948 = vld [vmem:[#allocation2 + $0x260] sm:$0xff]
    %v2949 = vld [vmem:[#allocation2 + $0x268] sm:$0xff]
    %v2950 = vld [vmem:[#allocation2 + $0x270] sm:$0xff]
    %v2951 = vld [vmem:[#allocation2 + $0x278] sm:$0xff]
    %v2952 = vld [vmem:[#allocation2 + $0x280] sm:$0xff]
    %v2953 = vld [vmem:[#allocation2 + $0x288] sm:$0xff]
    %v2954 = vld [vmem:[#allocation2 + $0x290] sm:$0xff]
    %v2955 = vld [vmem:[#allocation2 + $0x298] sm:$0xff]
    %v2956 = vld [vmem:[#allocation2 + $0x2a0] sm:$0xff]
    %v2957 = vld [vmem:[#allocation2 + $0x2a8] sm:$0xff]
    %v2958 = vld [vmem:[#allocation2 + $0x2b0] sm:$0xff]
    %v2959 = vld [vmem:[#allocation2 + $0x2b8] sm:$0xff]
    %v2960 = vld [vmem:[#allocation2 + $0x2c0] sm:$0xff]
    %v2961 = vld [vmem:[#allocation2 + $0x2c8] sm:$0xff]
    %v2962 = vld [vmem:[#allocation2 + $0x2d0] sm:$0xff]
    %v2963 = vld [vmem:[#allocation2 + $0x2d8] sm:$0xff]
    %v2964 = vld [vmem:[#allocation2 + $0x2e0] sm:$0xff]
    %v2965 = vld [vmem:[#allocation2 + $0x2e8] sm:$0xff]
    %v2966 = vld [vmem:[#allocation2 + $0x2f0] sm:$0xff]
    %v2967 = vld [vmem:[#allocation2 + $0x2f8] sm:$0xff]
    %v2968 = vld [vmem:[#allocation2 + $0x300] sm:$0xff]
    %v2969 = vld [vmem:[#allocation2 + $0x308] sm:$0xff]
    %v2970 = vld [vmem:[#allocation2 + $0x310] sm:$0xff]
    %v2971 = vld [vmem:[#allocation2 + $0x318] sm:$0xff]
    %v2972 = vld [vmem:[#allocation2 + $0x320] sm:$0xff]
    %v2973 = vld [vmem:[#allocation2 + $0x328] sm:$0xff]
    %v2974 = vld [vmem:[#allocation2 + $0x330] sm:$0xff]
    %v2975 = vld [vmem:[#allocation2 + $0x338] sm:$0xff]
    %v2976 = vld [vmem:[#allocation2 + $0x340] sm:$0xff]
    %v2977 = vld [vmem:[#allocation2 + $0x348] sm:$0xff]
    %v2978 = vld [vmem:[#allocation2 + $0x350] sm:$0xff]
    %v2979 = vld [vmem:[#allocation2 + $0x358] sm:$0xff]
    %v2980 = vld [vmem:[#allocation2 + $0x360] sm:$0xff]
    %v2981 = vld [vmem:[#allocation2 + $0x368] sm:$0xff]
    %v2982 = vld [vmem:[#allocation2 + $0x370] sm:$0xff]
    %v2983 = vld [vmem:[#allocation2 + $0x378] sm:$0xff]
    %v2984 = vld [vmem:[#allocation2 + $0x380] sm:$0xff]
    %v2985 = vld [vmem:[#allocation2 + $0x388] sm:$0xff]
    %v2986 = vld [vmem:[#allocation2 + $0x390] sm:$0xff]
    %v2987 = vld [vmem:[#allocation2 + $0x398] sm:$0xff]
    %v2988 = vld [vmem:[#allocation2 + $0x3a0] sm:$0xff]
    %v2989 = vld [vmem:[#allocation2 + $0x3a8] sm:$0xff]
    %v2990 = vld [vmem:[#allocation2 + $0x3b0] sm:$0xff]
    %v2991 = vld [vmem:[#allocation2 + $0x3b8] sm:$0xff]
    %v2992 = vld [vmem:[#allocation2 + $0x3c0] sm:$0xff]
    %v2993 = vld [vmem:[#allocation2 + $0x3c8] sm:$0xff]
    %v2994 = vld [vmem:[#allocation2 + $0x3d0] sm:$0xff]
    %v2995 = vld [vmem:[#allocation2 + $0x3d8] sm:$0xff]
    %v2996 = vld [vmem:[#allocation2 + $0x3e0] sm:$0xff]
    %v2997 = vld [vmem:[#allocation2 + $0x3e8] sm:$0xff]
    %v2998 = vld [vmem:[#allocation2 + $0x3f0] sm:$0xff]
    %v2999 = vld [vmem:[#allocation2 + $0x3f8] sm:$0xff]
    %v3000 = vld [vmem:[#allocation2 + $0x400] sm:$0xff]
    %v3001 = vld [vmem:[#allocation2 + $0x408] sm:$0xff]
    %v3002 = vld [vmem:[#allocation2 + $0x410] sm:$0xff]
    %v3003 = vld [vmem:[#allocation2 + $0x418] sm:$0xff]
    %v3004 = vld [vmem:[#allocation2 + $0x420] sm:$0xff]
    %v3005 = vld [vmem:[#allocation2 + $0x428] sm:$0xff]
    %v3006 = vld [vmem:[#allocation2 + $0x430] sm:$0xff]
    %v3007 = vld [vmem:[#allocation2 + $0x438] sm:$0xff]
    %v3008 = vld [vmem:[#allocation2 + $0x440] sm:$0xff]
    %v3009 = vld [vmem:[#allocation2 + $0x448] sm:$0xff]
    %v3010 = vld [vmem:[#allocation2 + $0x450] sm:$0xff]
    %v3011 = vld [vmem:[#allocation2 + $0x458] sm:$0xff]
    %v3012 = vld [vmem:[#allocation2 + $0x460] sm:$0xff]
    %v3013 = vld [vmem:[#allocation2 + $0x468] sm:$0xff]
    %v3014 = vld [vmem:[#allocation2 + $0x470] sm:$0xff]
    %v3015 = vld [vmem:[#allocation2 + $0x478] sm:$0xff]
    %v3024 = vunpack.c.l.b16 %v2936
    %v3025 = vunpack.c.h.b16 %v2936
    %v3026 = vunpack.c.l.b16 %v2937
    %v3027 = vunpack.c.l.b16 %v2938
    %v3028 = vunpack.c.h.b16 %v2938
    %v3029 = vunpack.c.l.b16 %v2939
    %v3030 = vunpack.c.l.b16 %v2940
    %v3031 = vunpack.c.h.b16 %v2940
    %v3032 = vunpack.c.l.b16 %v2941
    %v3033 = vunpack.c.l.b16 %v2942
    %v3034 = vunpack.c.h.b16 %v2942
    %v3035 = vunpack.c.l.b16 %v2943
    %v3036 = vpack.c.b16 %v3027, %v3024
    %v3037 = vpack.c.b16 %v3028, %v3025
    %v3038 = vpack.c.b16 %v3029, %v3026
    %v3039 = vpack.c.b16 %v3033, %v3030
    %v3040 = vpack.c.b16 %v3034, %v3031
    %v3041 = vpack.c.b16 %v3035, %v3032
    %vm3046 = vcmask 261120
    %v3048 = vsel %vm3046, %v3038, 0
    %v3051 = vsel %vm3046, %v3041, 0
    %3053 = vmatprep.subr.bf16.mxu0 %v2945
    %3054 = vmatpush1.bf16.msra.mxu0 %v2944
    %3055 = vmatprep.subr.bf16.mxu0 %v2949
    %3056 = vmatpush1.bf16.msra.mxu0 %v2948
    %3057 = vmatprep.subr.bf16.mxu0 %v2953
    %3058 = vmatpush1.bf16.msra.mxu0 %v2952
    %3059 = vmatprep.subr.bf16.mxu0 %v2957
    %3060 = vmatpush1.bf16.msra.mxu0 %v2956
    %3061 = vmatprep.subr.bf16.mxu0 %v2961
    %3062 = vmatpush1.bf16.msra.mxu0 %v2960
    %3063 = vmatprep.subr.bf16.mxu0 %v2965
    %3064 = vmatpush1.bf16.msra.mxu0 %v2964
    %3065 = vmatprep.subr.bf16.mxu0 %v2969
    %3066 = vmatpush1.bf16.msra.mxu0 %v2968
    %3067 = vmatprep.subr.bf16.mxu0 %v2973
    %3068 = vmatpush1.bf16.msra.mxu0 %v2972
    %3069 = vmatprep.subr.bf16.mxu0 %v2977
    %3070 = vmatpush1.bf16.msra.mxu0 %v2976
    %3071 = vmatprep.subr.bf16.mxu0 %v2981
    %3072 = vmatpush1.bf16.msra.mxu0 %v2980
    %3073 = vmatprep.subr.bf16.mxu0 %v2985
    %3074 = vmatpush1.bf16.msra.mxu0 %v2984
    %3075 = vmatprep.subr.bf16.mxu0 %v2989
    %3076 = vmatpush1.bf16.msra.mxu0 %v2988
    %3077 = vmatprep.subr.bf16.mxu0 %v2993
    %3078 = vmatpush1.bf16.msra.mxu0 %v2992
    %3079 = vmatprep.subr.bf16.mxu0 %v2997
    %3080 = vmatpush1.bf16.msra.mxu0 %v2996
    %3081 = vmatprep.subr.bf16.mxu0 %v3001
    %3082 = vmatpush1.bf16.msra.mxu0 %v3000
    %3083 = vmatprep.subr.bf16.mxu0 %v3005
    %3084 = vmatpush1.bf16.msra.mxu0 %v3004
    %3085 = vmatprep.mubr.bf16.mxu0 %v3037
    %3086 = vmatmul.mubr.bf16.gmra.mrb[0].mxu0 %v3036
    %v3087 = vpop.f32.mrb[0].mxu0
    %v3088 = vadd.f32 0.0, %v3087
    %v3089 = vpop.f32.mrb[0].mxu0
    %v3090 = vadd.f32 0.0, %v3089
    %v3091 = vpop.f32.mrb[0].mxu0
    %v3092 = vadd.f32 0.0, %v3091
    %v3093 = vpop.f32.mrb[0].mxu0
    %v3094 = vadd.f32 0.0, %v3093
    %3095 = vmatprep.mubr.bf16.mxu0 %v3040
    %3096 = vmatmul.mubr.bf16.gmra.mrb[0].mxu0 %v3039
    %v3097 = vpop.f32.mrb[0].mxu0
    %v3098 = vadd.f32 0.0, %v3097
    %v3099 = vpop.f32.mrb[0].mxu0
    %v3100 = vadd.f32 0.0, %v3099
    %v3101 = vpop.f32.mrb[0].mxu0
    %v3102 = vadd.f32 0.0, %v3101
    %v3103 = vpop.f32.mrb[0].mxu0
    %v3104 = vadd.f32 0.0, %v3103
    %3105 = vdwg.mxu0
    %3106 = vmatprep.subr.bf16.mxu0 %v3009
    %3107 = vmatpush1.bf16.msra.mxu0 %v3008
    %3108 = vmatprep.subr.bf16.mxu0 %v3013
    %3109 = vmatpush1.bf16.msra.mxu0 %v3012
    %3110 = vmatprep.subr.bf16.mxu0 0
    %3111 = vmatpush1.bf16.msra.mxu0 0
    %3112 = vmatprep.subr.bf16.mxu0 0
    %3113 = vmatpush1.bf16.msra.mxu0 0
    %3114 = vmatprep.subr.bf16.mxu0 0
    %3115 = vmatpush1.bf16.msra.mxu0 0
    %3116 = vmatprep.subr.bf16.mxu0 0
    %3117 = vmatpush1.bf16.msra.mxu0 0
    %3118 = vmatprep.subr.bf16.mxu0 0
    %3119 = vmatpush1.bf16.msra.mxu0 0
    %3120 = vmatprep.subr.bf16.mxu0 0
    %3121 = vmatpush1.bf16.msra.mxu0 0
    %3122 = vmatprep.subr.bf16.mxu0 0
    %3123 = vmatpush1.bf16.msra.mxu0 0
    %3124 = vmatprep.subr.bf16.mxu0 0
    %3125 = vmatpush1.bf16.msra.mxu0 0
    %3126 = vmatprep.subr.bf16.mxu0 0
    %3127 = vmatpush1.bf16.msra.mxu0 0
    %3128 = vmatprep.subr.bf16.mxu0 0
    %3129 = vmatpush1.bf16.msra.mxu0 0
    %3130 = vmatprep.subr.bf16.mxu0 0
    %3131 = vmatpush1.bf16.msra.mxu0 0
    %3132 = vmatprep.subr.bf16.mxu0 0
    %3133 = vmatpush1.bf16.msra.mxu0 0
    %3134 = vmatprep.subr.bf16.mxu0 0
    %3135 = vmatpush1.bf16.msra.mxu0 0
    %3136 = vmatprep.subr.bf16.mxu0 0
    %3137 = vmatpush1.bf16.msra.mxu0 0
    %3138 = vmatprep.mubr.bf16.mxu0 0
    %3139 = vmatmul.mubr.bf16.gmra.mrb[0].mxu0 %v3048
    %v3140 = vpop.f32.mrb[0].mxu0
    %v3141 = vadd.f32 %v3088, %v3140
    %v3142 = vpop.f32.mrb[0].mxu0
    %v3143 = vadd.f32 %v3090, %v3142
    %v3144 = vpop.f32.mrb[0].mxu0
    %v3145 = vadd.f32 %v3092, %v3144
    %v3146 = vpop.f32.mrb[0].mxu0
    %v3147 = vadd.f32 %v3094, %v3146
    %3148 = vmatprep.mubr.bf16.mxu0 0
    %3149 = vmatmul.mubr.bf16.gmra.mrb[0].mxu0 %v3051
    %v3150 = vpop.f32.mrb[0].mxu0
    %v3151 = vadd.f32 %v3098, %v3150
    %v3152 = vpop.f32.mrb[0].mxu0
    %v3153 = vadd.f32 %v3100, %v3152
    %v3154 = vpop.f32.mrb[0].mxu0
    %v3155 = vadd.f32 %v3102, %v3154
    %v3156 = vpop.f32.mrb[0].mxu0
    %v3157 = vadd.f32 %v3104, %v3156
    %3158 = vdwg.mxu0
    %3159 = vmatprep.subr.bf16.mxu0 %v2947
    %3160 = vmatpush1.bf16.msra.mxu0 %v2946
    %3161 = vmatprep.subr.bf16.mxu0 %v2951
    %3162 = vmatpush1.bf16.msra.mxu0 %v2950
    %3163 = vmatprep.subr.bf16.mxu0 %v2955
    %3164 = vmatpush1.bf16.msra.mxu0 %v2954
    %3165 = vmatprep.subr.bf16.mxu0 %v2959
    %3166 = vmatpush1.bf16.msra.mxu0 %v2958
    %3167 = vmatprep.subr.bf16.mxu0 %v2963
    %3168 = vmatpush1.bf16.msra.mxu0 %v2962
    %3169 = vmatprep.subr.bf16.mxu0 %v2967
    %3170 = vmatpush1.bf16.msra.mxu0 %v2966
    %3171 = vmatprep.subr.bf16.mxu0 %v2971
    %3172 = vmatpush1.bf16.msra.mxu0 %v2970
    %3173 = vmatprep.subr.bf16.mxu0 %v2975
    %3174 = vmatpush1.bf16.msra.mxu0 %v2974
    %3175 = vmatprep.subr.bf16.mxu0 %v2979
    %3176 = vmatpush1.bf16.msra.mxu0 %v2978
    %3177 = vmatprep.subr.bf16.mxu0 %v2983
    %3178 = vmatpush1.bf16.msra.mxu0 %v2982
    %3179 = vmatprep.subr.bf16.mxu0 %v2987
    %3180 = vmatpush1.bf16.msra.mxu0 %v2986
    %3181 = vmatprep.subr.bf16.mxu0 %v2991
    %3182 = vmatpush1.bf16.msra.mxu0 %v2990
    %3183 = vmatprep.subr.bf16.mxu0 %v2995
    %3184 = vmatpush1.bf16.msra.mxu0 %v2994
    %3185 = vmatprep.subr.bf16.mxu0 %v2999
    %3186 = vmatpush1.bf16.msra.mxu0 %v2998
    %3187 = vmatprep.subr.bf16.mxu0 %v3003
    %3188 = vmatpush1.bf16.msra.mxu0 %v3002
    %3189 = vmatprep.subr.bf16.mxu0 %v3007
    %3190 = vmatpush1.bf16.msra.mxu0 %v3006
    %3191 = vmatprep.mubr.bf16.mxu0 %v3037
    %3192 = vmatmul.mubr.bf16.gmra.mrb[0].mxu0 %v3036
    %v3193 = vpop.f32.mrb[0].mxu0
    %v3194 = vadd.f32 0.0, %v3193
    %v3195 = vpop.f32.mrb[0].mxu0
    %v3196 = vadd.f32 0.0, %v3195
    %v3197 = vpop.f32.mrb[0].mxu0
    %v3198 = vadd.f32 0.0, %v3197
    %v3199 = vpop.f32.mrb[0].mxu0
    %v3200 = vadd.f32 0.0, %v3199
    %3201 = vmatprep.mubr.bf16.mxu0 %v3040
    %3202 = vmatmul.mubr.bf16.gmra.mrb[0].mxu0 %v3039
    %v3203 = vpop.f32.mrb[0].mxu0
    %v3204 = vadd.f32 0.0, %v3203
    %v3205 = vpop.f32.mrb[0].mxu0
    %v3206 = vadd.f32 0.0, %v3205
    %v3207 = vpop.f32.mrb[0].mxu0
    %v3208 = vadd.f32 0.0, %v3207
    %v3209 = vpop.f32.mrb[0].mxu0
    %v3210 = vadd.f32 0.0, %v3209
    %3211 = vdwg.mxu0
    %3212 = vmatprep.subr.bf16.mxu0 %v3011
    %3213 = vmatpush1.bf16.msra.mxu0 %v3010
    %3214 = vmatprep.subr.bf16.mxu0 %v3015
    %3215 = vmatpush1.bf16.msra.mxu0 %v3014
    %3216 = vmatprep.subr.bf16.mxu0 0
    %3217 = vmatpush1.bf16.msra.mxu0 0
    %3218 = vmatprep.subr.bf16.mxu0 0
    %3219 = vmatpush1.bf16.msra.mxu0 0
    %3220 = vmatprep.subr.bf16.mxu0 0
    %3221 = vmatpush1.bf16.msra.mxu0 0
    %3222 = vmatprep.subr.bf16.mxu0 0
    %3223 = vmatpush1.bf16.msra.mxu0 0
    %3224 = vmatprep.subr.bf16.mxu0 0
    %3225 = vmatpush1.bf16.msra.mxu0 0
    %3226 = vmatprep.subr.bf16.mxu0 0
    %3227 = vmatpush1.bf16.msra.mxu0 0
    %3228 = vmatprep.subr.bf16.mxu0 0
    %3229 = vmatpush1.bf16.msra.mxu0 0
    %3230 = vmatprep.subr.bf16.mxu0 0
    %3231 = vmatpush1.bf16.msra.mxu0 0
    %3232 = vmatprep.subr.bf16.mxu0 0
    %3233 = vmatpush1.bf16.msra.mxu0 0
    %3234 = vmatprep.subr.bf16.mxu0 0
    %3235 = vmatpush1.bf16.msra.mxu0 0
    %3236 = vmatprep.subr.bf16.mxu0 0
    %3237 = vmatpush1.bf16.msra.mxu0 0
    %3238 = vmatprep.subr.bf16.mxu0 0
    %3239 = vmatpush1.bf16.msra.mxu0 0
    %3240 = vmatprep.subr.bf16.mxu0 0
    %3241 = vmatpush1.bf16.msra.mxu0 0
    %3242 = vmatprep.subr.bf16.mxu0 0
    %3243 = vmatpush1.bf16.msra.mxu0 0
    %3244 = vmatprep.mubr.bf16.mxu0 0
    %3245 = vmatmul.mubr.bf16.gmra.mrb[0].mxu0 %v3048
    %v3246 = vpop.f32.mrb[0].mxu0
    %v3247 = vadd.f32 %v3194, %v3246
    %v3248 = vpop.f32.mrb[0].mxu0
    %v3249 = vadd.f32 %v3196, %v3248
    %v3250 = vpop.f32.mrb[0].mxu0
    %v3251 = vadd.f32 %v3198, %v3250
    %v3252 = vpop.f32.mrb[0].mxu0
    %v3253 = vadd.f32 %v3200, %v3252
    %3254 = vmatprep.mubr.bf16.mxu0 0
    %3255 = vmatmul.mubr.bf16.gmra.mrb[0].mxu0 %v3051
    %v3256 = vpop.f32.mrb[0].mxu0
    %v3257 = vadd.f32 %v3204, %v3256
    %v3258 = vpop.f32.mrb[0].mxu0
    %v3259 = vadd.f32 %v3206, %v3258
    %v3260 = vpop.f32.mrb[0].mxu0
    %v3261 = vadd.f32 %v3208, %v3260
    %v3262 = vpop.f32.mrb[0].mxu0
    %v3263 = vadd.f32 %v3210, %v3262
    %3264 = vdwg.mxu0
    %v3266 = vlaneseq
    %v3267 = vshrl.u32 %v3266, 7
    %v3268 = vsub.s32 0, %v3267
    %v3269 = vrot.slane %v2935, %v3268
    %v3270 = vlaneseq
    %v3271 = vshrl.u32 %v3270, 7
    %v3272 = vsub.s32 1, %v3271
    %v3273 = vrot.slane %v2935, %v3272
    %v3274 = vlaneseq
    %v3275 = vshrl.u32 %v3274, 7
    %v3276 = vsub.s32 2, %v3275
    %v3277 = vrot.slane %v2935, %v3276
    %v3278 = vlaneseq
    %v3279 = vshrl.u32 %v3278, 7
    %v3280 = vsub.s32 3, %v3279
    %v3281 = vrot.slane %v2935, %v3280
    %v3286 = vmul.f32 %v3269, %v3141
    %v3287 = vmul.f32 %v3273, %v3143
    %v3288 = vmul.f32 %v3277, %v3247
    %v3289 = vmul.f32 %v3281, %v3249
    %v3290 = vmul.f32 %v3269, %v3145
    %v3291 = vmul.f32 %v3273, %v3147
    %v3292 = vmul.f32 %v3277, %v3251
    %v3293 = vmul.f32 %v3281, %v3253
    %v3294 = vmul.f32 %v3269, %v3151
    %v3295 = vmul.f32 %v3273, %v3153
    %v3296 = vmul.f32 %v3277, %v3257
    %v3297 = vmul.f32 %v3281, %v3259
    %v3298 = vmul.f32 %v3269, %v3155
    %v3299 = vmul.f32 %v3273, %v3157
    %v3300 = vmul.f32 %v3277, %v3261
    %v3301 = vmul.f32 %v3281, %v3263
    %v3302 = vadd.f32 %v3286, %v106
    %v3303 = vadd.f32 %v3287, %v107
    %v3304 = vadd.f32 %v3288, %v108
    %v3305 = vadd.f32 %v3289, %v109
    %v3306 = vadd.f32 %v3290, %v110
    %v3307 = vadd.f32 %v3291, %v111
    %v3308 = vadd.f32 %v3292, %v112
    %v3309 = vadd.f32 %v3293, %v113
    %v3310 = vadd.f32 %v3294, %v114
    %v3311 = vadd.f32 %v3295, %v115
    %v3312 = vadd.f32 %v3296, %v116
    %v3313 = vadd.f32 %v3297, %v117
    %v3314 = vadd.f32 %v3298, %v118
    %v3315 = vadd.f32 %v3299, %v119
    %v3316 = vadd.f32 %v3300, %v120
    %v3317 = vadd.f32 %v3301, %v121
    %3318 = vst [vmem:[#allocation14] sm:$0xff] %v3302
    %3319 = vst [vmem:[#allocation14 + $0x8] sm:$0xff] %v3303
    %3320 = vst [vmem:[#allocation14 + $0x10] sm:$0xff] %v3304
    %3321 = vst [vmem:[#allocation14 + $0x18] sm:$0xff] %v3305
    %3322 = vst [vmem:[#allocation14 + $0x20] sm:$0xff] %v3306
    %3323 = vst [vmem:[#allocation14 + $0x28] sm:$0xff] %v3307
    %3324 = vst [vmem:[#allocation14 + $0x30] sm:$0xff] %v3308
    %3325 = vst [vmem:[#allocation14 + $0x38] sm:$0xff] %v3309
    %3326 = vst [vmem:[#allocation14 + $0x40] sm:$0xff] %v3310
    %3327 = vst [vmem:[#allocation14 + $0x48] sm:$0xff] %v3311
    %3328 = vst [vmem:[#allocation14 + $0x50] sm:$0xff] %v3312
    %3329 = vst [vmem:[#allocation14 + $0x58] sm:$0xff] %v3313
    %3330 = vst [vmem:[#allocation14 + $0x60] sm:$0xff] %v3314
    %3331 = vst [vmem:[#allocation14 + $0x68] sm:$0xff] %v3315
    %3332 = vst [vmem:[#allocation14 + $0x70] sm:$0xff] %v3316
    %3333 = vst [vmem:[#allocation14 + $0x78] sm:$0xff] %v3317
    // Predicated region
    $region50: #{tpu_custom_call.1} parent=1 // pred_check
      _
    $region51: #{tpu_custom_call.1} parent=1 // pred_check_branch
      %3335 = sbr.rel (0) target = $region53
    $region52: #{tpu_custom_call.1} parent=1 // pred_region
      %s3337 = ssub.s32 2048, 2048
      %3338 = vsyncadd [#allocation5], %s3337
      %s3339 = sshll.u32 [#allocation14], 4
      %s3340 = int_to_ptr.vmem [resolvable:$true] %s3339
      %3345 = dma.vmem_to_hbm [thread:$0]  %s3340, 2048, %s6, [#allocation5], 512, 512, 32
    $region53: #{tpu_custom_call.1} parent=1 // pred_fallthru
      _
    // Predicated region
    $region54: #{tpu_custom_call.1} parent=1 // pred_check
      _
    $region55: #{tpu_custom_call.1} parent=1 // pred_check_branch
      %3347 = sbr.rel (0) target = $region57
    $region56: #{tpu_custom_call.1} parent=1 // pred_region
      %3348 = dma.done [#allocation5], 2048
    $region57: #{tpu_custom_call.1} parent=1 // pred_fallthru
      _
    %3349 = vsyncpa [#allocation4], 1
    %3350 = vsyncpa [#allocation8], 1
    %3351 = vsyncpa [#allocation11], 1
    %3352 = vsyncpa [#allocation5], 1
    %3353 = vsyncpa [#allocation6], 1

</llo_original>
